<compile_context>
chip_gen: v7x
topology: tpu7x:2x2x1
jax: 0.10.0
libtpu: 0.0.40
codegen_flags: <defaults>
</compile_context>

<pallas_src>
import functools

import jax
import jax.numpy as jnp
from jax import lax
from jax.experimental import pallas as pl
from jax.experimental.pallas import tpu as pltpu

_EPS = 1e-5


def _reflect_pad1_hw(x, H, W):
    """ReflectionPad2d(1): (C, H, W) -> (C, H+2, W+2)."""
    x = jnp.concatenate([x[:, 1:2, :], x, x[:, H - 2:H - 1, :]], axis=1)
    x = jnp.concatenate([x[:, :, 1:2], x, x[:, :, W - 2:W - 1]], axis=2)
    return x


def _conv3x3_vpu(xp, w_ref, b_ref, C, H, W):
    """3x3 VALID cross-correlation on a padded (C, H+2, W+2) block.

    w_ref: SMEM ref, flat (C*C*9,) in PyTorch (out, in, kh, kw) order.
    b_ref: SMEM ref, (C,).  Returns (C, H, W) f32.
    Weights are scalars -> 9*C*C VPU broadcast-FMAs (MXU skipped for tiny C).
    """
    taps = [[xp[:, kh:kh + H, kw:kw + W] for kw in range(3)] for kh in range(3)]
    out_chans = []
    for co in range(C):
        acc = jnp.zeros((H, W), jnp.float32) + b_ref[co]
        for ci in range(C):
            for kh in range(3):
                for kw in range(3):
                    wv = w_ref[((co * C + ci) * 3 + kh) * 3 + kw]
                    acc = acc + wv * taps[kh][kw][ci]
        out_chans.append(acc)
    return jnp.stack(out_chans, axis=0)


def _accum_stats(h, s_ref, C):
    """Accumulate per-channel sum / sum-of-squares into SMEM (2, C) scratch."""
    for c in range(C):
        hc = h[c]
        s_ref[0, c] = s_ref[0, c] + jnp.sum(hc)
        s_ref[1, c] = s_ref[1, c] + jnp.sum(hc * hc)


def _bn_apply(h, s_ref, g_ref, be_ref, inv_count, C, relu):
    """BatchNorm2d training-mode forward on (C, H, W): biased batch var, affine."""
    chans = []
    for c in range(C):
        hc = h[c]
        mean = s_ref[0, c] * inv_count
        var = s_ref[1, c] * inv_count - mean * mean        # one-pass E[x^2]-E[x]^2
        # rsqrt done in the vector domain (EUP) to avoid scalar transcendentals.
        inv = lax.rsqrt(jnp.zeros_like(hc) + (var + _EPS))
        yc = (hc - mean) * inv * g_ref[c] + be_ref[c]
        if relu:
            yc = jnp.maximum(yc, 0.0)
        chans.append(yc)
    return jnp.stack(chans, axis=0)


def _residual_block_kernel(x_ref, w1_ref, b1_ref, g1_ref, be1_ref,
                           w2_ref, b2_ref, g2_ref, be2_ref,
                           out_ref, h1_ref, h2_ref, s1_ref, s2_ref, *, count):
    k = pl.program_id(0)          # phase (slow axis)
    n = pl.program_id(1)          # batch element (fast axis)
    _, C, H, W = x_ref.shape
    inv_count = 1.0 / count

    @pl.when(k == 0)
    def _phase_conv1():
        @pl.when(n == 0)
        def _init_stats():
            for j in range(2):
                for c in range(C):
                    s1_ref[j, c] = 0.0
                    s2_ref[j, c] = 0.0

        x = x_ref[0].astype(jnp.float32)
        h1 = _conv3x3_vpu(_reflect_pad1_hw(x, H, W), w1_ref, b1_ref, C, H, W)
        h1_ref[n] = h1
        _accum_stats(h1, s1_ref, C)

    @pl.when(k == 1)
    def _phase_conv2():
        y1 = _bn_apply(h1_ref[n], s1_ref, g1_ref, be1_ref, inv_count, C, relu=True)
        h2 = _conv3x3_vpu(_reflect_pad1_hw(y1, H, W), w2_ref, b2_ref, C, H, W)
        h2_ref[n] = h2
        _accum_stats(h2, s2_ref, C)

    @pl.when(k == 2)
    def _phase_write():
        y2 = _bn_apply(h2_ref[n], s2_ref, g2_ref, be2_ref, inv_count, C, relu=False)
        out_ref[0] = (y2 + x_ref[0].astype(jnp.float32)).astype(out_ref.dtype)


def residual_block_forward(x_nchw, params):
    """Equivalent of residual_block.forward(x) for NCHW float32 input."""
    N, C, H, W = x_nchw.shape
    # TODO(synk): for large channel counts (e.g. 256 in the full CycleGAN generator)
    # replace the unrolled VPU conv with an MXU channel-contraction and spill h1/h2
    # to HBM-backed tiles instead of whole-tensor VMEM scratch.
    assert C <= 8, "VPU-unrolled conv path is intended for small channel counts"

    def flat(w):
        return w.reshape(-1).astype(jnp.float32)

    kern = functools.partial(_residual_block_kernel, count=float(N * H * W))
    img_spec = pl.BlockSpec((1, C, H, W), lambda k, n: (n, 0, 0, 0))
    smem_spec = pl.BlockSpec(memory_space=pltpu.MemorySpace.SMEM)

    return pl.pallas_call(
        kern,
        out_shape=jax.ShapeDtypeStruct((N, C, H, W), x_nchw.dtype),
        grid_spec=pltpu.PrefetchScalarGridSpec(
            num_scalar_prefetch=0,
            grid=(3, N),                                  # (phase, batch)
            in_specs=[img_spec] + [smem_spec] * 8,
            out_specs=img_spec,
            scratch_shapes=[
                pltpu.VMEM((N, C, H, W), jnp.float32),    # h1: pre-BN conv1 output
                pltpu.VMEM((N, C, H, W), jnp.float32),    # h2: pre-BN conv2 output
                pltpu.SMEM((2, C), jnp.float32),          # BN1 [sum, sumsq]
                pltpu.SMEM((2, C), jnp.float32),          # BN2 [sum, sumsq]
            ]),
        compiler_params=pltpu.CompilerParams(
            # BatchNorm's global (N,H,W) statistics serialize the grid, so both
            # axes are "arbitrary" (batch order matters for the stat accumulators).
            dimension_semantics=("arbitrary", "arbitrary"),
            vmem_limit_bytes=32 * 1024 * 1024),
    )(x_nchw,
      flat(params["w1"]), params["b1"], params["g1"], params["be1"],
      flat(params["w2"]), params["b2"], params["g2"], params["be2"])


def _reference_forward(x, params):
    """Pure-JAX reference (no Pallas) for correctness checking."""
    pad = ((0, 0), (0, 0), (1, 1), (1, 1))

    def conv_bn(inp, w, b, g, be, relu):
        xp = jnp.pad(inp, pad, mode="reflect")
        out = lax.conv_general_dilated(
            xp, w, window_strides=(1, 1), padding="VALID",
            dimension_numbers=("NCHW", "OIHW", "NCHW"))
        out = out + b.reshape(1, -1, 1, 1)
        mean = jnp.mean(out, axis=(0, 2, 3), keepdims=True)
        var = jnp.mean((out - mean) ** 2, axis=(0, 2, 3), keepdims=True)
        out = (out - mean) * lax.rsqrt(var + _EPS) * g.reshape(1, -1, 1, 1) \
            + be.reshape(1, -1, 1, 1)
        return jnp.maximum(out, 0.0) if relu else out

    h = conv_bn(x, params["w1"], params["b1"], params["g1"], params["be1"], True)
    y = conv_bn(h, params["w2"], params["b2"], params["g2"], params["be2"], False)
    return x + y


if __name__ == "__main__":
    N, C, H, W = 2, 3, 16, 16            # in_channels = 3 (module spec), small spatial
    key = jax.random.PRNGKey(0)
    kx, kw1, kb1, kw2, kb2 = jax.random.split(key, 5)

    x = jax.random.normal(kx, (N, C, H, W), dtype=jnp.float32)   # NCHW like PyTorch

    params = {
        # PyTorch Conv2d weight layout: (out_channels, in_channels, kH, kW)
        "w1": 0.1 * jax.random.normal(kw1, (C, C, 3, 3), dtype=jnp.float32),
        "b1": 0.1 * jax.random.normal(kb1, (C,), dtype=jnp.float32),
        "g1": jnp.ones((C,), jnp.float32),   # BatchNorm2d default affine init
        "be1": jnp.zeros((C,), jnp.float32),
        "w2": 0.1 * jax.random.normal(kw2, (C, C, 3, 3), dtype=jnp.float32),
        "b2": 0.1 * jax.random.normal(kb2, (C,), dtype=jnp.float32),
        "g2": jnp.ones((C,), jnp.float32),
        "be2": jnp.zeros((C,), jnp.float32),
    }

    out = jax.jit(residual_block_forward)(x, params)
    out = jax.block_until_ready(out)

    ref = _reference_forward(x, params)
    assert out.shape == (N, C, H, W)
    err = float(jnp.max(jnp.abs(out - ref)))
    assert jnp.allclose(out, ref, atol=2e-3, rtol=2e-3), err

    print("KERNEL_OK")
</pallas_src>

<mosaic_0001>
module attributes {stable_mosaic.version = 11 : i64} {
  func.func @_residual_block_kernel(%arg0: i32, %arg1: i32, %arg2: memref<1x3x16x16xf32, #tpu.memory_space<vmem>>, %arg3: memref<81xf32, #tpu.memory_space<smem>>, %arg4: memref<3xf32, #tpu.memory_space<smem>>, %arg5: memref<3xf32, #tpu.memory_space<smem>>, %arg6: memref<3xf32, #tpu.memory_space<smem>>, %arg7: memref<81xf32, #tpu.memory_space<smem>>, %arg8: memref<3xf32, #tpu.memory_space<smem>>, %arg9: memref<3xf32, #tpu.memory_space<smem>>, %arg10: memref<3xf32, #tpu.memory_space<smem>>, %arg11: memref<1x3x16x16xf32, #tpu.memory_space<vmem>>, %arg12: memref<2x3x16x16xf32, #tpu.memory_space<vmem>>, %arg13: memref<2x3x16x16xf32, #tpu.memory_space<vmem>>, %arg14: memref<2x3xf32, #tpu.memory_space<smem>>, %arg15: memref<2x3xf32, #tpu.memory_space<smem>>) attributes {dimension_semantics = [#tpu.dimension_semantics<arbitrary>, #tpu.dimension_semantics<arbitrary>], iteration_bounds = array<i64: 3, 2>, scalar_prefetch = 0 : i64, scratch_operands = 4 : i64, tpu.core_type = #tpu.core_type<tc>, window_params = [{transform_indices = @transform_0, window_bounds = array<i64: 1, 3, 16, 16>}, {transform_indices = @transform_1, window_bounds = array<i64: 81>}, {transform_indices = @transform_2, window_bounds = array<i64: 3>}, {transform_indices = @transform_3, window_bounds = array<i64: 3>}, {transform_indices = @transform_4, window_bounds = array<i64: 3>}, {transform_indices = @transform_5, window_bounds = array<i64: 81>}, {transform_indices = @transform_6, window_bounds = array<i64: 3>}, {transform_indices = @transform_7, window_bounds = array<i64: 3>}, {transform_indices = @transform_8, window_bounds = array<i64: 3>}, {transform_indices = @transform_9, window_bounds = array<i64: 1, 3, 16, 16>}]} {
    %c0_i32 = arith.constant 0 : i32
    %0 = arith.cmpi eq, %arg0, %c0_i32 : i32
    %1 = arith.extui %0 : i1 to i32
    %c0_i32_0 = arith.constant 0 : i32
    %2 = arith.cmpi ne, %1, %c0_i32_0 : i32
    scf.if %2 {
      %c0_i32_3 = arith.constant 0 : i32
      %9 = arith.cmpi eq, %arg1, %c0_i32_3 : i32
      %10 = arith.extui %9 : i1 to i32
      %c0_i32_4 = arith.constant 0 : i32
      %11 = arith.cmpi ne, %10, %c0_i32_4 : i32
      scf.if %11 {
        %cst_47 = arith.constant 0.000000e+00 : f32
        %c0_48 = arith.constant 0 : index
        %c0_49 = arith.constant 0 : index
        %586 = memref.load %arg14[%c0_48, %c0_49] : memref<2x3xf32, #tpu.memory_space<smem>>
        memref.store %cst_47, %arg14[%c0_48, %c0_49] : memref<2x3xf32, #tpu.memory_space<smem>>
        %cst_50 = arith.constant 0.000000e+00 : f32
        %c0_51 = arith.constant 0 : index
        %c0_52 = arith.constant 0 : index
        %587 = memref.load %arg15[%c0_51, %c0_52] : memref<2x3xf32, #tpu.memory_space<smem>>
        memref.store %cst_50, %arg15[%c0_51, %c0_52] : memref<2x3xf32, #tpu.memory_space<smem>>
        %cst_53 = arith.constant 0.000000e+00 : f32
        %c0_54 = arith.constant 0 : index
        %c1_55 = arith.constant 1 : index
        %588 = memref.load %arg14[%c0_54, %c1_55] : memref<2x3xf32, #tpu.memory_space<smem>>
        memref.store %cst_53, %arg14[%c0_54, %c1_55] : memref<2x3xf32, #tpu.memory_space<smem>>
        %cst_56 = arith.constant 0.000000e+00 : f32
        %c0_57 = arith.constant 0 : index
        %c1_58 = arith.constant 1 : index
        %589 = memref.load %arg15[%c0_57, %c1_58] : memref<2x3xf32, #tpu.memory_space<smem>>
        memref.store %cst_56, %arg15[%c0_57, %c1_58] : memref<2x3xf32, #tpu.memory_space<smem>>
        %cst_59 = arith.constant 0.000000e+00 : f32
        %c0_60 = arith.constant 0 : index
        %c2_61 = arith.constant 2 : index
        %590 = memref.load %arg14[%c0_60, %c2_61] : memref<2x3xf32, #tpu.memory_space<smem>>
        memref.store %cst_59, %arg14[%c0_60, %c2_61] : memref<2x3xf32, #tpu.memory_space<smem>>
        %cst_62 = arith.constant 0.000000e+00 : f32
        %c0_63 = arith.constant 0 : index
        %c2_64 = arith.constant 2 : index
        %591 = memref.load %arg15[%c0_63, %c2_64] : memref<2x3xf32, #tpu.memory_space<smem>>
        memref.store %cst_62, %arg15[%c0_63, %c2_64] : memref<2x3xf32, #tpu.memory_space<smem>>
        %cst_65 = arith.constant 0.000000e+00 : f32
        %c1_66 = arith.constant 1 : index
        %c0_67 = arith.constant 0 : index
        %592 = memref.load %arg14[%c1_66, %c0_67] : memref<2x3xf32, #tpu.memory_space<smem>>
        memref.store %cst_65, %arg14[%c1_66, %c0_67] : memref<2x3xf32, #tpu.memory_space<smem>>
        %cst_68 = arith.constant 0.000000e+00 : f32
        %c1_69 = arith.constant 1 : index
        %c0_70 = arith.constant 0 : index
        %593 = memref.load %arg15[%c1_69, %c0_70] : memref<2x3xf32, #tpu.memory_space<smem>>
        memref.store %cst_68, %arg15[%c1_69, %c0_70] : memref<2x3xf32, #tpu.memory_space<smem>>
        %cst_71 = arith.constant 0.000000e+00 : f32
        %c1_72 = arith.constant 1 : index
        %c1_73 = arith.constant 1 : index
        %594 = memref.load %arg14[%c1_72, %c1_73] : memref<2x3xf32, #tpu.memory_space<smem>>
        memref.store %cst_71, %arg14[%c1_72, %c1_73] : memref<2x3xf32, #tpu.memory_space<smem>>
        %cst_74 = arith.constant 0.000000e+00 : f32
        %c1_75 = arith.constant 1 : index
        %c1_76 = arith.constant 1 : index
        %595 = memref.load %arg15[%c1_75, %c1_76] : memref<2x3xf32, #tpu.memory_space<smem>>
        memref.store %cst_74, %arg15[%c1_75, %c1_76] : memref<2x3xf32, #tpu.memory_space<smem>>
        %cst_77 = arith.constant 0.000000e+00 : f32
        %c1_78 = arith.constant 1 : index
        %c2_79 = arith.constant 2 : index
        %596 = memref.load %arg14[%c1_78, %c2_79] : memref<2x3xf32, #tpu.memory_space<smem>>
        memref.store %cst_77, %arg14[%c1_78, %c2_79] : memref<2x3xf32, #tpu.memory_space<smem>>
        %cst_80 = arith.constant 0.000000e+00 : f32
        %c1_81 = arith.constant 1 : index
        %c2_82 = arith.constant 2 : index
        %597 = memref.load %arg15[%c1_81, %c2_82] : memref<2x3xf32, #tpu.memory_space<smem>>
        memref.store %cst_80, %arg15[%c1_81, %c2_82] : memref<2x3xf32, #tpu.memory_space<smem>>
      } else {
      }
      %c0 = arith.constant 0 : index
      %c0_5 = arith.constant 0 : index
      %c0_6 = arith.constant 0 : index
      %c0_7 = arith.constant 0 : index
      %12 = vector.load %arg2[%c0, %c0_5, %c0_6, %c0_7] : memref<1x3x16x16xf32, #tpu.memory_space<vmem>>, vector<1x3x16x16xf32>
      %13 = vector.shape_cast %12 : vector<1x3x16x16xf32> to vector<3x16x16xf32>
      %14 = vector.extract_strided_slice %13 {offsets = [0, 1, 0], sizes = [3, 1, 16], strides = [1, 1, 1]} : vector<3x16x16xf32> to vector<3x1x16xf32>
      %15 = vector.extract_strided_slice %13 {offsets = [0, 14, 0], sizes = [3, 1, 16], strides = [1, 1, 1]} : vector<3x16x16xf32> to vector<3x1x16xf32>
      %16 = tpu.concatenate %14, %13, %15 in 1 : vector<3x1x16xf32>, vector<3x16x16xf32>, vector<3x1x16xf32> -> vector<3x18x16xf32>
      %17 = vector.extract_strided_slice %16 {offsets = [0, 0, 1], sizes = [3, 18, 1], strides = [1, 1, 1]} : vector<3x18x16xf32> to vector<3x18x1xf32>
      %18 = vector.extract_strided_slice %16 {offsets = [0, 0, 14], sizes = [3, 18, 1], strides = [1, 1, 1]} : vector<3x18x16xf32> to vector<3x18x1xf32>
      %19 = tpu.concatenate %17, %16, %18 in 2 : vector<3x18x1xf32>, vector<3x18x16xf32>, vector<3x18x1xf32> -> vector<3x18x18xf32>
      %20 = vector.extract_strided_slice %19 {offsets = [0, 0, 0], sizes = [3, 16, 16], strides = [1, 1, 1]} : vector<3x18x18xf32> to vector<3x16x16xf32>
      %21 = vector.extract_strided_slice %19 {offsets = [0, 0, 1], sizes = [3, 16, 16], strides = [1, 1, 1]} : vector<3x18x18xf32> to vector<3x16x16xf32>
      %22 = vector.extract_strided_slice %19 {offsets = [0, 0, 2], sizes = [3, 16, 16], strides = [1, 1, 1]} : vector<3x18x18xf32> to vector<3x16x16xf32>
      %23 = vector.extract_strided_slice %19 {offsets = [0, 1, 0], sizes = [3, 16, 16], strides = [1, 1, 1]} : vector<3x18x18xf32> to vector<3x16x16xf32>
      %24 = vector.extract_strided_slice %19 {offsets = [0, 1, 1], sizes = [3, 16, 16], strides = [1, 1, 1]} : vector<3x18x18xf32> to vector<3x16x16xf32>
      %25 = vector.extract_strided_slice %19 {offsets = [0, 1, 2], sizes = [3, 16, 16], strides = [1, 1, 1]} : vector<3x18x18xf32> to vector<3x16x16xf32>
      %26 = vector.extract_strided_slice %19 {offsets = [0, 2, 0], sizes = [3, 16, 16], strides = [1, 1, 1]} : vector<3x18x18xf32> to vector<3x16x16xf32>
      %27 = vector.extract_strided_slice %19 {offsets = [0, 2, 1], sizes = [3, 16, 16], strides = [1, 1, 1]} : vector<3x18x18xf32> to vector<3x16x16xf32>
      %28 = vector.extract_strided_slice %19 {offsets = [0, 2, 2], sizes = [3, 16, 16], strides = [1, 1, 1]} : vector<3x18x18xf32> to vector<3x16x16xf32>
      %cst = arith.constant 0.000000e+00 : f32
      %29 = vector.broadcast %cst : f32 to vector<16x16xf32>
      %c0_8 = arith.constant 0 : index
      %30 = memref.load %arg4[%c0_8] : memref<3xf32, #tpu.memory_space<smem>>
      %31 = vector.broadcast %30 : f32 to vector<16x16xf32>
      %32 = arith.addf %29, %31 : vector<16x16xf32>
      %c0_9 = arith.constant 0 : index
      %33 = memref.load %arg3[%c0_9] : memref<81xf32, #tpu.memory_space<smem>>
      %34 = vector.extract_strided_slice %20 {offsets = [0, 0, 0], sizes = [1, 16, 16], strides = [1, 1, 1]} : vector<3x16x16xf32> to vector<1x16x16xf32>
      %35 = vector.shape_cast %34 : vector<1x16x16xf32> to vector<16x16xf32>
      %36 = vector.broadcast %33 : f32 to vector<16x16xf32>
      %37 = arith.mulf %36, %35 : vector<16x16xf32>
      %38 = arith.addf %32, %37 : vector<16x16xf32>
      %c1 = arith.constant 1 : index
      %39 = memref.load %arg3[%c1] : memref<81xf32, #tpu.memory_space<smem>>
      %40 = vector.extract_strided_slice %21 {offsets = [0, 0, 0], sizes = [1, 16, 16], strides = [1, 1, 1]} : vector<3x16x16xf32> to vector<1x16x16xf32>
      %41 = vector.shape_cast %40 : vector<1x16x16xf32> to vector<16x16xf32>
      %42 = vector.broadcast %39 : f32 to vector<16x16xf32>
      %43 = arith.mulf %42, %41 : vector<16x16xf32>
      %44 = arith.addf %38, %43 : vector<16x16xf32>
      %c2 = arith.constant 2 : index
      %45 = memref.load %arg3[%c2] : memref<81xf32, #tpu.memory_space<smem>>
      %46 = vector.extract_strided_slice %22 {offsets = [0, 0, 0], sizes = [1, 16, 16], strides = [1, 1, 1]} : vector<3x16x16xf32> to vector<1x16x16xf32>
      %47 = vector.shape_cast %46 : vector<1x16x16xf32> to vector<16x16xf32>
      %48 = vector.broadcast %45 : f32 to vector<16x16xf32>
      %49 = arith.mulf %48, %47 : vector<16x16xf32>
      %50 = arith.addf %44, %49 : vector<16x16xf32>
      %c3 = arith.constant 3 : index
      %51 = memref.load %arg3[%c3] : memref<81xf32, #tpu.memory_space<smem>>
      %52 = vector.extract_strided_slice %23 {offsets = [0, 0, 0], sizes = [1, 16, 16], strides = [1, 1, 1]} : vector<3x16x16xf32> to vector<1x16x16xf32>
      %53 = vector.shape_cast %52 : vector<1x16x16xf32> to vector<16x16xf32>
      %54 = vector.broadcast %51 : f32 to vector<16x16xf32>
      %55 = arith.mulf %54, %53 : vector<16x16xf32>
      %56 = arith.addf %50, %55 : vector<16x16xf32>
      %c4 = arith.constant 4 : index
      %57 = memref.load %arg3[%c4] : memref<81xf32, #tpu.memory_space<smem>>
      %58 = vector.extract_strided_slice %24 {offsets = [0, 0, 0], sizes = [1, 16, 16], strides = [1, 1, 1]} : vector<3x16x16xf32> to vector<1x16x16xf32>
      %59 = vector.shape_cast %58 : vector<1x16x16xf32> to vector<16x16xf32>
      %60 = vector.broadcast %57 : f32 to vector<16x16xf32>
      %61 = arith.mulf %60, %59 : vector<16x16xf32>
      %62 = arith.addf %56, %61 : vector<16x16xf32>
      %c5 = arith.constant 5 : index
      %63 = memref.load %arg3[%c5] : memref<81xf32, #tpu.memory_space<smem>>
      %64 = vector.extract_strided_slice %25 {offsets = [0, 0, 0], sizes = [1, 16, 16], strides = [1, 1, 1]} : vector<3x16x16xf32> to vector<1x16x16xf32>
      %65 = vector.shape_cast %64 : vector<1x16x16xf32> to vector<16x16xf32>
      %66 = vector.broadcast %63 : f32 to vector<16x16xf32>
      %67 = arith.mulf %66, %65 : vector<16x16xf32>
      %68 = arith.addf %62, %67 : vector<16x16xf32>
      %c6 = arith.constant 6 : index
      %69 = memref.load %arg3[%c6] : memref<81xf32, #tpu.memory_space<smem>>
      %70 = vector.extract_strided_slice %26 {offsets = [0, 0, 0], sizes = [1, 16, 16], strides = [1, 1, 1]} : vector<3x16x16xf32> to vector<1x16x16xf32>
      %71 = vector.shape_cast %70 : vector<1x16x16xf32> to vector<16x16xf32>
      %72 = vector.broadcast %69 : f32 to vector<16x16xf32>
      %73 = arith.mulf %72, %71 : vector<16x16xf32>
      %74 = arith.addf %68, %73 : vector<16x16xf32>
      %c7 = arith.constant 7 : index
      %75 = memref.load %arg3[%c7] : memref<81xf32, #tpu.memory_space<smem>>
      %76 = vector.extract_strided_slice %27 {offsets = [0, 0, 0], sizes = [1, 16, 16], strides = [1, 1, 1]} : vector<3x16x16xf32> to vector<1x16x16xf32>
      %77 = vector.shape_cast %76 : vector<1x16x16xf32> to vector<16x16xf32>
      %78 = vector.broadcast %75 : f32 to vector<16x16xf32>
      %79 = arith.mulf %78, %77 : vector<16x16xf32>
      %80 = arith.addf %74, %79 : vector<16x16xf32>
      %c8 = arith.constant 8 : index
      %81 = memref.load %arg3[%c8] : memref<81xf32, #tpu.memory_space<smem>>
      %82 = vector.extract_strided_slice %28 {offsets = [0, 0, 0], sizes = [1, 16, 16], strides = [1, 1, 1]} : vector<3x16x16xf32> to vector<1x16x16xf32>
      %83 = vector.shape_cast %82 : vector<1x16x16xf32> to vector<16x16xf32>
      %84 = vector.broadcast %81 : f32 to vector<16x16xf32>
      %85 = arith.mulf %84, %83 : vector<16x16xf32>
      %86 = arith.addf %80, %85 : vector<16x16xf32>
      %c9 = arith.constant 9 : index
      %87 = memref.load %arg3[%c9] : memref<81xf32, #tpu.memory_space<smem>>
      %88 = vector.extract_strided_slice %20 {offsets = [1, 0, 0], sizes = [1, 16, 16], strides = [1, 1, 1]} : vector<3x16x16xf32> to vector<1x16x16xf32>
      %89 = vector.shape_cast %88 : vector<1x16x16xf32> to vector<16x16xf32>
      %90 = vector.broadcast %87 : f32 to vector<16x16xf32>
      %91 = arith.mulf %90, %89 : vector<16x16xf32>
      %92 = arith.addf %86, %91 : vector<16x16xf32>
      %c10 = arith.constant 10 : index
      %93 = memref.load %arg3[%c10] : memref<81xf32, #tpu.memory_space<smem>>
      %94 = vector.extract_strided_slice %21 {offsets = [1, 0, 0], sizes = [1, 16, 16], strides = [1, 1, 1]} : vector<3x16x16xf32> to vector<1x16x16xf32>
      %95 = vector.shape_cast %94 : vector<1x16x16xf32> to vector<16x16xf32>
      %96 = vector.broadcast %93 : f32 to vector<16x16xf32>
      %97 = arith.mulf %96, %95 : vector<16x16xf32>
      %98 = arith.addf %92, %97 : vector<16x16xf32>
      %c11 = arith.constant 11 : index
      %99 = memref.load %arg3[%c11] : memref<81xf32, #tpu.memory_space<smem>>
      %100 = vector.extract_strided_slice %22 {offsets = [1, 0, 0], sizes = [1, 16, 16], strides = [1, 1, 1]} : vector<3x16x16xf32> to vector<1x16x16xf32>
      %101 = vector.shape_cast %100 : vector<1x16x16xf32> to vector<16x16xf32>
      %102 = vector.broadcast %99 : f32 to vector<16x16xf32>
      %103 = arith.mulf %102, %101 : vector<16x16xf32>
      %104 = arith.addf %98, %103 : vector<16x16xf32>
      %c12 = arith.constant 12 : index
      %105 = memref.load %arg3[%c12] : memref<81xf32, #tpu.memory_space<smem>>
      %106 = vector.extract_strided_slice %23 {offsets = [1, 0, 0], sizes = [1, 16, 16], strides = [1, 1, 1]} : vector<3x16x16xf32> to vector<1x16x16xf32>
      %107 = vector.shape_cast %106 : vector<1x16x16xf32> to vector<16x16xf32>
      %108 = vector.broadcast %105 : f32 to vector<16x16xf32>
      %109 = arith.mulf %108, %107 : vector<16x16xf32>
      %110 = arith.addf %104, %109 : vector<16x16xf32>
      %c13 = arith.constant 13 : index
      %111 = memref.load %arg3[%c13] : memref<81xf32, #tpu.memory_space<smem>>
      %112 = vector.extract_strided_slice %24 {offsets = [1, 0, 0], sizes = [1, 16, 16], strides = [1, 1, 1]} : vector<3x16x16xf32> to vector<1x16x16xf32>
      %113 = vector.shape_cast %112 : vector<1x16x16xf32> to vector<16x16xf32>
      %114 = vector.broadcast %111 : f32 to vector<16x16xf32>
      %115 = arith.mulf %114, %113 : vector<16x16xf32>
      %116 = arith.addf %110, %115 : vector<16x16xf32>
      %c14 = arith.constant 14 : index
      %117 = memref.load %arg3[%c14] : memref<81xf32, #tpu.memory_space<smem>>
      %118 = vector.extract_strided_slice %25 {offsets = [1, 0, 0], sizes = [1, 16, 16], strides = [1, 1, 1]} : vector<3x16x16xf32> to vector<1x16x16xf32>
      %119 = vector.shape_cast %118 : vector<1x16x16xf32> to vector<16x16xf32>
      %120 = vector.broadcast %117 : f32 to vector<16x16xf32>
      %121 = arith.mulf %120, %119 : vector<16x16xf32>
      %122 = arith.addf %116, %121 : vector<16x16xf32>
      %c15 = arith.constant 15 : index
      %123 = memref.load %arg3[%c15] : memref<81xf32, #tpu.memory_space<smem>>
      %124 = vector.extract_strided_slice %26 {offsets = [1, 0, 0], sizes = [1, 16, 16], strides = [1, 1, 1]} : vector<3x16x16xf32> to vector<1x16x16xf32>
      %125 = vector.shape_cast %124 : vector<1x16x16xf32> to vector<16x16xf32>
      %126 = vector.broadcast %123 : f32 to vector<16x16xf32>
      %127 = arith.mulf %126, %125 : vector<16x16xf32>
      %128 = arith.addf %122, %127 : vector<16x16xf32>
      %c16 = arith.constant 16 : index
      %129 = memref.load %arg3[%c16] : memref<81xf32, #tpu.memory_space<smem>>
      %130 = vector.extract_strided_slice %27 {offsets = [1, 0, 0], sizes = [1, 16, 16], strides = [1, 1, 1]} : vector<3x16x16xf32> to vector<1x16x16xf32>
      %131 = vector.shape_cast %130 : vector<1x16x16xf32> to vector<16x16xf32>
      %132 = vector.broadcast %129 : f32 to vector<16x16xf32>
      %133 = arith.mulf %132, %131 : vector<16x16xf32>
      %134 = arith.addf %128, %133 : vector<16x16xf32>
      %c17 = arith.constant 17 : index
      %135 = memref.load %arg3[%c17] : memref<81xf32, #tpu.memory_space<smem>>
      %136 = vector.extract_strided_slice %28 {offsets = [1, 0, 0], sizes = [1, 16, 16], strides = [1, 1, 1]} : vector<3x16x16xf32> to vector<1x16x16xf32>
      %137 = vector.shape_cast %136 : vector<1x16x16xf32> to vector<16x16xf32>
      %138 = vector.broadcast %135 : f32 to vector<16x16xf32>
      %139 = arith.mulf %138, %137 : vector<16x16xf32>
      %140 = arith.addf %134, %139 : vector<16x16xf32>
      %c18 = arith.constant 18 : index
      %141 = memref.load %arg3[%c18] : memref<81xf32, #tpu.memory_space<smem>>
      %142 = vector.extract_strided_slice %20 {offsets = [2, 0, 0], sizes = [1, 16, 16], strides = [1, 1, 1]} : vector<3x16x16xf32> to vector<1x16x16xf32>
      %143 = vector.shape_cast %142 : vector<1x16x16xf32> to vector<16x16xf32>
      %144 = vector.broadcast %141 : f32 to vector<16x16xf32>
      %145 = arith.mulf %144, %143 : vector<16x16xf32>
      %146 = arith.addf %140, %145 : vector<16x16xf32>
      %c19 = arith.constant 19 : index
      %147 = memref.load %arg3[%c19] : memref<81xf32, #tpu.memory_space<smem>>
      %148 = vector.extract_strided_slice %21 {offsets = [2, 0, 0], sizes = [1, 16, 16], strides = [1, 1, 1]} : vector<3x16x16xf32> to vector<1x16x16xf32>
      %149 = vector.shape_cast %148 : vector<1x16x16xf32> to vector<16x16xf32>
      %150 = vector.broadcast %147 : f32 to vector<16x16xf32>
      %151 = arith.mulf %150, %149 : vector<16x16xf32>
      %152 = arith.addf %146, %151 : vector<16x16xf32>
      %c20 = arith.constant 20 : index
      %153 = memref.load %arg3[%c20] : memref<81xf32, #tpu.memory_space<smem>>
      %154 = vector.extract_strided_slice %22 {offsets = [2, 0, 0], sizes = [1, 16, 16], strides = [1, 1, 1]} : vector<3x16x16xf32> to vector<1x16x16xf32>
      %155 = vector.shape_cast %154 : vector<1x16x16xf32> to vector<16x16xf32>
      %156 = vector.broadcast %153 : f32 to vector<16x16xf32>
      %157 = arith.mulf %156, %155 : vector<16x16xf32>
      %158 = arith.addf %152, %157 : vector<16x16xf32>
      %c21 = arith.constant 21 : index
      %159 = memref.load %arg3[%c21] : memref<81xf32, #tpu.memory_space<smem>>
      %160 = vector.extract_strided_slice %23 {offsets = [2, 0, 0], sizes = [1, 16, 16], strides = [1, 1, 1]} : vector<3x16x16xf32> to vector<1x16x16xf32>
      %161 = vector.shape_cast %160 : vector<1x16x16xf32> to vector<16x16xf32>
      %162 = vector.broadcast %159 : f32 to vector<16x16xf32>
      %163 = arith.mulf %162, %161 : vector<16x16xf32>
      %164 = arith.addf %158, %163 : vector<16x16xf32>
      %c22 = arith.constant 22 : index
      %165 = memref.load %arg3[%c22] : memref<81xf32, #tpu.memory_space<smem>>
      %166 = vector.extract_strided_slice %24 {offsets = [2, 0, 0], sizes = [1, 16, 16], strides = [1, 1, 1]} : vector<3x16x16xf32> to vector<1x16x16xf32>
      %167 = vector.shape_cast %166 : vector<1x16x16xf32> to vector<16x16xf32>
      %168 = vector.broadcast %165 : f32 to vector<16x16xf32>
      %169 = arith.mulf %168, %167 : vector<16x16xf32>
      %170 = arith.addf %164, %169 : vector<16x16xf32>
      %c23 = arith.constant 23 : index
      %171 = memref.load %arg3[%c23] : memref<81xf32, #tpu.memory_space<smem>>
      %172 = vector.extract_strided_slice %25 {offsets = [2, 0, 0], sizes = [1, 16, 16], strides = [1, 1, 1]} : vector<3x16x16xf32> to vector<1x16x16xf32>
      %173 = vector.shape_cast %172 : vector<1x16x16xf32> to vector<16x16xf32>
      %174 = vector.broadcast %171 : f32 to vector<16x16xf32>
      %175 = arith.mulf %174, %173 : vector<16x16xf32>
      %176 = arith.addf %170, %175 : vector<16x16xf32>
      %c24 = arith.constant 24 : index
      %177 = memref.load %arg3[%c24] : memref<81xf32, #tpu.memory_space<smem>>
      %178 = vector.extract_strided_slice %26 {offsets = [2, 0, 0], sizes = [1, 16, 16], strides = [1, 1, 1]} : vector<3x16x16xf32> to vector<1x16x16xf32>
      %179 = vector.shape_cast %178 : vector<1x16x16xf32> to vector<16x16xf32>
      %180 = vector.broadcast %177 : f32 to vector<16x16xf32>
      %181 = arith.mulf %180, %179 : vector<16x16xf32>
      %182 = arith.addf %176, %181 : vector<16x16xf32>
      %c25 = arith.constant 25 : index
      %183 = memref.load %arg3[%c25] : memref<81xf32, #tpu.memory_space<smem>>
      %184 = vector.extract_strided_slice %27 {offsets = [2, 0, 0], sizes = [1, 16, 16], strides = [1, 1, 1]} : vector<3x16x16xf32> to vector<1x16x16xf32>
      %185 = vector.shape_cast %184 : vector<1x16x16xf32> to vector<16x16xf32>
      %186 = vector.broadcast %183 : f32 to vector<16x16xf32>
      %187 = arith.mulf %186, %185 : vector<16x16xf32>
      %188 = arith.addf %182, %187 : vector<16x16xf32>
      %c26 = arith.constant 26 : index
      %189 = memref.load %arg3[%c26] : memref<81xf32, #tpu.memory_space<smem>>
      %190 = vector.extract_strided_slice %28 {offsets = [2, 0, 0], sizes = [1, 16, 16], strides = [1, 1, 1]} : vector<3x16x16xf32> to vector<1x16x16xf32>
      %191 = vector.shape_cast %190 : vector<1x16x16xf32> to vector<16x16xf32>
      %192 = vector.broadcast %189 : f32 to vector<16x16xf32>
      %193 = arith.mulf %192, %191 : vector<16x16xf32>
      %194 = arith.addf %188, %193 : vector<16x16xf32>
      %cst_10 = arith.constant 0.000000e+00 : f32
      %195 = vector.broadcast %cst_10 : f32 to vector<16x16xf32>
      %c1_11 = arith.constant 1 : index
      %196 = memref.load %arg4[%c1_11] : memref<3xf32, #tpu.memory_space<smem>>
      %197 = vector.broadcast %196 : f32 to vector<16x16xf32>
      %198 = arith.addf %195, %197 : vector<16x16xf32>
      %c27 = arith.constant 27 : index
      %199 = memref.load %arg3[%c27] : memref<81xf32, #tpu.memory_space<smem>>
      %200 = vector.extract_strided_slice %20 {offsets = [0, 0, 0], sizes = [1, 16, 16], strides = [1, 1, 1]} : vector<3x16x16xf32> to vector<1x16x16xf32>
      %201 = vector.shape_cast %200 : vector<1x16x16xf32> to vector<16x16xf32>
      %202 = vector.broadcast %199 : f32 to vector<16x16xf32>
      %203 = arith.mulf %202, %201 : vector<16x16xf32>
      %204 = arith.addf %198, %203 : vector<16x16xf32>
      %c28 = arith.constant 28 : index
      %205 = memref.load %arg3[%c28] : memref<81xf32, #tpu.memory_space<smem>>
      %206 = vector.extract_strided_slice %21 {offsets = [0, 0, 0], sizes = [1, 16, 16], strides = [1, 1, 1]} : vector<3x16x16xf32> to vector<1x16x16xf32>
      %207 = vector.shape_cast %206 : vector<1x16x16xf32> to vector<16x16xf32>
      %208 = vector.broadcast %205 : f32 to vector<16x16xf32>
      %209 = arith.mulf %208, %207 : vector<16x16xf32>
      %210 = arith.addf %204, %209 : vector<16x16xf32>
      %c29 = arith.constant 29 : index
      %211 = memref.load %arg3[%c29] : memref<81xf32, #tpu.memory_space<smem>>
      %212 = vector.extract_strided_slice %22 {offsets = [0, 0, 0], sizes = [1, 16, 16], strides = [1, 1, 1]} : vector<3x16x16xf32> to vector<1x16x16xf32>
      %213 = vector.shape_cast %212 : vector<1x16x16xf32> to vector<16x16xf32>
      %214 = vector.broadcast %211 : f32 to vector<16x16xf32>
      %215 = arith.mulf %214, %213 : vector<16x16xf32>
      %216 = arith.addf %210, %215 : vector<16x16xf32>
      %c30 = arith.constant 30 : index
      %217 = memref.load %arg3[%c30] : memref<81xf32, #tpu.memory_space<smem>>
      %218 = vector.extract_strided_slice %23 {offsets = [0, 0, 0], sizes = [1, 16, 16], strides = [1, 1, 1]} : vector<3x16x16xf32> to vector<1x16x16xf32>
      %219 = vector.shape_cast %218 : vector<1x16x16xf32> to vector<16x16xf32>
      %220 = vector.broadcast %217 : f32 to vector<16x16xf32>
      %221 = arith.mulf %220, %219 : vector<16x16xf32>
      %222 = arith.addf %216, %221 : vector<16x16xf32>
      %c31 = arith.constant 31 : index
      %223 = memref.load %arg3[%c31] : memref<81xf32, #tpu.memory_space<smem>>
      %224 = vector.extract_strided_slice %24 {offsets = [0, 0, 0], sizes = [1, 16, 16], strides = [1, 1, 1]} : vector<3x16x16xf32> to vector<1x16x16xf32>
      %225 = vector.shape_cast %224 : vector<1x16x16xf32> to vector<16x16xf32>
      %226 = vector.broadcast %223 : f32 to vector<16x16xf32>
      %227 = arith.mulf %226, %225 : vector<16x16xf32>
      %228 = arith.addf %222, %227 : vector<16x16xf32>
      %c32 = arith.constant 32 : index
      %229 = memref.load %arg3[%c32] : memref<81xf32, #tpu.memory_space<smem>>
      %230 = vector.extract_strided_slice %25 {offsets = [0, 0, 0], sizes = [1, 16, 16], strides = [1, 1, 1]} : vector<3x16x16xf32> to vector<1x16x16xf32>
      %231 = vector.shape_cast %230 : vector<1x16x16xf32> to vector<16x16xf32>
      %232 = vector.broadcast %229 : f32 to vector<16x16xf32>
      %233 = arith.mulf %232, %231 : vector<16x16xf32>
      %234 = arith.addf %228, %233 : vector<16x16xf32>
      %c33 = arith.constant 33 : index
      %235 = memref.load %arg3[%c33] : memref<81xf32, #tpu.memory_space<smem>>
      %236 = vector.extract_strided_slice %26 {offsets = [0, 0, 0], sizes = [1, 16, 16], strides = [1, 1, 1]} : vector<3x16x16xf32> to vector<1x16x16xf32>
      %237 = vector.shape_cast %236 : vector<1x16x16xf32> to vector<16x16xf32>
      %238 = vector.broadcast %235 : f32 to vector<16x16xf32>
      %239 = arith.mulf %238, %237 : vector<16x16xf32>
      %240 = arith.addf %234, %239 : vector<16x16xf32>
      %c34 = arith.constant 34 : index
      %241 = memref.load %arg3[%c34] : memref<81xf32, #tpu.memory_space<smem>>
      %242 = vector.extract_strided_slice %27 {offsets = [0, 0, 0], sizes = [1, 16, 16], strides = [1, 1, 1]} : vector<3x16x16xf32> to vector<1x16x16xf32>
      %243 = vector.shape_cast %242 : vector<1x16x16xf32> to vector<16x16xf32>
      %244 = vector.broadcast %241 : f32 to vector<16x16xf32>
      %245 = arith.mulf %244, %243 : vector<16x16xf32>
      %246 = arith.addf %240, %245 : vector<16x16xf32>
      %c35 = arith.constant 35 : index
      %247 = memref.load %arg3[%c35] : memref<81xf32, #tpu.memory_space<smem>>
      %248 = vector.extract_strided_slice %28 {offsets = [0, 0, 0], sizes = [1, 16, 16], strides = [1, 1, 1]} : vector<3x16x16xf32> to vector<1x16x16xf32>
      %249 = vector.shape_cast %248 : vector<1x16x16xf32> to vector<16x16xf32>
      %250 = vector.broadcast %247 : f32 to vector<16x16xf32>
      %251 = arith.mulf %250, %249 : vector<16x16xf32>
      %252 = arith.addf %246, %251 : vector<16x16xf32>
      %c36 = arith.constant 36 : index
      %253 = memref.load %arg3[%c36] : memref<81xf32, #tpu.memory_space<smem>>
      %254 = vector.extract_strided_slice %20 {offsets = [1, 0, 0], sizes = [1, 16, 16], strides = [1, 1, 1]} : vector<3x16x16xf32> to vector<1x16x16xf32>
      %255 = vector.shape_cast %254 : vector<1x16x16xf32> to vector<16x16xf32>
      %256 = vector.broadcast %253 : f32 to vector<16x16xf32>
      %257 = arith.mulf %256, %255 : vector<16x16xf32>
      %258 = arith.addf %252, %257 : vector<16x16xf32>
      %c37 = arith.constant 37 : index
      %259 = memref.load %arg3[%c37] : memref<81xf32, #tpu.memory_space<smem>>
      %260 = vector.extract_strided_slice %21 {offsets = [1, 0, 0], sizes = [1, 16, 16], strides = [1, 1, 1]} : vector<3x16x16xf32> to vector<1x16x16xf32>
      %261 = vector.shape_cast %260 : vector<1x16x16xf32> to vector<16x16xf32>
      %262 = vector.broadcast %259 : f32 to vector<16x16xf32>
      %263 = arith.mulf %262, %261 : vector<16x16xf32>
      %264 = arith.addf %258, %263 : vector<16x16xf32>
      %c38 = arith.constant 38 : index
      %265 = memref.load %arg3[%c38] : memref<81xf32, #tpu.memory_space<smem>>
      %266 = vector.extract_strided_slice %22 {offsets = [1, 0, 0], sizes = [1, 16, 16], strides = [1, 1, 1]} : vector<3x16x16xf32> to vector<1x16x16xf32>
      %267 = vector.shape_cast %266 : vector<1x16x16xf32> to vector<16x16xf32>
      %268 = vector.broadcast %265 : f32 to vector<16x16xf32>
      %269 = arith.mulf %268, %267 : vector<16x16xf32>
      %270 = arith.addf %264, %269 : vector<16x16xf32>
      %c39 = arith.constant 39 : index
      %271 = memref.load %arg3[%c39] : memref<81xf32, #tpu.memory_space<smem>>
      %272 = vector.extract_strided_slice %23 {offsets = [1, 0, 0], sizes = [1, 16, 16], strides = [1, 1, 1]} : vector<3x16x16xf32> to vector<1x16x16xf32>
      %273 = vector.shape_cast %272 : vector<1x16x16xf32> to vector<16x16xf32>
      %274 = vector.broadcast %271 : f32 to vector<16x16xf32>
      %275 = arith.mulf %274, %273 : vector<16x16xf32>
      %276 = arith.addf %270, %275 : vector<16x16xf32>
      %c40 = arith.constant 40 : index
      %277 = memref.load %arg3[%c40] : memref<81xf32, #tpu.memory_space<smem>>
      %278 = vector.extract_strided_slice %24 {offsets = [1, 0, 0], sizes = [1, 16, 16], strides = [1, 1, 1]} : vector<3x16x16xf32> to vector<1x16x16xf32>
      %279 = vector.shape_cast %278 : vector<1x16x16xf32> to vector<16x16xf32>
      %280 = vector.broadcast %277 : f32 to vector<16x16xf32>
      %281 = arith.mulf %280, %279 : vector<16x16xf32>
      %282 = arith.addf %276, %281 : vector<16x16xf32>
      %c41 = arith.constant 41 : index
      %283 = memref.load %arg3[%c41] : memref<81xf32, #tpu.memory_space<smem>>
      %284 = vector.extract_strided_slice %25 {offsets = [1, 0, 0], sizes = [1, 16, 16], strides = [1, 1, 1]} : vector<3x16x16xf32> to vector<1x16x16xf32>
      %285 = vector.shape_cast %284 : vector<1x16x16xf32> to vector<16x16xf32>
      %286 = vector.broadcast %283 : f32 to vector<16x16xf32>
      %287 = arith.mulf %286, %285 : vector<16x16xf32>
      %288 = arith.addf %282, %287 : vector<16x16xf32>
      %c42 = arith.constant 42 : index
      %289 = memref.load %arg3[%c42] : memref<81xf32, #tpu.memory_space<smem>>
      %290 = vector.extract_strided_slice %26 {offsets = [1, 0, 0], sizes = [1, 16, 16], strides = [1, 1, 1]} : vector<3x16x16xf32> to vector<1x16x16xf32>
      %291 = vector.shape_cast %290 : vector<1x16x16xf32> to vector<16x16xf32>
      %292 = vector.broadcast %289 : f32 to vector<16x16xf32>
      %293 = arith.mulf %292, %291 : vector<16x16xf32>
      %294 = arith.addf %288, %293 : vector<16x16xf32>
      %c43 = arith.constant 43 : index
      %295 = memref.load %arg3[%c43] : memref<81xf32, #tpu.memory_space<smem>>
      %296 = vector.extract_strided_slice %27 {offsets = [1, 0, 0], sizes = [1, 16, 16], strides = [1, 1, 1]} : vector<3x16x16xf32> to vector<1x16x16xf32>
      %297 = vector.shape_cast %296 : vector<1x16x16xf32> to vector<16x16xf32>
      %298 = vector.broadcast %295 : f32 to vector<16x16xf32>
      %299 = arith.mulf %298, %297 : vector<16x16xf32>
      %300 = arith.addf %294, %299 : vector<16x16xf32>
      %c44 = arith.constant 44 : index
      %301 = memref.load %arg3[%c44] : memref<81xf32, #tpu.memory_space<smem>>
      %302 = vector.extract_strided_slice %28 {offsets = [1, 0, 0], sizes = [1, 16, 16], strides = [1, 1, 1]} : vector<3x16x16xf32> to vector<1x16x16xf32>
      %303 = vector.shape_cast %302 : vector<1x16x16xf32> to vector<16x16xf32>
      %304 = vector.broadcast %301 : f32 to vector<16x16xf32>
      %305 = arith.mulf %304, %303 : vector<16x16xf32>
      %306 = arith.addf %300, %305 : vector<16x16xf32>
      %c45 = arith.constant 45 : index
      %307 = memref.load %arg3[%c45] : memref<81xf32, #tpu.memory_space<smem>>
      %308 = vector.extract_strided_slice %20 {offsets = [2, 0, 0], sizes = [1, 16, 16], strides = [1, 1, 1]} : vector<3x16x16xf32> to vector<1x16x16xf32>
      %309 = vector.shape_cast %308 : vector<1x16x16xf32> to vector<16x16xf32>
      %310 = vector.broadcast %307 : f32 to vector<16x16xf32>
      %311 = arith.mulf %310, %309 : vector<16x16xf32>
      %312 = arith.addf %306, %311 : vector<16x16xf32>
      %c46 = arith.constant 46 : index
      %313 = memref.load %arg3[%c46] : memref<81xf32, #tpu.memory_space<smem>>
      %314 = vector.extract_strided_slice %21 {offsets = [2, 0, 0], sizes = [1, 16, 16], strides = [1, 1, 1]} : vector<3x16x16xf32> to vector<1x16x16xf32>
      %315 = vector.shape_cast %314 : vector<1x16x16xf32> to vector<16x16xf32>
      %316 = vector.broadcast %313 : f32 to vector<16x16xf32>
      %317 = arith.mulf %316, %315 : vector<16x16xf32>
      %318 = arith.addf %312, %317 : vector<16x16xf32>
      %c47 = arith.constant 47 : index
      %319 = memref.load %arg3[%c47] : memref<81xf32, #tpu.memory_space<smem>>
      %320 = vector.extract_strided_slice %22 {offsets = [2, 0, 0], sizes = [1, 16, 16], strides = [1, 1, 1]} : vector<3x16x16xf32> to vector<1x16x16xf32>
      %321 = vector.shape_cast %320 : vector<1x16x16xf32> to vector<16x16xf32>
      %322 = vector.broadcast %319 : f32 to vector<16x16xf32>
      %323 = arith.mulf %322, %321 : vector<16x16xf32>
      %324 = arith.addf %318, %323 : vector<16x16xf32>
      %c48 = arith.constant 48 : index
      %325 = memref.load %arg3[%c48] : memref<81xf32, #tpu.memory_space<smem>>
      %326 = vector.extract_strided_slice %23 {offsets = [2, 0, 0], sizes = [1, 16, 16], strides = [1, 1, 1]} : vector<3x16x16xf32> to vector<1x16x16xf32>
      %327 = vector.shape_cast %326 : vector<1x16x16xf32> to vector<16x16xf32>
      %328 = vector.broadcast %325 : f32 to vector<16x16xf32>
      %329 = arith.mulf %328, %327 : vector<16x16xf32>
      %330 = arith.addf %324, %329 : vector<16x16xf32>
      %c49 = arith.constant 49 : index
      %331 = memref.load %arg3[%c49] : memref<81xf32, #tpu.memory_space<smem>>
      %332 = vector.extract_strided_slice %24 {offsets = [2, 0, 0], sizes = [1, 16, 16], strides = [1, 1, 1]} : vector<3x16x16xf32> to vector<1x16x16xf32>
      %333 = vector.shape_cast %332 : vector<1x16x16xf32> to vector<16x16xf32>
      %334 = vector.broadcast %331 : f32 to vector<16x16xf32>
      %335 = arith.mulf %334, %333 : vector<16x16xf32>
      %336 = arith.addf %330, %335 : vector<16x16xf32>
      %c50 = arith.constant 50 : index
      %337 = memref.load %arg3[%c50] : memref<81xf32, #tpu.memory_space<smem>>
      %338 = vector.extract_strided_slice %25 {offsets = [2, 0, 0], sizes = [1, 16, 16], strides = [1, 1, 1]} : vector<3x16x16xf32> to vector<1x16x16xf32>
      %339 = vector.shape_cast %338 : vector<1x16x16xf32> to vector<16x16xf32>
      %340 = vector.broadcast %337 : f32 to vector<16x16xf32>
      %341 = arith.mulf %340, %339 : vector<16x16xf32>
      %342 = arith.addf %336, %341 : vector<16x16xf32>
      %c51 = arith.constant 51 : index
      %343 = memref.load %arg3[%c51] : memref<81xf32, #tpu.memory_space<smem>>
      %344 = vector.extract_strided_slice %26 {offsets = [2, 0, 0], sizes = [1, 16, 16], strides = [1, 1, 1]} : vector<3x16x16xf32> to vector<1x16x16xf32>
      %345 = vector.shape_cast %344 : vector<1x16x16xf32> to vector<16x16xf32>
      %346 = vector.broadcast %343 : f32 to vector<16x16xf32>
      %347 = arith.mulf %346, %345 : vector<16x16xf32>
      %348 = arith.addf %342, %347 : vector<16x16xf32>
      %c52 = arith.constant 52 : index
      %349 = memref.load %arg3[%c52] : memref<81xf32, #tpu.memory_space<smem>>
      %350 = vector.extract_strided_slice %27 {offsets = [2, 0, 0], sizes = [1, 16, 16], strides = [1, 1, 1]} : vector<3x16x16xf32> to vector<1x16x16xf32>
      %351 = vector.shape_cast %350 : vector<1x16x16xf32> to vector<16x16xf32>
      %352 = vector.broadcast %349 : f32 to vector<16x16xf32>
      %353 = arith.mulf %352, %351 : vector<16x16xf32>
      %354 = arith.addf %348, %353 : vector<16x16xf32>
      %c53 = arith.constant 53 : index
      %355 = memref.load %arg3[%c53] : memref<81xf32, #tpu.memory_space<smem>>
      %356 = vector.extract_strided_slice %28 {offsets = [2, 0, 0], sizes = [1, 16, 16], strides = [1, 1, 1]} : vector<3x16x16xf32> to vector<1x16x16xf32>
      %357 = vector.shape_cast %356 : vector<1x16x16xf32> to vector<16x16xf32>
      %358 = vector.broadcast %355 : f32 to vector<16x16xf32>
      %359 = arith.mulf %358, %357 : vector<16x16xf32>
      %360 = arith.addf %354, %359 : vector<16x16xf32>
      %cst_12 = arith.constant 0.000000e+00 : f32
      %361 = vector.broadcast %cst_12 : f32 to vector<16x16xf32>
      %c2_13 = arith.constant 2 : index
      %362 = memref.load %arg4[%c2_13] : memref<3xf32, #tpu.memory_space<smem>>
      %363 = vector.broadcast %362 : f32 to vector<16x16xf32>
      %364 = arith.addf %361, %363 : vector<16x16xf32>
      %c54 = arith.constant 54 : index
      %365 = memref.load %arg3[%c54] : memref<81xf32, #tpu.memory_space<smem>>
      %366 = vector.extract_strided_slice %20 {offsets = [0, 0, 0], sizes = [1, 16, 16], strides = [1, 1, 1]} : vector<3x16x16xf32> to vector<1x16x16xf32>
      %367 = vector.shape_cast %366 : vector<1x16x16xf32> to vector<16x16xf32>
      %368 = vector.broadcast %365 : f32 to vector<16x16xf32>
      %369 = arith.mulf %368, %367 : vector<16x16xf32>
      %370 = arith.addf %364, %369 : vector<16x16xf32>
      %c55 = arith.constant 55 : index
      %371 = memref.load %arg3[%c55] : memref<81xf32, #tpu.memory_space<smem>>
      %372 = vector.extract_strided_slice %21 {offsets = [0, 0, 0], sizes = [1, 16, 16], strides = [1, 1, 1]} : vector<3x16x16xf32> to vector<1x16x16xf32>
      %373 = vector.shape_cast %372 : vector<1x16x16xf32> to vector<16x16xf32>
      %374 = vector.broadcast %371 : f32 to vector<16x16xf32>
      %375 = arith.mulf %374, %373 : vector<16x16xf32>
      %376 = arith.addf %370, %375 : vector<16x16xf32>
      %c56 = arith.constant 56 : index
      %377 = memref.load %arg3[%c56] : memref<81xf32, #tpu.memory_space<smem>>
      %378 = vector.extract_strided_slice %22 {offsets = [0, 0, 0], sizes = [1, 16, 16], strides = [1, 1, 1]} : vector<3x16x16xf32> to vector<1x16x16xf32>
      %379 = vector.shape_cast %378 : vector<1x16x16xf32> to vector<16x16xf32>
      %380 = vector.broadcast %377 : f32 to vector<16x16xf32>
      %381 = arith.mulf %380, %379 : vector<16x16xf32>
      %382 = arith.addf %376, %381 : vector<16x16xf32>
      %c57 = arith.constant 57 : index
      %383 = memref.load %arg3[%c57] : memref<81xf32, #tpu.memory_space<smem>>
      %384 = vector.extract_strided_slice %23 {offsets = [0, 0, 0], sizes = [1, 16, 16], strides = [1, 1, 1]} : vector<3x16x16xf32> to vector<1x16x16xf32>
      %385 = vector.shape_cast %384 : vector<1x16x16xf32> to vector<16x16xf32>
      %386 = vector.broadcast %383 : f32 to vector<16x16xf32>
      %387 = arith.mulf %386, %385 : vector<16x16xf32>
      %388 = arith.addf %382, %387 : vector<16x16xf32>
      %c58 = arith.constant 58 : index
      %389 = memref.load %arg3[%c58] : memref<81xf32, #tpu.memory_space<smem>>
      %390 = vector.extract_strided_slice %24 {offsets = [0, 0, 0], sizes = [1, 16, 16], strides = [1, 1, 1]} : vector<3x16x16xf32> to vector<1x16x16xf32>
      %391 = vector.shape_cast %390 : vector<1x16x16xf32> to vector<16x16xf32>
      %392 = vector.broadcast %389 : f32 to vector<16x16xf32>
      %393 = arith.mulf %392, %391 : vector<16x16xf32>
      %394 = arith.addf %388, %393 : vector<16x16xf32>
      %c59 = arith.constant 59 : index
      %395 = memref.load %arg3[%c59] : memref<81xf32, #tpu.memory_space<smem>>
      %396 = vector.extract_strided_slice %25 {offsets = [0, 0, 0], sizes = [1, 16, 16], strides = [1, 1, 1]} : vector<3x16x16xf32> to vector<1x16x16xf32>
      %397 = vector.shape_cast %396 : vector<1x16x16xf32> to vector<16x16xf32>
      %398 = vector.broadcast %395 : f32 to vector<16x16xf32>
      %399 = arith.mulf %398, %397 : vector<16x16xf32>
      %400 = arith.addf %394, %399 : vector<16x16xf32>
      %c60 = arith.constant 60 : index
      %401 = memref.load %arg3[%c60] : memref<81xf32, #tpu.memory_space<smem>>
      %402 = vector.extract_strided_slice %26 {offsets = [0, 0, 0], sizes = [1, 16, 16], strides = [1, 1, 1]} : vector<3x16x16xf32> to vector<1x16x16xf32>
      %403 = vector.shape_cast %402 : vector<1x16x16xf32> to vector<16x16xf32>
      %404 = vector.broadcast %401 : f32 to vector<16x16xf32>
      %405 = arith.mulf %404, %403 : vector<16x16xf32>
      %406 = arith.addf %400, %405 : vector<16x16xf32>
      %c61 = arith.constant 61 : index
      %407 = memref.load %arg3[%c61] : memref<81xf32, #tpu.memory_space<smem>>
      %408 = vector.extract_strided_slice %27 {offsets = [0, 0, 0], sizes = [1, 16, 16], strides = [1, 1, 1]} : vector<3x16x16xf32> to vector<1x16x16xf32>
      %409 = vector.shape_cast %408 : vector<1x16x16xf32> to vector<16x16xf32>
      %410 = vector.broadcast %407 : f32 to vector<16x16xf32>
      %411 = arith.mulf %410, %409 : vector<16x16xf32>
      %412 = arith.addf %406, %411 : vector<16x16xf32>
      %c62 = arith.constant 62 : index
      %413 = memref.load %arg3[%c62] : memref<81xf32, #tpu.memory_space<smem>>
      %414 = vector.extract_strided_slice %28 {offsets = [0, 0, 0], sizes = [1, 16, 16], strides = [1, 1, 1]} : vector<3x16x16xf32> to vector<1x16x16xf32>
      %415 = vector.shape_cast %414 : vector<1x16x16xf32> to vector<16x16xf32>
      %416 = vector.broadcast %413 : f32 to vector<16x16xf32>
      %417 = arith.mulf %416, %415 : vector<16x16xf32>
      %418 = arith.addf %412, %417 : vector<16x16xf32>
      %c63 = arith.constant 63 : index
      %419 = memref.load %arg3[%c63] : memref<81xf32, #tpu.memory_space<smem>>
      %420 = vector.extract_strided_slice %20 {offsets = [1, 0, 0], sizes = [1, 16, 16], strides = [1, 1, 1]} : vector<3x16x16xf32> to vector<1x16x16xf32>
      %421 = vector.shape_cast %420 : vector<1x16x16xf32> to vector<16x16xf32>
      %422 = vector.broadcast %419 : f32 to vector<16x16xf32>
      %423 = arith.mulf %422, %421 : vector<16x16xf32>
      %424 = arith.addf %418, %423 : vector<16x16xf32>
      %c64 = arith.constant 64 : index
      %425 = memref.load %arg3[%c64] : memref<81xf32, #tpu.memory_space<smem>>
      %426 = vector.extract_strided_slice %21 {offsets = [1, 0, 0], sizes = [1, 16, 16], strides = [1, 1, 1]} : vector<3x16x16xf32> to vector<1x16x16xf32>
      %427 = vector.shape_cast %426 : vector<1x16x16xf32> to vector<16x16xf32>
      %428 = vector.broadcast %425 : f32 to vector<16x16xf32>
      %429 = arith.mulf %428, %427 : vector<16x16xf32>
      %430 = arith.addf %424, %429 : vector<16x16xf32>
      %c65 = arith.constant 65 : index
      %431 = memref.load %arg3[%c65] : memref<81xf32, #tpu.memory_space<smem>>
      %432 = vector.extract_strided_slice %22 {offsets = [1, 0, 0], sizes = [1, 16, 16], strides = [1, 1, 1]} : vector<3x16x16xf32> to vector<1x16x16xf32>
      %433 = vector.shape_cast %432 : vector<1x16x16xf32> to vector<16x16xf32>
      %434 = vector.broadcast %431 : f32 to vector<16x16xf32>
      %435 = arith.mulf %434, %433 : vector<16x16xf32>
      %436 = arith.addf %430, %435 : vector<16x16xf32>
      %c66 = arith.constant 66 : index
      %437 = memref.load %arg3[%c66] : memref<81xf32, #tpu.memory_space<smem>>
      %438 = vector.extract_strided_slice %23 {offsets = [1, 0, 0], sizes = [1, 16, 16], strides = [1, 1, 1]} : vector<3x16x16xf32> to vector<1x16x16xf32>
      %439 = vector.shape_cast %438 : vector<1x16x16xf32> to vector<16x16xf32>
      %440 = vector.broadcast %437 : f32 to vector<16x16xf32>
      %441 = arith.mulf %440, %439 : vector<16x16xf32>
      %442 = arith.addf %436, %441 : vector<16x16xf32>
      %c67 = arith.constant 67 : index
      %443 = memref.load %arg3[%c67] : memref<81xf32, #tpu.memory_space<smem>>
      %444 = vector.extract_strided_slice %24 {offsets = [1, 0, 0], sizes = [1, 16, 16], strides = [1, 1, 1]} : vector<3x16x16xf32> to vector<1x16x16xf32>
      %445 = vector.shape_cast %444 : vector<1x16x16xf32> to vector<16x16xf32>
      %446 = vector.broadcast %443 : f32 to vector<16x16xf32>
      %447 = arith.mulf %446, %445 : vector<16x16xf32>
      %448 = arith.addf %442, %447 : vector<16x16xf32>
      %c68 = arith.constant 68 : index
      %449 = memref.load %arg3[%c68] : memref<81xf32, #tpu.memory_space<smem>>
      %450 = vector.extract_strided_slice %25 {offsets = [1, 0, 0], sizes = [1, 16, 16], strides = [1, 1, 1]} : vector<3x16x16xf32> to vector<1x16x16xf32>
      %451 = vector.shape_cast %450 : vector<1x16x16xf32> to vector<16x16xf32>
      %452 = vector.broadcast %449 : f32 to vector<16x16xf32>
      %453 = arith.mulf %452, %451 : vector<16x16xf32>
      %454 = arith.addf %448, %453 : vector<16x16xf32>
      %c69 = arith.constant 69 : index
      %455 = memref.load %arg3[%c69] : memref<81xf32, #tpu.memory_space<smem>>
      %456 = vector.extract_strided_slice %26 {offsets = [1, 0, 0], sizes = [1, 16, 16], strides = [1, 1, 1]} : vector<3x16x16xf32> to vector<1x16x16xf32>
      %457 = vector.shape_cast %456 : vector<1x16x16xf32> to vector<16x16xf32>
      %458 = vector.broadcast %455 : f32 to vector<16x16xf32>
      %459 = arith.mulf %458, %457 : vector<16x16xf32>
      %460 = arith.addf %454, %459 : vector<16x16xf32>
      %c70 = arith.constant 70 : index
      %461 = memref.load %arg3[%c70] : memref<81xf32, #tpu.memory_space<smem>>
      %462 = vector.extract_strided_slice %27 {offsets = [1, 0, 0], sizes = [1, 16, 16], strides = [1, 1, 1]} : vector<3x16x16xf32> to vector<1x16x16xf32>
      %463 = vector.shape_cast %462 : vector<1x16x16xf32> to vector<16x16xf32>
      %464 = vector.broadcast %461 : f32 to vector<16x16xf32>
      %465 = arith.mulf %464, %463 : vector<16x16xf32>
      %466 = arith.addf %460, %465 : vector<16x16xf32>
      %c71 = arith.constant 71 : index
      %467 = memref.load %arg3[%c71] : memref<81xf32, #tpu.memory_space<smem>>
      %468 = vector.extract_strided_slice %28 {offsets = [1, 0, 0], sizes = [1, 16, 16], strides = [1, 1, 1]} : vector<3x16x16xf32> to vector<1x16x16xf32>
      %469 = vector.shape_cast %468 : vector<1x16x16xf32> to vector<16x16xf32>
      %470 = vector.broadcast %467 : f32 to vector<16x16xf32>
      %471 = arith.mulf %470, %469 : vector<16x16xf32>
      %472 = arith.addf %466, %471 : vector<16x16xf32>
      %c72 = arith.constant 72 : index
      %473 = memref.load %arg3[%c72] : memref<81xf32, #tpu.memory_space<smem>>
      %474 = vector.extract_strided_slice %20 {offsets = [2, 0, 0], sizes = [1, 16, 16], strides = [1, 1, 1]} : vector<3x16x16xf32> to vector<1x16x16xf32>
      %475 = vector.shape_cast %474 : vector<1x16x16xf32> to vector<16x16xf32>
      %476 = vector.broadcast %473 : f32 to vector<16x16xf32>
      %477 = arith.mulf %476, %475 : vector<16x16xf32>
      %478 = arith.addf %472, %477 : vector<16x16xf32>
      %c73 = arith.constant 73 : index
      %479 = memref.load %arg3[%c73] : memref<81xf32, #tpu.memory_space<smem>>
      %480 = vector.extract_strided_slice %21 {offsets = [2, 0, 0], sizes = [1, 16, 16], strides = [1, 1, 1]} : vector<3x16x16xf32> to vector<1x16x16xf32>
      %481 = vector.shape_cast %480 : vector<1x16x16xf32> to vector<16x16xf32>
      %482 = vector.broadcast %479 : f32 to vector<16x16xf32>
      %483 = arith.mulf %482, %481 : vector<16x16xf32>
      %484 = arith.addf %478, %483 : vector<16x16xf32>
      %c74 = arith.constant 74 : index
      %485 = memref.load %arg3[%c74] : memref<81xf32, #tpu.memory_space<smem>>
      %486 = vector.extract_strided_slice %22 {offsets = [2, 0, 0], sizes = [1, 16, 16], strides = [1, 1, 1]} : vector<3x16x16xf32> to vector<1x16x16xf32>
      %487 = vector.shape_cast %486 : vector<1x16x16xf32> to vector<16x16xf32>
      %488 = vector.broadcast %485 : f32 to vector<16x16xf32>
      %489 = arith.mulf %488, %487 : vector<16x16xf32>
      %490 = arith.addf %484, %489 : vector<16x16xf32>
      %c75 = arith.constant 75 : index
      %491 = memref.load %arg3[%c75] : memref<81xf32, #tpu.memory_space<smem>>
      %492 = vector.extract_strided_slice %23 {offsets = [2, 0, 0], sizes = [1, 16, 16], strides = [1, 1, 1]} : vector<3x16x16xf32> to vector<1x16x16xf32>
      %493 = vector.shape_cast %492 : vector<1x16x16xf32> to vector<16x16xf32>
      %494 = vector.broadcast %491 : f32 to vector<16x16xf32>
      %495 = arith.mulf %494, %493 : vector<16x16xf32>
      %496 = arith.addf %490, %495 : vector<16x16xf32>
      %c76 = arith.constant 76 : index
      %497 = memref.load %arg3[%c76] : memref<81xf32, #tpu.memory_space<smem>>
      %498 = vector.extract_strided_slice %24 {offsets = [2, 0, 0], sizes = [1, 16, 16], strides = [1, 1, 1]} : vector<3x16x16xf32> to vector<1x16x16xf32>
      %499 = vector.shape_cast %498 : vector<1x16x16xf32> to vector<16x16xf32>
      %500 = vector.broadcast %497 : f32 to vector<16x16xf32>
      %501 = arith.mulf %500, %499 : vector<16x16xf32>
      %502 = arith.addf %496, %501 : vector<16x16xf32>
      %c77 = arith.constant 77 : index
      %503 = memref.load %arg3[%c77] : memref<81xf32, #tpu.memory_space<smem>>
      %504 = vector.extract_strided_slice %25 {offsets = [2, 0, 0], sizes = [1, 16, 16], strides = [1, 1, 1]} : vector<3x16x16xf32> to vector<1x16x16xf32>
      %505 = vector.shape_cast %504 : vector<1x16x16xf32> to vector<16x16xf32>
      %506 = vector.broadcast %503 : f32 to vector<16x16xf32>
      %507 = arith.mulf %506, %505 : vector<16x16xf32>
      %508 = arith.addf %502, %507 : vector<16x16xf32>
      %c78 = arith.constant 78 : index
      %509 = memref.load %arg3[%c78] : memref<81xf32, #tpu.memory_space<smem>>
      %510 = vector.extract_strided_slice %26 {offsets = [2, 0, 0], sizes = [1, 16, 16], strides = [1, 1, 1]} : vector<3x16x16xf32> to vector<1x16x16xf32>
      %511 = vector.shape_cast %510 : vector<1x16x16xf32> to vector<16x16xf32>
      %512 = vector.broadcast %509 : f32 to vector<16x16xf32>
      %513 = arith.mulf %512, %511 : vector<16x16xf32>
      %514 = arith.addf %508, %513 : vector<16x16xf32>
      %c79 = arith.constant 79 : index
      %515 = memref.load %arg3[%c79] : memref<81xf32, #tpu.memory_space<smem>>
      %516 = vector.extract_strided_slice %27 {offsets = [2, 0, 0], sizes = [1, 16, 16], strides = [1, 1, 1]} : vector<3x16x16xf32> to vector<1x16x16xf32>
      %517 = vector.shape_cast %516 : vector<1x16x16xf32> to vector<16x16xf32>
      %518 = vector.broadcast %515 : f32 to vector<16x16xf32>
      %519 = arith.mulf %518, %517 : vector<16x16xf32>
      %520 = arith.addf %514, %519 : vector<16x16xf32>
      %c80 = arith.constant 80 : index
      %521 = memref.load %arg3[%c80] : memref<81xf32, #tpu.memory_space<smem>>
      %522 = vector.extract_strided_slice %28 {offsets = [2, 0, 0], sizes = [1, 16, 16], strides = [1, 1, 1]} : vector<3x16x16xf32> to vector<1x16x16xf32>
      %523 = vector.shape_cast %522 : vector<1x16x16xf32> to vector<16x16xf32>
      %524 = vector.broadcast %521 : f32 to vector<16x16xf32>
      %525 = arith.mulf %524, %523 : vector<16x16xf32>
      %526 = arith.addf %520, %525 : vector<16x16xf32>
      %527 = vector.shape_cast %194 : vector<16x16xf32> to vector<1x16x16xf32>
      %528 = vector.shape_cast %360 : vector<16x16xf32> to vector<1x16x16xf32>
      %529 = vector.shape_cast %526 : vector<16x16xf32> to vector<1x16x16xf32>
      %530 = tpu.concatenate %527, %528, %529 in 0 : vector<1x16x16xf32>, vector<1x16x16xf32>, vector<1x16x16xf32> -> vector<3x16x16xf32>
      %531 = arith.index_cast %arg1 : i32 to index
      %c0_14 = arith.constant 0 : index
      %c0_15 = arith.constant 0 : index
      %c0_16 = arith.constant 0 : index
      %532 = vector.load %arg12[%531, %c0_14, %c0_15, %c0_16] : memref<2x3x16x16xf32, #tpu.memory_space<vmem>>, vector<1x3x16x16xf32>
      %533 = vector.shape_cast %532 : vector<1x3x16x16xf32> to vector<3x16x16xf32>
      %534 = vector.shape_cast %530 : vector<3x16x16xf32> to vector<1x3x16x16xf32>
      tpu.vector_store %arg12[%531, %c0_14, %c0_15, %c0_16], %534 {strides = array<i32>} : memref<2x3x16x16xf32, #tpu.memory_space<vmem>>, vector<1x3x16x16xf32>,
      %535 = vector.extract_strided_slice %530 {offsets = [0, 0, 0], sizes = [1, 16, 16], strides = [1, 1, 1]} : vector<3x16x16xf32> to vector<1x16x16xf32>
      %536 = vector.shape_cast %535 : vector<1x16x16xf32> to vector<16x16xf32>
      %c0_17 = arith.constant 0 : index
      %c0_18 = arith.constant 0 : index
      %537 = memref.load %arg14[%c0_17, %c0_18] : memref<2x3xf32, #tpu.memory_space<smem>>
      %538 = vector.shape_cast %536 : vector<16x16xf32> to vector<1x16x16xf32>
      %cst_19 = arith.constant dense<0.000000e+00> : vector<1xf32>
      %539 = vector.multi_reduction <add>, %538, %cst_19 [1, 2] : vector<1x16x16xf32> to vector<1xf32>
      %540 = vector.shape_cast %539 : vector<1xf32> to vector<1x1x1xf32>
      %541 = vector.extract %540[0, 0, 0] : f32 from vector<1x1x1xf32>
      %542 = arith.addf %537, %541 : f32
      %c0_20 = arith.constant 0 : index
      %c0_21 = arith.constant 0 : index
      %543 = memref.load %arg14[%c0_20, %c0_21] : memref<2x3xf32, #tpu.memory_space<smem>>
      memref.store %542, %arg14[%c0_20, %c0_21] : memref<2x3xf32, #tpu.memory_space<smem>>
      %c1_22 = arith.constant 1 : index
      %c0_23 = arith.constant 0 : index
      %544 = memref.load %arg14[%c1_22, %c0_23] : memref<2x3xf32, #tpu.memory_space<smem>>
      %545 = arith.mulf %536, %536 : vector<16x16xf32>
      %546 = vector.shape_cast %545 : vector<16x16xf32> to vector<1x16x16xf32>
      %cst_24 = arith.constant dense<0.000000e+00> : vector<1xf32>
      %547 = vector.multi_reduction <add>, %546, %cst_24 [1, 2] : vector<1x16x16xf32> to vector<1xf32>
      %548 = vector.shape_cast %547 : vector<1xf32> to vector<1x1x1xf32>
      %549 = vector.extract %548[0, 0, 0] : f32 from vector<1x1x1xf32>
      %550 = arith.addf %544, %549 : f32
      %c1_25 = arith.constant 1 : index
      %c0_26 = arith.constant 0 : index
      %551 = memref.load %arg14[%c1_25, %c0_26] : memref<2x3xf32, #tpu.memory_space<smem>>
      memref.store %550, %arg14[%c1_25, %c0_26] : memref<2x3xf32, #tpu.memory_space<smem>>
      %552 = vector.extract_strided_slice %530 {offsets = [1, 0, 0], sizes = [1, 16, 16], strides = [1, 1, 1]} : vector<3x16x16xf32> to vector<1x16x16xf32>
      %553 = vector.shape_cast %552 : vector<1x16x16xf32> to vector<16x16xf32>
      %c0_27 = arith.constant 0 : index
      %c1_28 = arith.constant 1 : index
      %554 = memref.load %arg14[%c0_27, %c1_28] : memref<2x3xf32, #tpu.memory_space<smem>>
      %555 = vector.shape_cast %553 : vector<16x16xf32> to vector<1x16x16xf32>
      %cst_29 = arith.constant dense<0.000000e+00> : vector<1xf32>
      %556 = vector.multi_reduction <add>, %555, %cst_29 [1, 2] : vector<1x16x16xf32> to vector<1xf32>
      %557 = vector.shape_cast %556 : vector<1xf32> to vector<1x1x1xf32>
      %558 = vector.extract %557[0, 0, 0] : f32 from vector<1x1x1xf32>
      %559 = arith.addf %554, %558 : f32
      %c0_30 = arith.constant 0 : index
      %c1_31 = arith.constant 1 : index
      %560 = memref.load %arg14[%c0_30, %c1_31] : memref<2x3xf32, #tpu.memory_space<smem>>
      memref.store %559, %arg14[%c0_30, %c1_31] : memref<2x3xf32, #tpu.memory_space<smem>>
      %c1_32 = arith.constant 1 : index
      %c1_33 = arith.constant 1 : index
      %561 = memref.load %arg14[%c1_32, %c1_33] : memref<2x3xf32, #tpu.memory_space<smem>>
      %562 = arith.mulf %553, %553 : vector<16x16xf32>
      %563 = vector.shape_cast %562 : vector<16x16xf32> to vector<1x16x16xf32>
      %cst_34 = arith.constant dense<0.000000e+00> : vector<1xf32>
      %564 = vector.multi_reduction <add>, %563, %cst_34 [1, 2] : vector<1x16x16xf32> to vector<1xf32>
      %565 = vector.shape_cast %564 : vector<1xf32> to vector<1x1x1xf32>
      %566 = vector.extract %565[0, 0, 0] : f32 from vector<1x1x1xf32>
      %567 = arith.addf %561, %566 : f32
      %c1_35 = arith.constant 1 : index
      %c1_36 = arith.constant 1 : index
      %568 = memref.load %arg14[%c1_35, %c1_36] : memref<2x3xf32, #tpu.memory_space<smem>>
      memref.store %567, %arg14[%c1_35, %c1_36] : memref<2x3xf32, #tpu.memory_space<smem>>
      %569 = vector.extract_strided_slice %530 {offsets = [2, 0, 0], sizes = [1, 16, 16], strides = [1, 1, 1]} : vector<3x16x16xf32> to vector<1x16x16xf32>
      %570 = vector.shape_cast %569 : vector<1x16x16xf32> to vector<16x16xf32>
      %c0_37 = arith.constant 0 : index
      %c2_38 = arith.constant 2 : index
      %571 = memref.load %arg14[%c0_37, %c2_38] : memref<2x3xf32, #tpu.memory_space<smem>>
      %572 = vector.shape_cast %570 : vector<16x16xf32> to vector<1x16x16xf32>
      %cst_39 = arith.constant dense<0.000000e+00> : vector<1xf32>
      %573 = vector.multi_reduction <add>, %572, %cst_39 [1, 2] : vector<1x16x16xf32> to vector<1xf32>
      %574 = vector.shape_cast %573 : vector<1xf32> to vector<1x1x1xf32>
      %575 = vector.extract %574[0, 0, 0] : f32 from vector<1x1x1xf32>
      %576 = arith.addf %571, %575 : f32
      %c0_40 = arith.constant 0 : index
      %c2_41 = arith.constant 2 : index
      %577 = memref.load %arg14[%c0_40, %c2_41] : memref<2x3xf32, #tpu.memory_space<smem>>
      memref.store %576, %arg14[%c0_40, %c2_41] : memref<2x3xf32, #tpu.memory_space<smem>>
      %c1_42 = arith.constant 1 : index
      %c2_43 = arith.constant 2 : index
      %578 = memref.load %arg14[%c1_42, %c2_43] : memref<2x3xf32, #tpu.memory_space<smem>>
      %579 = arith.mulf %570, %570 : vector<16x16xf32>
      %580 = vector.shape_cast %579 : vector<16x16xf32> to vector<1x16x16xf32>
      %cst_44 = arith.constant dense<0.000000e+00> : vector<1xf32>
      %581 = vector.multi_reduction <add>, %580, %cst_44 [1, 2] : vector<1x16x16xf32> to vector<1xf32>
      %582 = vector.shape_cast %581 : vector<1xf32> to vector<1x1x1xf32>
      %583 = vector.extract %582[0, 0, 0] : f32 from vector<1x1x1xf32>
      %584 = arith.addf %578, %583 : f32
      %c1_45 = arith.constant 1 : index
      %c2_46 = arith.constant 2 : index
      %585 = memref.load %arg14[%c1_45, %c2_46] : memref<2x3xf32, #tpu.memory_space<smem>>
      memref.store %584, %arg14[%c1_45, %c2_46] : memref<2x3xf32, #tpu.memory_space<smem>>
    } else {
    }
    %c1_i32 = arith.constant 1 : i32
    %3 = arith.cmpi eq, %arg0, %c1_i32 : i32
    %4 = arith.extui %3 : i1 to i32
    %c0_i32_1 = arith.constant 0 : i32
    %5 = arith.cmpi ne, %4, %c0_i32_1 : i32
    scf.if %5 {
      %9 = arith.index_cast %arg1 : i32 to index
      %c0 = arith.constant 0 : index
      %c0_3 = arith.constant 0 : index
      %c0_4 = arith.constant 0 : index
      %10 = vector.load %arg12[%9, %c0, %c0_3, %c0_4] : memref<2x3x16x16xf32, #tpu.memory_space<vmem>>, vector<1x3x16x16xf32>
      %11 = vector.shape_cast %10 : vector<1x3x16x16xf32> to vector<3x16x16xf32>
      %12 = vector.extract_strided_slice %11 {offsets = [0, 0, 0], sizes = [1, 16, 16], strides = [1, 1, 1]} : vector<3x16x16xf32> to vector<1x16x16xf32>
      %13 = vector.shape_cast %12 : vector<1x16x16xf32> to vector<16x16xf32>
      %c0_5 = arith.constant 0 : index
      %c0_6 = arith.constant 0 : index
      %14 = memref.load %arg14[%c0_5, %c0_6] : memref<2x3xf32, #tpu.memory_space<smem>>
      %cst = arith.constant 0.001953125 : f32
      %15 = arith.mulf %14, %cst : f32
      %c1 = arith.constant 1 : index
      %c0_7 = arith.constant 0 : index
      %16 = memref.load %arg14[%c1, %c0_7] : memref<2x3xf32, #tpu.memory_space<smem>>
      %cst_8 = arith.constant 0.001953125 : f32
      %17 = arith.mulf %16, %cst_8 : f32
      %18 = arith.mulf %15, %15 : f32
      %19 = arith.subf %17, %18 : f32
      %cst_9 = arith.constant 0.000000e+00 : f32
      %20 = vector.broadcast %cst_9 : f32 to vector<16x16xf32>
      %cst_10 = arith.constant 9.99999974E-6 : f32
      %21 = arith.addf %19, %cst_10 : f32
      %22 = vector.broadcast %21 : f32 to vector<16x16xf32>
      %23 = arith.addf %20, %22 : vector<16x16xf32>
      %24 = math.rsqrt %23 : vector<16x16xf32>
      %25 = vector.broadcast %15 : f32 to vector<16x16xf32>
      %26 = arith.subf %13, %25 : vector<16x16xf32>
      %27 = arith.mulf %26, %24 : vector<16x16xf32>
      %c0_11 = arith.constant 0 : index
      %28 = memref.load %arg5[%c0_11] : memref<3xf32, #tpu.memory_space<smem>>
      %29 = vector.broadcast %28 : f32 to vector<16x16xf32>
      %30 = arith.mulf %27, %29 : vector<16x16xf32>
      %c0_12 = arith.constant 0 : index
      %31 = memref.load %arg6[%c0_12] : memref<3xf32, #tpu.memory_space<smem>>
      %32 = vector.broadcast %31 : f32 to vector<16x16xf32>
      %33 = arith.addf %30, %32 : vector<16x16xf32>
      %cst_13 = arith.constant 0.000000e+00 : f32
      %34 = vector.broadcast %cst_13 : f32 to vector<16x16xf32>
      %35 = arith.maximumf %33, %34 : vector<16x16xf32>
      %36 = vector.extract_strided_slice %11 {offsets = [1, 0, 0], sizes = [1, 16, 16], strides = [1, 1, 1]} : vector<3x16x16xf32> to vector<1x16x16xf32>
      %37 = vector.shape_cast %36 : vector<1x16x16xf32> to vector<16x16xf32>
      %c0_14 = arith.constant 0 : index
      %c1_15 = arith.constant 1 : index
      %38 = memref.load %arg14[%c0_14, %c1_15] : memref<2x3xf32, #tpu.memory_space<smem>>
      %cst_16 = arith.constant 0.001953125 : f32
      %39 = arith.mulf %38, %cst_16 : f32
      %c1_17 = arith.constant 1 : index
      %c1_18 = arith.constant 1 : index
      %40 = memref.load %arg14[%c1_17, %c1_18] : memref<2x3xf32, #tpu.memory_space<smem>>
      %cst_19 = arith.constant 0.001953125 : f32
      %41 = arith.mulf %40, %cst_19 : f32
      %42 = arith.mulf %39, %39 : f32
      %43 = arith.subf %41, %42 : f32
      %cst_20 = arith.constant 0.000000e+00 : f32
      %44 = vector.broadcast %cst_20 : f32 to vector<16x16xf32>
      %cst_21 = arith.constant 9.99999974E-6 : f32
      %45 = arith.addf %43, %cst_21 : f32
      %46 = vector.broadcast %45 : f32 to vector<16x16xf32>
      %47 = arith.addf %44, %46 : vector<16x16xf32>
      %48 = math.rsqrt %47 : vector<16x16xf32>
      %49 = vector.broadcast %39 : f32 to vector<16x16xf32>
      %50 = arith.subf %37, %49 : vector<16x16xf32>
      %51 = arith.mulf %50, %48 : vector<16x16xf32>
      %c1_22 = arith.constant 1 : index
      %52 = memref.load %arg5[%c1_22] : memref<3xf32, #tpu.memory_space<smem>>
      %53 = vector.broadcast %52 : f32 to vector<16x16xf32>
      %54 = arith.mulf %51, %53 : vector<16x16xf32>
      %c1_23 = arith.constant 1 : index
      %55 = memref.load %arg6[%c1_23] : memref<3xf32, #tpu.memory_space<smem>>
      %56 = vector.broadcast %55 : f32 to vector<16x16xf32>
      %57 = arith.addf %54, %56 : vector<16x16xf32>
      %cst_24 = arith.constant 0.000000e+00 : f32
      %58 = vector.broadcast %cst_24 : f32 to vector<16x16xf32>
      %59 = arith.maximumf %57, %58 : vector<16x16xf32>
      %60 = vector.extract_strided_slice %11 {offsets = [2, 0, 0], sizes = [1, 16, 16], strides = [1, 1, 1]} : vector<3x16x16xf32> to vector<1x16x16xf32>
      %61 = vector.shape_cast %60 : vector<1x16x16xf32> to vector<16x16xf32>
      %c0_25 = arith.constant 0 : index
      %c2 = arith.constant 2 : index
      %62 = memref.load %arg14[%c0_25, %c2] : memref<2x3xf32, #tpu.memory_space<smem>>
      %cst_26 = arith.constant 0.001953125 : f32
      %63 = arith.mulf %62, %cst_26 : f32
      %c1_27 = arith.constant 1 : index
      %c2_28 = arith.constant 2 : index
      %64 = memref.load %arg14[%c1_27, %c2_28] : memref<2x3xf32, #tpu.memory_space<smem>>
      %cst_29 = arith.constant 0.001953125 : f32
      %65 = arith.mulf %64, %cst_29 : f32
      %66 = arith.mulf %63, %63 : f32
      %67 = arith.subf %65, %66 : f32
      %cst_30 = arith.constant 0.000000e+00 : f32
      %68 = vector.broadcast %cst_30 : f32 to vector<16x16xf32>
      %cst_31 = arith.constant 9.99999974E-6 : f32
      %69 = arith.addf %67, %cst_31 : f32
      %70 = vector.broadcast %69 : f32 to vector<16x16xf32>
      %71 = arith.addf %68, %70 : vector<16x16xf32>
      %72 = math.rsqrt %71 : vector<16x16xf32>
      %73 = vector.broadcast %63 : f32 to vector<16x16xf32>
      %74 = arith.subf %61, %73 : vector<16x16xf32>
      %75 = arith.mulf %74, %72 : vector<16x16xf32>
      %c2_32 = arith.constant 2 : index
      %76 = memref.load %arg5[%c2_32] : memref<3xf32, #tpu.memory_space<smem>>
      %77 = vector.broadcast %76 : f32 to vector<16x16xf32>
      %78 = arith.mulf %75, %77 : vector<16x16xf32>
      %c2_33 = arith.constant 2 : index
      %79 = memref.load %arg6[%c2_33] : memref<3xf32, #tpu.memory_space<smem>>
      %80 = vector.broadcast %79 : f32 to vector<16x16xf32>
      %81 = arith.addf %78, %80 : vector<16x16xf32>
      %cst_34 = arith.constant 0.000000e+00 : f32
      %82 = vector.broadcast %cst_34 : f32 to vector<16x16xf32>
      %83 = arith.maximumf %81, %82 : vector<16x16xf32>
      %84 = vector.shape_cast %35 : vector<16x16xf32> to vector<1x16x16xf32>
      %85 = vector.shape_cast %59 : vector<16x16xf32> to vector<1x16x16xf32>
      %86 = vector.shape_cast %83 : vector<16x16xf32> to vector<1x16x16xf32>
      %87 = tpu.concatenate %84, %85, %86 in 0 : vector<1x16x16xf32>, vector<1x16x16xf32>, vector<1x16x16xf32> -> vector<3x16x16xf32>
      %88 = vector.extract_strided_slice %87 {offsets = [0, 1, 0], sizes = [3, 1, 16], strides = [1, 1, 1]} : vector<3x16x16xf32> to vector<3x1x16xf32>
      %89 = vector.extract_strided_slice %87 {offsets = [0, 14, 0], sizes = [3, 1, 16], strides = [1, 1, 1]} : vector<3x16x16xf32> to vector<3x1x16xf32>
      %90 = tpu.concatenate %88, %87, %89 in 1 : vector<3x1x16xf32>, vector<3x16x16xf32>, vector<3x1x16xf32> -> vector<3x18x16xf32>
      %91 = vector.extract_strided_slice %90 {offsets = [0, 0, 1], sizes = [3, 18, 1], strides = [1, 1, 1]} : vector<3x18x16xf32> to vector<3x18x1xf32>
      %92 = vector.extract_strided_slice %90 {offsets = [0, 0, 14], sizes = [3, 18, 1], strides = [1, 1, 1]} : vector<3x18x16xf32> to vector<3x18x1xf32>
      %93 = tpu.concatenate %91, %90, %92 in 2 : vector<3x18x1xf32>, vector<3x18x16xf32>, vector<3x18x1xf32> -> vector<3x18x18xf32>
      %94 = vector.extract_strided_slice %93 {offsets = [0, 0, 0], sizes = [3, 16, 16], strides = [1, 1, 1]} : vector<3x18x18xf32> to vector<3x16x16xf32>
      %95 = vector.extract_strided_slice %93 {offsets = [0, 0, 1], sizes = [3, 16, 16], strides = [1, 1, 1]} : vector<3x18x18xf32> to vector<3x16x16xf32>
      %96 = vector.extract_strided_slice %93 {offsets = [0, 0, 2], sizes = [3, 16, 16], strides = [1, 1, 1]} : vector<3x18x18xf32> to vector<3x16x16xf32>
      %97 = vector.extract_strided_slice %93 {offsets = [0, 1, 0], sizes = [3, 16, 16], strides = [1, 1, 1]} : vector<3x18x18xf32> to vector<3x16x16xf32>
      %98 = vector.extract_strided_slice %93 {offsets = [0, 1, 1], sizes = [3, 16, 16], strides = [1, 1, 1]} : vector<3x18x18xf32> to vector<3x16x16xf32>
      %99 = vector.extract_strided_slice %93 {offsets = [0, 1, 2], sizes = [3, 16, 16], strides = [1, 1, 1]} : vector<3x18x18xf32> to vector<3x16x16xf32>
      %100 = vector.extract_strided_slice %93 {offsets = [0, 2, 0], sizes = [3, 16, 16], strides = [1, 1, 1]} : vector<3x18x18xf32> to vector<3x16x16xf32>
      %101 = vector.extract_strided_slice %93 {offsets = [0, 2, 1], sizes = [3, 16, 16], strides = [1, 1, 1]} : vector<3x18x18xf32> to vector<3x16x16xf32>
      %102 = vector.extract_strided_slice %93 {offsets = [0, 2, 2], sizes = [3, 16, 16], strides = [1, 1, 1]} : vector<3x18x18xf32> to vector<3x16x16xf32>
      %cst_35 = arith.constant 0.000000e+00 : f32
      %103 = vector.broadcast %cst_35 : f32 to vector<16x16xf32>
      %c0_36 = arith.constant 0 : index
      %104 = memref.load %arg8[%c0_36] : memref<3xf32, #tpu.memory_space<smem>>
      %105 = vector.broadcast %104 : f32 to vector<16x16xf32>
      %106 = arith.addf %103, %105 : vector<16x16xf32>
      %c0_37 = arith.constant 0 : index
      %107 = memref.load %arg7[%c0_37] : memref<81xf32, #tpu.memory_space<smem>>
      %108 = vector.extract_strided_slice %94 {offsets = [0, 0, 0], sizes = [1, 16, 16], strides = [1, 1, 1]} : vector<3x16x16xf32> to vector<1x16x16xf32>
      %109 = vector.shape_cast %108 : vector<1x16x16xf32> to vector<16x16xf32>
      %110 = vector.broadcast %107 : f32 to vector<16x16xf32>
      %111 = arith.mulf %110, %109 : vector<16x16xf32>
      %112 = arith.addf %106, %111 : vector<16x16xf32>
      %c1_38 = arith.constant 1 : index
      %113 = memref.load %arg7[%c1_38] : memref<81xf32, #tpu.memory_space<smem>>
      %114 = vector.extract_strided_slice %95 {offsets = [0, 0, 0], sizes = [1, 16, 16], strides = [1, 1, 1]} : vector<3x16x16xf32> to vector<1x16x16xf32>
      %115 = vector.shape_cast %114 : vector<1x16x16xf32> to vector<16x16xf32>
      %116 = vector.broadcast %113 : f32 to vector<16x16xf32>
      %117 = arith.mulf %116, %115 : vector<16x16xf32>
      %118 = arith.addf %112, %117 : vector<16x16xf32>
      %c2_39 = arith.constant 2 : index
      %119 = memref.load %arg7[%c2_39] : memref<81xf32, #tpu.memory_space<smem>>
      %120 = vector.extract_strided_slice %96 {offsets = [0, 0, 0], sizes = [1, 16, 16], strides = [1, 1, 1]} : vector<3x16x16xf32> to vector<1x16x16xf32>
      %121 = vector.shape_cast %120 : vector<1x16x16xf32> to vector<16x16xf32>
      %122 = vector.broadcast %119 : f32 to vector<16x16xf32>
      %123 = arith.mulf %122, %121 : vector<16x16xf32>
      %124 = arith.addf %118, %123 : vector<16x16xf32>
      %c3 = arith.constant 3 : index
      %125 = memref.load %arg7[%c3] : memref<81xf32, #tpu.memory_space<smem>>
      %126 = vector.extract_strided_slice %97 {offsets = [0, 0, 0], sizes = [1, 16, 16], strides = [1, 1, 1]} : vector<3x16x16xf32> to vector<1x16x16xf32>
      %127 = vector.shape_cast %126 : vector<1x16x16xf32> to vector<16x16xf32>
      %128 = vector.broadcast %125 : f32 to vector<16x16xf32>
      %129 = arith.mulf %128, %127 : vector<16x16xf32>
      %130 = arith.addf %124, %129 : vector<16x16xf32>
      %c4 = arith.constant 4 : index
      %131 = memref.load %arg7[%c4] : memref<81xf32, #tpu.memory_space<smem>>
      %132 = vector.extract_strided_slice %98 {offsets = [0, 0, 0], sizes = [1, 16, 16], strides = [1, 1, 1]} : vector<3x16x16xf32> to vector<1x16x16xf32>
      %133 = vector.shape_cast %132 : vector<1x16x16xf32> to vector<16x16xf32>
      %134 = vector.broadcast %131 : f32 to vector<16x16xf32>
      %135 = arith.mulf %134, %133 : vector<16x16xf32>
      %136 = arith.addf %130, %135 : vector<16x16xf32>
      %c5 = arith.constant 5 : index
      %137 = memref.load %arg7[%c5] : memref<81xf32, #tpu.memory_space<smem>>
      %138 = vector.extract_strided_slice %99 {offsets = [0, 0, 0], sizes = [1, 16, 16], strides = [1, 1, 1]} : vector<3x16x16xf32> to vector<1x16x16xf32>
      %139 = vector.shape_cast %138 : vector<1x16x16xf32> to vector<16x16xf32>
      %140 = vector.broadcast %137 : f32 to vector<16x16xf32>
      %141 = arith.mulf %140, %139 : vector<16x16xf32>
      %142 = arith.addf %136, %141 : vector<16x16xf32>
      %c6 = arith.constant 6 : index
      %143 = memref.load %arg7[%c6] : memref<81xf32, #tpu.memory_space<smem>>
      %144 = vector.extract_strided_slice %100 {offsets = [0, 0, 0], sizes = [1, 16, 16], strides = [1, 1, 1]} : vector<3x16x16xf32> to vector<1x16x16xf32>
      %145 = vector.shape_cast %144 : vector<1x16x16xf32> to vector<16x16xf32>
      %146 = vector.broadcast %143 : f32 to vector<16x16xf32>
      %147 = arith.mulf %146, %145 : vector<16x16xf32>
      %148 = arith.addf %142, %147 : vector<16x16xf32>
      %c7 = arith.constant 7 : index
      %149 = memref.load %arg7[%c7] : memref<81xf32, #tpu.memory_space<smem>>
      %150 = vector.extract_strided_slice %101 {offsets = [0, 0, 0], sizes = [1, 16, 16], strides = [1, 1, 1]} : vector<3x16x16xf32> to vector<1x16x16xf32>
      %151 = vector.shape_cast %150 : vector<1x16x16xf32> to vector<16x16xf32>
      %152 = vector.broadcast %149 : f32 to vector<16x16xf32>
      %153 = arith.mulf %152, %151 : vector<16x16xf32>
      %154 = arith.addf %148, %153 : vector<16x16xf32>
      %c8 = arith.constant 8 : index
      %155 = memref.load %arg7[%c8] : memref<81xf32, #tpu.memory_space<smem>>
      %156 = vector.extract_strided_slice %102 {offsets = [0, 0, 0], sizes = [1, 16, 16], strides = [1, 1, 1]} : vector<3x16x16xf32> to vector<1x16x16xf32>
      %157 = vector.shape_cast %156 : vector<1x16x16xf32> to vector<16x16xf32>
      %158 = vector.broadcast %155 : f32 to vector<16x16xf32>
      %159 = arith.mulf %158, %157 : vector<16x16xf32>
      %160 = arith.addf %154, %159 : vector<16x16xf32>
      %c9 = arith.constant 9 : index
      %161 = memref.load %arg7[%c9] : memref<81xf32, #tpu.memory_space<smem>>
      %162 = vector.extract_strided_slice %94 {offsets = [1, 0, 0], sizes = [1, 16, 16], strides = [1, 1, 1]} : vector<3x16x16xf32> to vector<1x16x16xf32>
      %163 = vector.shape_cast %162 : vector<1x16x16xf32> to vector<16x16xf32>
      %164 = vector.broadcast %161 : f32 to vector<16x16xf32>
      %165 = arith.mulf %164, %163 : vector<16x16xf32>
      %166 = arith.addf %160, %165 : vector<16x16xf32>
      %c10 = arith.constant 10 : index
      %167 = memref.load %arg7[%c10] : memref<81xf32, #tpu.memory_space<smem>>
      %168 = vector.extract_strided_slice %95 {offsets = [1, 0, 0], sizes = [1, 16, 16], strides = [1, 1, 1]} : vector<3x16x16xf32> to vector<1x16x16xf32>
      %169 = vector.shape_cast %168 : vector<1x16x16xf32> to vector<16x16xf32>
      %170 = vector.broadcast %167 : f32 to vector<16x16xf32>
      %171 = arith.mulf %170, %169 : vector<16x16xf32>
      %172 = arith.addf %166, %171 : vector<16x16xf32>
      %c11 = arith.constant 11 : index
      %173 = memref.load %arg7[%c11] : memref<81xf32, #tpu.memory_space<smem>>
      %174 = vector.extract_strided_slice %96 {offsets = [1, 0, 0], sizes = [1, 16, 16], strides = [1, 1, 1]} : vector<3x16x16xf32> to vector<1x16x16xf32>
      %175 = vector.shape_cast %174 : vector<1x16x16xf32> to vector<16x16xf32>
      %176 = vector.broadcast %173 : f32 to vector<16x16xf32>
      %177 = arith.mulf %176, %175 : vector<16x16xf32>
      %178 = arith.addf %172, %177 : vector<16x16xf32>
      %c12 = arith.constant 12 : index
      %179 = memref.load %arg7[%c12] : memref<81xf32, #tpu.memory_space<smem>>
      %180 = vector.extract_strided_slice %97 {offsets = [1, 0, 0], sizes = [1, 16, 16], strides = [1, 1, 1]} : vector<3x16x16xf32> to vector<1x16x16xf32>
      %181 = vector.shape_cast %180 : vector<1x16x16xf32> to vector<16x16xf32>
      %182 = vector.broadcast %179 : f32 to vector<16x16xf32>
      %183 = arith.mulf %182, %181 : vector<16x16xf32>
      %184 = arith.addf %178, %183 : vector<16x16xf32>
      %c13 = arith.constant 13 : index
      %185 = memref.load %arg7[%c13] : memref<81xf32, #tpu.memory_space<smem>>
      %186 = vector.extract_strided_slice %98 {offsets = [1, 0, 0], sizes = [1, 16, 16], strides = [1, 1, 1]} : vector<3x16x16xf32> to vector<1x16x16xf32>
      %187 = vector.shape_cast %186 : vector<1x16x16xf32> to vector<16x16xf32>
      %188 = vector.broadcast %185 : f32 to vector<16x16xf32>
      %189 = arith.mulf %188, %187 : vector<16x16xf32>
      %190 = arith.addf %184, %189 : vector<16x16xf32>
      %c14 = arith.constant 14 : index
      %191 = memref.load %arg7[%c14] : memref<81xf32, #tpu.memory_space<smem>>
      %192 = vector.extract_strided_slice %99 {offsets = [1, 0, 0], sizes = [1, 16, 16], strides = [1, 1, 1]} : vector<3x16x16xf32> to vector<1x16x16xf32>
      %193 = vector.shape_cast %192 : vector<1x16x16xf32> to vector<16x16xf32>
      %194 = vector.broadcast %191 : f32 to vector<16x16xf32>
      %195 = arith.mulf %194, %193 : vector<16x16xf32>
      %196 = arith.addf %190, %195 : vector<16x16xf32>
      %c15 = arith.constant 15 : index
      %197 = memref.load %arg7[%c15] : memref<81xf32, #tpu.memory_space<smem>>
      %198 = vector.extract_strided_slice %100 {offsets = [1, 0, 0], sizes = [1, 16, 16], strides = [1, 1, 1]} : vector<3x16x16xf32> to vector<1x16x16xf32>
      %199 = vector.shape_cast %198 : vector<1x16x16xf32> to vector<16x16xf32>
      %200 = vector.broadcast %197 : f32 to vector<16x16xf32>
      %201 = arith.mulf %200, %199 : vector<16x16xf32>
      %202 = arith.addf %196, %201 : vector<16x16xf32>
      %c16 = arith.constant 16 : index
      %203 = memref.load %arg7[%c16] : memref<81xf32, #tpu.memory_space<smem>>
      %204 = vector.extract_strided_slice %101 {offsets = [1, 0, 0], sizes = [1, 16, 16], strides = [1, 1, 1]} : vector<3x16x16xf32> to vector<1x16x16xf32>
      %205 = vector.shape_cast %204 : vector<1x16x16xf32> to vector<16x16xf32>
      %206 = vector.broadcast %203 : f32 to vector<16x16xf32>
      %207 = arith.mulf %206, %205 : vector<16x16xf32>
      %208 = arith.addf %202, %207 : vector<16x16xf32>
      %c17 = arith.constant 17 : index
      %209 = memref.load %arg7[%c17] : memref<81xf32, #tpu.memory_space<smem>>
      %210 = vector.extract_strided_slice %102 {offsets = [1, 0, 0], sizes = [1, 16, 16], strides = [1, 1, 1]} : vector<3x16x16xf32> to vector<1x16x16xf32>
      %211 = vector.shape_cast %210 : vector<1x16x16xf32> to vector<16x16xf32>
      %212 = vector.broadcast %209 : f32 to vector<16x16xf32>
      %213 = arith.mulf %212, %211 : vector<16x16xf32>
      %214 = arith.addf %208, %213 : vector<16x16xf32>
      %c18 = arith.constant 18 : index
      %215 = memref.load %arg7[%c18] : memref<81xf32, #tpu.memory_space<smem>>
      %216 = vector.extract_strided_slice %94 {offsets = [2, 0, 0], sizes = [1, 16, 16], strides = [1, 1, 1]} : vector<3x16x16xf32> to vector<1x16x16xf32>
      %217 = vector.shape_cast %216 : vector<1x16x16xf32> to vector<16x16xf32>
      %218 = vector.broadcast %215 : f32 to vector<16x16xf32>
      %219 = arith.mulf %218, %217 : vector<16x16xf32>
      %220 = arith.addf %214, %219 : vector<16x16xf32>
      %c19 = arith.constant 19 : index
      %221 = memref.load %arg7[%c19] : memref<81xf32, #tpu.memory_space<smem>>
      %222 = vector.extract_strided_slice %95 {offsets = [2, 0, 0], sizes = [1, 16, 16], strides = [1, 1, 1]} : vector<3x16x16xf32> to vector<1x16x16xf32>
      %223 = vector.shape_cast %222 : vector<1x16x16xf32> to vector<16x16xf32>
      %224 = vector.broadcast %221 : f32 to vector<16x16xf32>
      %225 = arith.mulf %224, %223 : vector<16x16xf32>
      %226 = arith.addf %220, %225 : vector<16x16xf32>
      %c20 = arith.constant 20 : index
      %227 = memref.load %arg7[%c20] : memref<81xf32, #tpu.memory_space<smem>>
      %228 = vector.extract_strided_slice %96 {offsets = [2, 0, 0], sizes = [1, 16, 16], strides = [1, 1, 1]} : vector<3x16x16xf32> to vector<1x16x16xf32>
      %229 = vector.shape_cast %228 : vector<1x16x16xf32> to vector<16x16xf32>
      %230 = vector.broadcast %227 : f32 to vector<16x16xf32>
      %231 = arith.mulf %230, %229 : vector<16x16xf32>
      %232 = arith.addf %226, %231 : vector<16x16xf32>
      %c21 = arith.constant 21 : index
      %233 = memref.load %arg7[%c21] : memref<81xf32, #tpu.memory_space<smem>>
      %234 = vector.extract_strided_slice %97 {offsets = [2, 0, 0], sizes = [1, 16, 16], strides = [1, 1, 1]} : vector<3x16x16xf32> to vector<1x16x16xf32>
      %235 = vector.shape_cast %234 : vector<1x16x16xf32> to vector<16x16xf32>
      %236 = vector.broadcast %233 : f32 to vector<16x16xf32>
      %237 = arith.mulf %236, %235 : vector<16x16xf32>
      %238 = arith.addf %232, %237 : vector<16x16xf32>
      %c22 = arith.constant 22 : index
      %239 = memref.load %arg7[%c22] : memref<81xf32, #tpu.memory_space<smem>>
      %240 = vector.extract_strided_slice %98 {offsets = [2, 0, 0], sizes = [1, 16, 16], strides = [1, 1, 1]} : vector<3x16x16xf32> to vector<1x16x16xf32>
      %241 = vector.shape_cast %240 : vector<1x16x16xf32> to vector<16x16xf32>
      %242 = vector.broadcast %239 : f32 to vector<16x16xf32>
      %243 = arith.mulf %242, %241 : vector<16x16xf32>
      %244 = arith.addf %238, %243 : vector<16x16xf32>
      %c23 = arith.constant 23 : index
      %245 = memref.load %arg7[%c23] : memref<81xf32, #tpu.memory_space<smem>>
      %246 = vector.extract_strided_slice %99 {offsets = [2, 0, 0], sizes = [1, 16, 16], strides = [1, 1, 1]} : vector<3x16x16xf32> to vector<1x16x16xf32>
      %247 = vector.shape_cast %246 : vector<1x16x16xf32> to vector<16x16xf32>
      %248 = vector.broadcast %245 : f32 to vector<16x16xf32>
      %249 = arith.mulf %248, %247 : vector<16x16xf32>
      %250 = arith.addf %244, %249 : vector<16x16xf32>
      %c24 = arith.constant 24 : index
      %251 = memref.load %arg7[%c24] : memref<81xf32, #tpu.memory_space<smem>>
      %252 = vector.extract_strided_slice %100 {offsets = [2, 0, 0], sizes = [1, 16, 16], strides = [1, 1, 1]} : vector<3x16x16xf32> to vector<1x16x16xf32>
      %253 = vector.shape_cast %252 : vector<1x16x16xf32> to vector<16x16xf32>
      %254 = vector.broadcast %251 : f32 to vector<16x16xf32>
      %255 = arith.mulf %254, %253 : vector<16x16xf32>
      %256 = arith.addf %250, %255 : vector<16x16xf32>
      %c25 = arith.constant 25 : index
      %257 = memref.load %arg7[%c25] : memref<81xf32, #tpu.memory_space<smem>>
      %258 = vector.extract_strided_slice %101 {offsets = [2, 0, 0], sizes = [1, 16, 16], strides = [1, 1, 1]} : vector<3x16x16xf32> to vector<1x16x16xf32>
      %259 = vector.shape_cast %258 : vector<1x16x16xf32> to vector<16x16xf32>
      %260 = vector.broadcast %257 : f32 to vector<16x16xf32>
      %261 = arith.mulf %260, %259 : vector<16x16xf32>
      %262 = arith.addf %256, %261 : vector<16x16xf32>
      %c26 = arith.constant 26 : index
      %263 = memref.load %arg7[%c26] : memref<81xf32, #tpu.memory_space<smem>>
      %264 = vector.extract_strided_slice %102 {offsets = [2, 0, 0], sizes = [1, 16, 16], strides = [1, 1, 1]} : vector<3x16x16xf32> to vector<1x16x16xf32>
      %265 = vector.shape_cast %264 : vector<1x16x16xf32> to vector<16x16xf32>
      %266 = vector.broadcast %263 : f32 to vector<16x16xf32>
      %267 = arith.mulf %266, %265 : vector<16x16xf32>
      %268 = arith.addf %262, %267 : vector<16x16xf32>
      %cst_40 = arith.constant 0.000000e+00 : f32
      %269 = vector.broadcast %cst_40 : f32 to vector<16x16xf32>
      %c1_41 = arith.constant 1 : index
      %270 = memref.load %arg8[%c1_41] : memref<3xf32, #tpu.memory_space<smem>>
      %271 = vector.broadcast %270 : f32 to vector<16x16xf32>
      %272 = arith.addf %269, %271 : vector<16x16xf32>
      %c27 = arith.constant 27 : index
      %273 = memref.load %arg7[%c27] : memref<81xf32, #tpu.memory_space<smem>>
      %274 = vector.extract_strided_slice %94 {offsets = [0, 0, 0], sizes = [1, 16, 16], strides = [1, 1, 1]} : vector<3x16x16xf32> to vector<1x16x16xf32>
      %275 = vector.shape_cast %274 : vector<1x16x16xf32> to vector<16x16xf32>
      %276 = vector.broadcast %273 : f32 to vector<16x16xf32>
      %277 = arith.mulf %276, %275 : vector<16x16xf32>
      %278 = arith.addf %272, %277 : vector<16x16xf32>
      %c28 = arith.constant 28 : index
      %279 = memref.load %arg7[%c28] : memref<81xf32, #tpu.memory_space<smem>>
      %280 = vector.extract_strided_slice %95 {offsets = [0, 0, 0], sizes = [1, 16, 16], strides = [1, 1, 1]} : vector<3x16x16xf32> to vector<1x16x16xf32>
      %281 = vector.shape_cast %280 : vector<1x16x16xf32> to vector<16x16xf32>
      %282 = vector.broadcast %279 : f32 to vector<16x16xf32>
      %283 = arith.mulf %282, %281 : vector<16x16xf32>
      %284 = arith.addf %278, %283 : vector<16x16xf32>
      %c29 = arith.constant 29 : index
      %285 = memref.load %arg7[%c29] : memref<81xf32, #tpu.memory_space<smem>>
      %286 = vector.extract_strided_slice %96 {offsets = [0, 0, 0], sizes = [1, 16, 16], strides = [1, 1, 1]} : vector<3x16x16xf32> to vector<1x16x16xf32>
      %287 = vector.shape_cast %286 : vector<1x16x16xf32> to vector<16x16xf32>
      %288 = vector.broadcast %285 : f32 to vector<16x16xf32>
      %289 = arith.mulf %288, %287 : vector<16x16xf32>
      %290 = arith.addf %284, %289 : vector<16x16xf32>
      %c30 = arith.constant 30 : index
      %291 = memref.load %arg7[%c30] : memref<81xf32, #tpu.memory_space<smem>>
      %292 = vector.extract_strided_slice %97 {offsets = [0, 0, 0], sizes = [1, 16, 16], strides = [1, 1, 1]} : vector<3x16x16xf32> to vector<1x16x16xf32>
      %293 = vector.shape_cast %292 : vector<1x16x16xf32> to vector<16x16xf32>
      %294 = vector.broadcast %291 : f32 to vector<16x16xf32>
      %295 = arith.mulf %294, %293 : vector<16x16xf32>
      %296 = arith.addf %290, %295 : vector<16x16xf32>
      %c31 = arith.constant 31 : index
      %297 = memref.load %arg7[%c31] : memref<81xf32, #tpu.memory_space<smem>>
      %298 = vector.extract_strided_slice %98 {offsets = [0, 0, 0], sizes = [1, 16, 16], strides = [1, 1, 1]} : vector<3x16x16xf32> to vector<1x16x16xf32>
      %299 = vector.shape_cast %298 : vector<1x16x16xf32> to vector<16x16xf32>
      %300 = vector.broadcast %297 : f32 to vector<16x16xf32>
      %301 = arith.mulf %300, %299 : vector<16x16xf32>
      %302 = arith.addf %296, %301 : vector<16x16xf32>
      %c32 = arith.constant 32 : index
      %303 = memref.load %arg7[%c32] : memref<81xf32, #tpu.memory_space<smem>>
      %304 = vector.extract_strided_slice %99 {offsets = [0, 0, 0], sizes = [1, 16, 16], strides = [1, 1, 1]} : vector<3x16x16xf32> to vector<1x16x16xf32>
      %305 = vector.shape_cast %304 : vector<1x16x16xf32> to vector<16x16xf32>
      %306 = vector.broadcast %303 : f32 to vector<16x16xf32>
      %307 = arith.mulf %306, %305 : vector<16x16xf32>
      %308 = arith.addf %302, %307 : vector<16x16xf32>
      %c33 = arith.constant 33 : index
      %309 = memref.load %arg7[%c33] : memref<81xf32, #tpu.memory_space<smem>>
      %310 = vector.extract_strided_slice %100 {offsets = [0, 0, 0], sizes = [1, 16, 16], strides = [1, 1, 1]} : vector<3x16x16xf32> to vector<1x16x16xf32>
      %311 = vector.shape_cast %310 : vector<1x16x16xf32> to vector<16x16xf32>
      %312 = vector.broadcast %309 : f32 to vector<16x16xf32>
      %313 = arith.mulf %312, %311 : vector<16x16xf32>
      %314 = arith.addf %308, %313 : vector<16x16xf32>
      %c34 = arith.constant 34 : index
      %315 = memref.load %arg7[%c34] : memref<81xf32, #tpu.memory_space<smem>>
      %316 = vector.extract_strided_slice %101 {offsets = [0, 0, 0], sizes = [1, 16, 16], strides = [1, 1, 1]} : vector<3x16x16xf32> to vector<1x16x16xf32>
      %317 = vector.shape_cast %316 : vector<1x16x16xf32> to vector<16x16xf32>
      %318 = vector.broadcast %315 : f32 to vector<16x16xf32>
      %319 = arith.mulf %318, %317 : vector<16x16xf32>
      %320 = arith.addf %314, %319 : vector<16x16xf32>
      %c35 = arith.constant 35 : index
      %321 = memref.load %arg7[%c35] : memref<81xf32, #tpu.memory_space<smem>>
      %322 = vector.extract_strided_slice %102 {offsets = [0, 0, 0], sizes = [1, 16, 16], strides = [1, 1, 1]} : vector<3x16x16xf32> to vector<1x16x16xf32>
      %323 = vector.shape_cast %322 : vector<1x16x16xf32> to vector<16x16xf32>
      %324 = vector.broadcast %321 : f32 to vector<16x16xf32>
      %325 = arith.mulf %324, %323 : vector<16x16xf32>
      %326 = arith.addf %320, %325 : vector<16x16xf32>
      %c36 = arith.constant 36 : index
      %327 = memref.load %arg7[%c36] : memref<81xf32, #tpu.memory_space<smem>>
      %328 = vector.extract_strided_slice %94 {offsets = [1, 0, 0], sizes = [1, 16, 16], strides = [1, 1, 1]} : vector<3x16x16xf32> to vector<1x16x16xf32>
      %329 = vector.shape_cast %328 : vector<1x16x16xf32> to vector<16x16xf32>
      %330 = vector.broadcast %327 : f32 to vector<16x16xf32>
      %331 = arith.mulf %330, %329 : vector<16x16xf32>
      %332 = arith.addf %326, %331 : vector<16x16xf32>
      %c37 = arith.constant 37 : index
      %333 = memref.load %arg7[%c37] : memref<81xf32, #tpu.memory_space<smem>>
      %334 = vector.extract_strided_slice %95 {offsets = [1, 0, 0], sizes = [1, 16, 16], strides = [1, 1, 1]} : vector<3x16x16xf32> to vector<1x16x16xf32>
      %335 = vector.shape_cast %334 : vector<1x16x16xf32> to vector<16x16xf32>
      %336 = vector.broadcast %333 : f32 to vector<16x16xf32>
      %337 = arith.mulf %336, %335 : vector<16x16xf32>
      %338 = arith.addf %332, %337 : vector<16x16xf32>
      %c38 = arith.constant 38 : index
      %339 = memref.load %arg7[%c38] : memref<81xf32, #tpu.memory_space<smem>>
      %340 = vector.extract_strided_slice %96 {offsets = [1, 0, 0], sizes = [1, 16, 16], strides = [1, 1, 1]} : vector<3x16x16xf32> to vector<1x16x16xf32>
      %341 = vector.shape_cast %340 : vector<1x16x16xf32> to vector<16x16xf32>
      %342 = vector.broadcast %339 : f32 to vector<16x16xf32>
      %343 = arith.mulf %342, %341 : vector<16x16xf32>
      %344 = arith.addf %338, %343 : vector<16x16xf32>
      %c39 = arith.constant 39 : index
      %345 = memref.load %arg7[%c39] : memref<81xf32, #tpu.memory_space<smem>>
      %346 = vector.extract_strided_slice %97 {offsets = [1, 0, 0], sizes = [1, 16, 16], strides = [1, 1, 1]} : vector<3x16x16xf32> to vector<1x16x16xf32>
      %347 = vector.shape_cast %346 : vector<1x16x16xf32> to vector<16x16xf32>
      %348 = vector.broadcast %345 : f32 to vector<16x16xf32>
      %349 = arith.mulf %348, %347 : vector<16x16xf32>
      %350 = arith.addf %344, %349 : vector<16x16xf32>
      %c40 = arith.constant 40 : index
      %351 = memref.load %arg7[%c40] : memref<81xf32, #tpu.memory_space<smem>>
      %352 = vector.extract_strided_slice %98 {offsets = [1, 0, 0], sizes = [1, 16, 16], strides = [1, 1, 1]} : vector<3x16x16xf32> to vector<1x16x16xf32>
      %353 = vector.shape_cast %352 : vector<1x16x16xf32> to vector<16x16xf32>
      %354 = vector.broadcast %351 : f32 to vector<16x16xf32>
      %355 = arith.mulf %354, %353 : vector<16x16xf32>
      %356 = arith.addf %350, %355 : vector<16x16xf32>
      %c41 = arith.constant 41 : index
      %357 = memref.load %arg7[%c41] : memref<81xf32, #tpu.memory_space<smem>>
      %358 = vector.extract_strided_slice %99 {offsets = [1, 0, 0], sizes = [1, 16, 16], strides = [1, 1, 1]} : vector<3x16x16xf32> to vector<1x16x16xf32>
      %359 = vector.shape_cast %358 : vector<1x16x16xf32> to vector<16x16xf32>
      %360 = vector.broadcast %357 : f32 to vector<16x16xf32>
      %361 = arith.mulf %360, %359 : vector<16x16xf32>
      %362 = arith.addf %356, %361 : vector<16x16xf32>
      %c42 = arith.constant 42 : index
      %363 = memref.load %arg7[%c42] : memref<81xf32, #tpu.memory_space<smem>>
      %364 = vector.extract_strided_slice %100 {offsets = [1, 0, 0], sizes = [1, 16, 16], strides = [1, 1, 1]} : vector<3x16x16xf32> to vector<1x16x16xf32>
      %365 = vector.shape_cast %364 : vector<1x16x16xf32> to vector<16x16xf32>
      %366 = vector.broadcast %363 : f32 to vector<16x16xf32>
      %367 = arith.mulf %366, %365 : vector<16x16xf32>
      %368 = arith.addf %362, %367 : vector<16x16xf32>
      %c43 = arith.constant 43 : index
      %369 = memref.load %arg7[%c43] : memref<81xf32, #tpu.memory_space<smem>>
      %370 = vector.extract_strided_slice %101 {offsets = [1, 0, 0], sizes = [1, 16, 16], strides = [1, 1, 1]} : vector<3x16x16xf32> to vector<1x16x16xf32>
      %371 = vector.shape_cast %370 : vector<1x16x16xf32> to vector<16x16xf32>
      %372 = vector.broadcast %369 : f32 to vector<16x16xf32>
      %373 = arith.mulf %372, %371 : vector<16x16xf32>
      %374 = arith.addf %368, %373 : vector<16x16xf32>
      %c44 = arith.constant 44 : index
      %375 = memref.load %arg7[%c44] : memref<81xf32, #tpu.memory_space<smem>>
      %376 = vector.extract_strided_slice %102 {offsets = [1, 0, 0], sizes = [1, 16, 16], strides = [1, 1, 1]} : vector<3x16x16xf32> to vector<1x16x16xf32>
      %377 = vector.shape_cast %376 : vector<1x16x16xf32> to vector<16x16xf32>
      %378 = vector.broadcast %375 : f32 to vector<16x16xf32>
      %379 = arith.mulf %378, %377 : vector<16x16xf32>
      %380 = arith.addf %374, %379 : vector<16x16xf32>
      %c45 = arith.constant 45 : index
      %381 = memref.load %arg7[%c45] : memref<81xf32, #tpu.memory_space<smem>>
      %382 = vector.extract_strided_slice %94 {offsets = [2, 0, 0], sizes = [1, 16, 16], strides = [1, 1, 1]} : vector<3x16x16xf32> to vector<1x16x16xf32>
      %383 = vector.shape_cast %382 : vector<1x16x16xf32> to vector<16x16xf32>
      %384 = vector.broadcast %381 : f32 to vector<16x16xf32>
      %385 = arith.mulf %384, %383 : vector<16x16xf32>
      %386 = arith.addf %380, %385 : vector<16x16xf32>
      %c46 = arith.constant 46 : index
      %387 = memref.load %arg7[%c46] : memref<81xf32, #tpu.memory_space<smem>>
      %388 = vector.extract_strided_slice %95 {offsets = [2, 0, 0], sizes = [1, 16, 16], strides = [1, 1, 1]} : vector<3x16x16xf32> to vector<1x16x16xf32>
      %389 = vector.shape_cast %388 : vector<1x16x16xf32> to vector<16x16xf32>
      %390 = vector.broadcast %387 : f32 to vector<16x16xf32>
      %391 = arith.mulf %390, %389 : vector<16x16xf32>
      %392 = arith.addf %386, %391 : vector<16x16xf32>
      %c47 = arith.constant 47 : index
      %393 = memref.load %arg7[%c47] : memref<81xf32, #tpu.memory_space<smem>>
      %394 = vector.extract_strided_slice %96 {offsets = [2, 0, 0], sizes = [1, 16, 16], strides = [1, 1, 1]} : vector<3x16x16xf32> to vector<1x16x16xf32>
      %395 = vector.shape_cast %394 : vector<1x16x16xf32> to vector<16x16xf32>
      %396 = vector.broadcast %393 : f32 to vector<16x16xf32>
      %397 = arith.mulf %396, %395 : vector<16x16xf32>
      %398 = arith.addf %392, %397 : vector<16x16xf32>
      %c48 = arith.constant 48 : index
      %399 = memref.load %arg7[%c48] : memref<81xf32, #tpu.memory_space<smem>>
      %400 = vector.extract_strided_slice %97 {offsets = [2, 0, 0], sizes = [1, 16, 16], strides = [1, 1, 1]} : vector<3x16x16xf32> to vector<1x16x16xf32>
      %401 = vector.shape_cast %400 : vector<1x16x16xf32> to vector<16x16xf32>
      %402 = vector.broadcast %399 : f32 to vector<16x16xf32>
      %403 = arith.mulf %402, %401 : vector<16x16xf32>
      %404 = arith.addf %398, %403 : vector<16x16xf32>
      %c49 = arith.constant 49 : index
      %405 = memref.load %arg7[%c49] : memref<81xf32, #tpu.memory_space<smem>>
      %406 = vector.extract_strided_slice %98 {offsets = [2, 0, 0], sizes = [1, 16, 16], strides = [1, 1, 1]} : vector<3x16x16xf32> to vector<1x16x16xf32>
      %407 = vector.shape_cast %406 : vector<1x16x16xf32> to vector<16x16xf32>
      %408 = vector.broadcast %405 : f32 to vector<16x16xf32>
      %409 = arith.mulf %408, %407 : vector<16x16xf32>
      %410 = arith.addf %404, %409 : vector<16x16xf32>
      %c50 = arith.constant 50 : index
      %411 = memref.load %arg7[%c50] : memref<81xf32, #tpu.memory_space<smem>>
      %412 = vector.extract_strided_slice %99 {offsets = [2, 0, 0], sizes = [1, 16, 16], strides = [1, 1, 1]} : vector<3x16x16xf32> to vector<1x16x16xf32>
      %413 = vector.shape_cast %412 : vector<1x16x16xf32> to vector<16x16xf32>
      %414 = vector.broadcast %411 : f32 to vector<16x16xf32>
      %415 = arith.mulf %414, %413 : vector<16x16xf32>
      %416 = arith.addf %410, %415 : vector<16x16xf32>
      %c51 = arith.constant 51 : index
      %417 = memref.load %arg7[%c51] : memref<81xf32, #tpu.memory_space<smem>>
      %418 = vector.extract_strided_slice %100 {offsets = [2, 0, 0], sizes = [1, 16, 16], strides = [1, 1, 1]} : vector<3x16x16xf32> to vector<1x16x16xf32>
      %419 = vector.shape_cast %418 : vector<1x16x16xf32> to vector<16x16xf32>
      %420 = vector.broadcast %417 : f32 to vector<16x16xf32>
      %421 = arith.mulf %420, %419 : vector<16x16xf32>
      %422 = arith.addf %416, %421 : vector<16x16xf32>
      %c52 = arith.constant 52 : index
      %423 = memref.load %arg7[%c52] : memref<81xf32, #tpu.memory_space<smem>>
      %424 = vector.extract_strided_slice %101 {offsets = [2, 0, 0], sizes = [1, 16, 16], strides = [1, 1, 1]} : vector<3x16x16xf32> to vector<1x16x16xf32>
      %425 = vector.shape_cast %424 : vector<1x16x16xf32> to vector<16x16xf32>
      %426 = vector.broadcast %423 : f32 to vector<16x16xf32>
      %427 = arith.mulf %426, %425 : vector<16x16xf32>
      %428 = arith.addf %422, %427 : vector<16x16xf32>
      %c53 = arith.constant 53 : index
      %429 = memref.load %arg7[%c53] : memref<81xf32, #tpu.memory_space<smem>>
      %430 = vector.extract_strided_slice %102 {offsets = [2, 0, 0], sizes = [1, 16, 16], strides = [1, 1, 1]} : vector<3x16x16xf32> to vector<1x16x16xf32>
      %431 = vector.shape_cast %430 : vector<1x16x16xf32> to vector<16x16xf32>
      %432 = vector.broadcast %429 : f32 to vector<16x16xf32>
      %433 = arith.mulf %432, %431 : vector<16x16xf32>
      %434 = arith.addf %428, %433 : vector<16x16xf32>
      %cst_42 = arith.constant 0.000000e+00 : f32
      %435 = vector.broadcast %cst_42 : f32 to vector<16x16xf32>
      %c2_43 = arith.constant 2 : index
      %436 = memref.load %arg8[%c2_43] : memref<3xf32, #tpu.memory_space<smem>>
      %437 = vector.broadcast %436 : f32 to vector<16x16xf32>
      %438 = arith.addf %435, %437 : vector<16x16xf32>
      %c54 = arith.constant 54 : index
      %439 = memref.load %arg7[%c54] : memref<81xf32, #tpu.memory_space<smem>>
      %440 = vector.extract_strided_slice %94 {offsets = [0, 0, 0], sizes = [1, 16, 16], strides = [1, 1, 1]} : vector<3x16x16xf32> to vector<1x16x16xf32>
      %441 = vector.shape_cast %440 : vector<1x16x16xf32> to vector<16x16xf32>
      %442 = vector.broadcast %439 : f32 to vector<16x16xf32>
      %443 = arith.mulf %442, %441 : vector<16x16xf32>
      %444 = arith.addf %438, %443 : vector<16x16xf32>
      %c55 = arith.constant 55 : index
      %445 = memref.load %arg7[%c55] : memref<81xf32, #tpu.memory_space<smem>>
      %446 = vector.extract_strided_slice %95 {offsets = [0, 0, 0], sizes = [1, 16, 16], strides = [1, 1, 1]} : vector<3x16x16xf32> to vector<1x16x16xf32>
      %447 = vector.shape_cast %446 : vector<1x16x16xf32> to vector<16x16xf32>
      %448 = vector.broadcast %445 : f32 to vector<16x16xf32>
      %449 = arith.mulf %448, %447 : vector<16x16xf32>
      %450 = arith.addf %444, %449 : vector<16x16xf32>
      %c56 = arith.constant 56 : index
      %451 = memref.load %arg7[%c56] : memref<81xf32, #tpu.memory_space<smem>>
      %452 = vector.extract_strided_slice %96 {offsets = [0, 0, 0], sizes = [1, 16, 16], strides = [1, 1, 1]} : vector<3x16x16xf32> to vector<1x16x16xf32>
      %453 = vector.shape_cast %452 : vector<1x16x16xf32> to vector<16x16xf32>
      %454 = vector.broadcast %451 : f32 to vector<16x16xf32>
      %455 = arith.mulf %454, %453 : vector<16x16xf32>
      %456 = arith.addf %450, %455 : vector<16x16xf32>
      %c57 = arith.constant 57 : index
      %457 = memref.load %arg7[%c57] : memref<81xf32, #tpu.memory_space<smem>>
      %458 = vector.extract_strided_slice %97 {offsets = [0, 0, 0], sizes = [1, 16, 16], strides = [1, 1, 1]} : vector<3x16x16xf32> to vector<1x16x16xf32>
      %459 = vector.shape_cast %458 : vector<1x16x16xf32> to vector<16x16xf32>
      %460 = vector.broadcast %457 : f32 to vector<16x16xf32>
      %461 = arith.mulf %460, %459 : vector<16x16xf32>
      %462 = arith.addf %456, %461 : vector<16x16xf32>
      %c58 = arith.constant 58 : index
      %463 = memref.load %arg7[%c58] : memref<81xf32, #tpu.memory_space<smem>>
      %464 = vector.extract_strided_slice %98 {offsets = [0, 0, 0], sizes = [1, 16, 16], strides = [1, 1, 1]} : vector<3x16x16xf32> to vector<1x16x16xf32>
      %465 = vector.shape_cast %464 : vector<1x16x16xf32> to vector<16x16xf32>
      %466 = vector.broadcast %463 : f32 to vector<16x16xf32>
      %467 = arith.mulf %466, %465 : vector<16x16xf32>
      %468 = arith.addf %462, %467 : vector<16x16xf32>
      %c59 = arith.constant 59 : index
      %469 = memref.load %arg7[%c59] : memref<81xf32, #tpu.memory_space<smem>>
      %470 = vector.extract_strided_slice %99 {offsets = [0, 0, 0], sizes = [1, 16, 16], strides = [1, 1, 1]} : vector<3x16x16xf32> to vector<1x16x16xf32>
      %471 = vector.shape_cast %470 : vector<1x16x16xf32> to vector<16x16xf32>
      %472 = vector.broadcast %469 : f32 to vector<16x16xf32>
      %473 = arith.mulf %472, %471 : vector<16x16xf32>
      %474 = arith.addf %468, %473 : vector<16x16xf32>
      %c60 = arith.constant 60 : index
      %475 = memref.load %arg7[%c60] : memref<81xf32, #tpu.memory_space<smem>>
      %476 = vector.extract_strided_slice %100 {offsets = [0, 0, 0], sizes = [1, 16, 16], strides = [1, 1, 1]} : vector<3x16x16xf32> to vector<1x16x16xf32>
      %477 = vector.shape_cast %476 : vector<1x16x16xf32> to vector<16x16xf32>
      %478 = vector.broadcast %475 : f32 to vector<16x16xf32>
      %479 = arith.mulf %478, %477 : vector<16x16xf32>
      %480 = arith.addf %474, %479 : vector<16x16xf32>
      %c61 = arith.constant 61 : index
      %481 = memref.load %arg7[%c61] : memref<81xf32, #tpu.memory_space<smem>>
      %482 = vector.extract_strided_slice %101 {offsets = [0, 0, 0], sizes = [1, 16, 16], strides = [1, 1, 1]} : vector<3x16x16xf32> to vector<1x16x16xf32>
      %483 = vector.shape_cast %482 : vector<1x16x16xf32> to vector<16x16xf32>
      %484 = vector.broadcast %481 : f32 to vector<16x16xf32>
      %485 = arith.mulf %484, %483 : vector<16x16xf32>
      %486 = arith.addf %480, %485 : vector<16x16xf32>
      %c62 = arith.constant 62 : index
      %487 = memref.load %arg7[%c62] : memref<81xf32, #tpu.memory_space<smem>>
      %488 = vector.extract_strided_slice %102 {offsets = [0, 0, 0], sizes = [1, 16, 16], strides = [1, 1, 1]} : vector<3x16x16xf32> to vector<1x16x16xf32>
      %489 = vector.shape_cast %488 : vector<1x16x16xf32> to vector<16x16xf32>
      %490 = vector.broadcast %487 : f32 to vector<16x16xf32>
      %491 = arith.mulf %490, %489 : vector<16x16xf32>
      %492 = arith.addf %486, %491 : vector<16x16xf32>
      %c63 = arith.constant 63 : index
      %493 = memref.load %arg7[%c63] : memref<81xf32, #tpu.memory_space<smem>>
      %494 = vector.extract_strided_slice %94 {offsets = [1, 0, 0], sizes = [1, 16, 16], strides = [1, 1, 1]} : vector<3x16x16xf32> to vector<1x16x16xf32>
      %495 = vector.shape_cast %494 : vector<1x16x16xf32> to vector<16x16xf32>
      %496 = vector.broadcast %493 : f32 to vector<16x16xf32>
      %497 = arith.mulf %496, %495 : vector<16x16xf32>
      %498 = arith.addf %492, %497 : vector<16x16xf32>
      %c64 = arith.constant 64 : index
      %499 = memref.load %arg7[%c64] : memref<81xf32, #tpu.memory_space<smem>>
      %500 = vector.extract_strided_slice %95 {offsets = [1, 0, 0], sizes = [1, 16, 16], strides = [1, 1, 1]} : vector<3x16x16xf32> to vector<1x16x16xf32>
      %501 = vector.shape_cast %500 : vector<1x16x16xf32> to vector<16x16xf32>
      %502 = vector.broadcast %499 : f32 to vector<16x16xf32>
      %503 = arith.mulf %502, %501 : vector<16x16xf32>
      %504 = arith.addf %498, %503 : vector<16x16xf32>
      %c65 = arith.constant 65 : index
      %505 = memref.load %arg7[%c65] : memref<81xf32, #tpu.memory_space<smem>>
      %506 = vector.extract_strided_slice %96 {offsets = [1, 0, 0], sizes = [1, 16, 16], strides = [1, 1, 1]} : vector<3x16x16xf32> to vector<1x16x16xf32>
      %507 = vector.shape_cast %506 : vector<1x16x16xf32> to vector<16x16xf32>
      %508 = vector.broadcast %505 : f32 to vector<16x16xf32>
      %509 = arith.mulf %508, %507 : vector<16x16xf32>
      %510 = arith.addf %504, %509 : vector<16x16xf32>
      %c66 = arith.constant 66 : index
      %511 = memref.load %arg7[%c66] : memref<81xf32, #tpu.memory_space<smem>>
      %512 = vector.extract_strided_slice %97 {offsets = [1, 0, 0], sizes = [1, 16, 16], strides = [1, 1, 1]} : vector<3x16x16xf32> to vector<1x16x16xf32>
      %513 = vector.shape_cast %512 : vector<1x16x16xf32> to vector<16x16xf32>
      %514 = vector.broadcast %511 : f32 to vector<16x16xf32>
      %515 = arith.mulf %514, %513 : vector<16x16xf32>
      %516 = arith.addf %510, %515 : vector<16x16xf32>
      %c67 = arith.constant 67 : index
      %517 = memref.load %arg7[%c67] : memref<81xf32, #tpu.memory_space<smem>>
      %518 = vector.extract_strided_slice %98 {offsets = [1, 0, 0], sizes = [1, 16, 16], strides = [1, 1, 1]} : vector<3x16x16xf32> to vector<1x16x16xf32>
      %519 = vector.shape_cast %518 : vector<1x16x16xf32> to vector<16x16xf32>
      %520 = vector.broadcast %517 : f32 to vector<16x16xf32>
      %521 = arith.mulf %520, %519 : vector<16x16xf32>
      %522 = arith.addf %516, %521 : vector<16x16xf32>
      %c68 = arith.constant 68 : index
      %523 = memref.load %arg7[%c68] : memref<81xf32, #tpu.memory_space<smem>>
      %524 = vector.extract_strided_slice %99 {offsets = [1, 0, 0], sizes = [1, 16, 16], strides = [1, 1, 1]} : vector<3x16x16xf32> to vector<1x16x16xf32>
      %525 = vector.shape_cast %524 : vector<1x16x16xf32> to vector<16x16xf32>
      %526 = vector.broadcast %523 : f32 to vector<16x16xf32>
      %527 = arith.mulf %526, %525 : vector<16x16xf32>
      %528 = arith.addf %522, %527 : vector<16x16xf32>
      %c69 = arith.constant 69 : index
      %529 = memref.load %arg7[%c69] : memref<81xf32, #tpu.memory_space<smem>>
      %530 = vector.extract_strided_slice %100 {offsets = [1, 0, 0], sizes = [1, 16, 16], strides = [1, 1, 1]} : vector<3x16x16xf32> to vector<1x16x16xf32>
      %531 = vector.shape_cast %530 : vector<1x16x16xf32> to vector<16x16xf32>
      %532 = vector.broadcast %529 : f32 to vector<16x16xf32>
      %533 = arith.mulf %532, %531 : vector<16x16xf32>
      %534 = arith.addf %528, %533 : vector<16x16xf32>
      %c70 = arith.constant 70 : index
      %535 = memref.load %arg7[%c70] : memref<81xf32, #tpu.memory_space<smem>>
      %536 = vector.extract_strided_slice %101 {offsets = [1, 0, 0], sizes = [1, 16, 16], strides = [1, 1, 1]} : vector<3x16x16xf32> to vector<1x16x16xf32>
      %537 = vector.shape_cast %536 : vector<1x16x16xf32> to vector<16x16xf32>
      %538 = vector.broadcast %535 : f32 to vector<16x16xf32>
      %539 = arith.mulf %538, %537 : vector<16x16xf32>
      %540 = arith.addf %534, %539 : vector<16x16xf32>
      %c71 = arith.constant 71 : index
      %541 = memref.load %arg7[%c71] : memref<81xf32, #tpu.memory_space<smem>>
      %542 = vector.extract_strided_slice %102 {offsets = [1, 0, 0], sizes = [1, 16, 16], strides = [1, 1, 1]} : vector<3x16x16xf32> to vector<1x16x16xf32>
      %543 = vector.shape_cast %542 : vector<1x16x16xf32> to vector<16x16xf32>
      %544 = vector.broadcast %541 : f32 to vector<16x16xf32>
      %545 = arith.mulf %544, %543 : vector<16x16xf32>
      %546 = arith.addf %540, %545 : vector<16x16xf32>
      %c72 = arith.constant 72 : index
      %547 = memref.load %arg7[%c72] : memref<81xf32, #tpu.memory_space<smem>>
      %548 = vector.extract_strided_slice %94 {offsets = [2, 0, 0], sizes = [1, 16, 16], strides = [1, 1, 1]} : vector<3x16x16xf32> to vector<1x16x16xf32>
      %549 = vector.shape_cast %548 : vector<1x16x16xf32> to vector<16x16xf32>
      %550 = vector.broadcast %547 : f32 to vector<16x16xf32>
      %551 = arith.mulf %550, %549 : vector<16x16xf32>
      %552 = arith.addf %546, %551 : vector<16x16xf32>
      %c73 = arith.constant 73 : index
      %553 = memref.load %arg7[%c73] : memref<81xf32, #tpu.memory_space<smem>>
      %554 = vector.extract_strided_slice %95 {offsets = [2, 0, 0], sizes = [1, 16, 16], strides = [1, 1, 1]} : vector<3x16x16xf32> to vector<1x16x16xf32>
      %555 = vector.shape_cast %554 : vector<1x16x16xf32> to vector<16x16xf32>
      %556 = vector.broadcast %553 : f32 to vector<16x16xf32>
      %557 = arith.mulf %556, %555 : vector<16x16xf32>
      %558 = arith.addf %552, %557 : vector<16x16xf32>
      %c74 = arith.constant 74 : index
      %559 = memref.load %arg7[%c74] : memref<81xf32, #tpu.memory_space<smem>>
      %560 = vector.extract_strided_slice %96 {offsets = [2, 0, 0], sizes = [1, 16, 16], strides = [1, 1, 1]} : vector<3x16x16xf32> to vector<1x16x16xf32>
      %561 = vector.shape_cast %560 : vector<1x16x16xf32> to vector<16x16xf32>
      %562 = vector.broadcast %559 : f32 to vector<16x16xf32>
      %563 = arith.mulf %562, %561 : vector<16x16xf32>
      %564 = arith.addf %558, %563 : vector<16x16xf32>
      %c75 = arith.constant 75 : index
      %565 = memref.load %arg7[%c75] : memref<81xf32, #tpu.memory_space<smem>>
      %566 = vector.extract_strided_slice %97 {offsets = [2, 0, 0], sizes = [1, 16, 16], strides = [1, 1, 1]} : vector<3x16x16xf32> to vector<1x16x16xf32>
      %567 = vector.shape_cast %566 : vector<1x16x16xf32> to vector<16x16xf32>
      %568 = vector.broadcast %565 : f32 to vector<16x16xf32>
      %569 = arith.mulf %568, %567 : vector<16x16xf32>
      %570 = arith.addf %564, %569 : vector<16x16xf32>
      %c76 = arith.constant 76 : index
      %571 = memref.load %arg7[%c76] : memref<81xf32, #tpu.memory_space<smem>>
      %572 = vector.extract_strided_slice %98 {offsets = [2, 0, 0], sizes = [1, 16, 16], strides = [1, 1, 1]} : vector<3x16x16xf32> to vector<1x16x16xf32>
      %573 = vector.shape_cast %572 : vector<1x16x16xf32> to vector<16x16xf32>
      %574 = vector.broadcast %571 : f32 to vector<16x16xf32>
      %575 = arith.mulf %574, %573 : vector<16x16xf32>
      %576 = arith.addf %570, %575 : vector<16x16xf32>
      %c77 = arith.constant 77 : index
      %577 = memref.load %arg7[%c77] : memref<81xf32, #tpu.memory_space<smem>>
      %578 = vector.extract_strided_slice %99 {offsets = [2, 0, 0], sizes = [1, 16, 16], strides = [1, 1, 1]} : vector<3x16x16xf32> to vector<1x16x16xf32>
      %579 = vector.shape_cast %578 : vector<1x16x16xf32> to vector<16x16xf32>
      %580 = vector.broadcast %577 : f32 to vector<16x16xf32>
      %581 = arith.mulf %580, %579 : vector<16x16xf32>
      %582 = arith.addf %576, %581 : vector<16x16xf32>
      %c78 = arith.constant 78 : index
      %583 = memref.load %arg7[%c78] : memref<81xf32, #tpu.memory_space<smem>>
      %584 = vector.extract_strided_slice %100 {offsets = [2, 0, 0], sizes = [1, 16, 16], strides = [1, 1, 1]} : vector<3x16x16xf32> to vector<1x16x16xf32>
      %585 = vector.shape_cast %584 : vector<1x16x16xf32> to vector<16x16xf32>
      %586 = vector.broadcast %583 : f32 to vector<16x16xf32>
      %587 = arith.mulf %586, %585 : vector<16x16xf32>
      %588 = arith.addf %582, %587 : vector<16x16xf32>
      %c79 = arith.constant 79 : index
      %589 = memref.load %arg7[%c79] : memref<81xf32, #tpu.memory_space<smem>>
      %590 = vector.extract_strided_slice %101 {offsets = [2, 0, 0], sizes = [1, 16, 16], strides = [1, 1, 1]} : vector<3x16x16xf32> to vector<1x16x16xf32>
      %591 = vector.shape_cast %590 : vector<1x16x16xf32> to vector<16x16xf32>
      %592 = vector.broadcast %589 : f32 to vector<16x16xf32>
      %593 = arith.mulf %592, %591 : vector<16x16xf32>
      %594 = arith.addf %588, %593 : vector<16x16xf32>
      %c80 = arith.constant 80 : index
      %595 = memref.load %arg7[%c80] : memref<81xf32, #tpu.memory_space<smem>>
      %596 = vector.extract_strided_slice %102 {offsets = [2, 0, 0], sizes = [1, 16, 16], strides = [1, 1, 1]} : vector<3x16x16xf32> to vector<1x16x16xf32>
      %597 = vector.shape_cast %596 : vector<1x16x16xf32> to vector<16x16xf32>
      %598 = vector.broadcast %595 : f32 to vector<16x16xf32>
      %599 = arith.mulf %598, %597 : vector<16x16xf32>
      %600 = arith.addf %594, %599 : vector<16x16xf32>
      %601 = vector.shape_cast %268 : vector<16x16xf32> to vector<1x16x16xf32>
      %602 = vector.shape_cast %434 : vector<16x16xf32> to vector<1x16x16xf32>
      %603 = vector.shape_cast %600 : vector<16x16xf32> to vector<1x16x16xf32>
      %604 = tpu.concatenate %601, %602, %603 in 0 : vector<1x16x16xf32>, vector<1x16x16xf32>, vector<1x16x16xf32> -> vector<3x16x16xf32>
      %605 = arith.index_cast %arg1 : i32 to index
      %c0_44 = arith.constant 0 : index
      %c0_45 = arith.constant 0 : index
      %c0_46 = arith.constant 0 : index
      %606 = vector.load %arg13[%605, %c0_44, %c0_45, %c0_46] : memref<2x3x16x16xf32, #tpu.memory_space<vmem>>, vector<1x3x16x16xf32>
      %607 = vector.shape_cast %606 : vector<1x3x16x16xf32> to vector<3x16x16xf32>
      %608 = vector.shape_cast %604 : vector<3x16x16xf32> to vector<1x3x16x16xf32>
      tpu.vector_store %arg13[%605, %c0_44, %c0_45, %c0_46], %608 {strides = array<i32>} : memref<2x3x16x16xf32, #tpu.memory_space<vmem>>, vector<1x3x16x16xf32>,
      %609 = vector.extract_strided_slice %604 {offsets = [0, 0, 0], sizes = [1, 16, 16], strides = [1, 1, 1]} : vector<3x16x16xf32> to vector<1x16x16xf32>
      %610 = vector.shape_cast %609 : vector<1x16x16xf32> to vector<16x16xf32>
      %c0_47 = arith.constant 0 : index
      %c0_48 = arith.constant 0 : index
      %611 = memref.load %arg15[%c0_47, %c0_48] : memref<2x3xf32, #tpu.memory_space<smem>>
      %612 = vector.shape_cast %610 : vector<16x16xf32> to vector<1x16x16xf32>
      %cst_49 = arith.constant dense<0.000000e+00> : vector<1xf32>
      %613 = vector.multi_reduction <add>, %612, %cst_49 [1, 2] : vector<1x16x16xf32> to vector<1xf32>
      %614 = vector.shape_cast %613 : vector<1xf32> to vector<1x1x1xf32>
      %615 = vector.extract %614[0, 0, 0] : f32 from vector<1x1x1xf32>
      %616 = arith.addf %611, %615 : f32
      %c0_50 = arith.constant 0 : index
      %c0_51 = arith.constant 0 : index
      %617 = memref.load %arg15[%c0_50, %c0_51] : memref<2x3xf32, #tpu.memory_space<smem>>
      memref.store %616, %arg15[%c0_50, %c0_51] : memref<2x3xf32, #tpu.memory_space<smem>>
      %c1_52 = arith.constant 1 : index
      %c0_53 = arith.constant 0 : index
      %618 = memref.load %arg15[%c1_52, %c0_53] : memref<2x3xf32, #tpu.memory_space<smem>>
      %619 = arith.mulf %610, %610 : vector<16x16xf32>
      %620 = vector.shape_cast %619 : vector<16x16xf32> to vector<1x16x16xf32>
      %cst_54 = arith.constant dense<0.000000e+00> : vector<1xf32>
      %621 = vector.multi_reduction <add>, %620, %cst_54 [1, 2] : vector<1x16x16xf32> to vector<1xf32>
      %622 = vector.shape_cast %621 : vector<1xf32> to vector<1x1x1xf32>
      %623 = vector.extract %622[0, 0, 0] : f32 from vector<1x1x1xf32>
      %624 = arith.addf %618, %623 : f32
      %c1_55 = arith.constant 1 : index
      %c0_56 = arith.constant 0 : index
      %625 = memref.load %arg15[%c1_55, %c0_56] : memref<2x3xf32, #tpu.memory_space<smem>>
      memref.store %624, %arg15[%c1_55, %c0_56] : memref<2x3xf32, #tpu.memory_space<smem>>
      %626 = vector.extract_strided_slice %604 {offsets = [1, 0, 0], sizes = [1, 16, 16], strides = [1, 1, 1]} : vector<3x16x16xf32> to vector<1x16x16xf32>
      %627 = vector.shape_cast %626 : vector<1x16x16xf32> to vector<16x16xf32>
      %c0_57 = arith.constant 0 : index
      %c1_58 = arith.constant 1 : index
      %628 = memref.load %arg15[%c0_57, %c1_58] : memref<2x3xf32, #tpu.memory_space<smem>>
      %629 = vector.shape_cast %627 : vector<16x16xf32> to vector<1x16x16xf32>
      %cst_59 = arith.constant dense<0.000000e+00> : vector<1xf32>
      %630 = vector.multi_reduction <add>, %629, %cst_59 [1, 2] : vector<1x16x16xf32> to vector<1xf32>
      %631 = vector.shape_cast %630 : vector<1xf32> to vector<1x1x1xf32>
      %632 = vector.extract %631[0, 0, 0] : f32 from vector<1x1x1xf32>
      %633 = arith.addf %628, %632 : f32
      %c0_60 = arith.constant 0 : index
      %c1_61 = arith.constant 1 : index
      %634 = memref.load %arg15[%c0_60, %c1_61] : memref<2x3xf32, #tpu.memory_space<smem>>
      memref.store %633, %arg15[%c0_60, %c1_61] : memref<2x3xf32, #tpu.memory_space<smem>>
      %c1_62 = arith.constant 1 : index
      %c1_63 = arith.constant 1 : index
      %635 = memref.load %arg15[%c1_62, %c1_63] : memref<2x3xf32, #tpu.memory_space<smem>>
      %636 = arith.mulf %627, %627 : vector<16x16xf32>
      %637 = vector.shape_cast %636 : vector<16x16xf32> to vector<1x16x16xf32>
      %cst_64 = arith.constant dense<0.000000e+00> : vector<1xf32>
      %638 = vector.multi_reduction <add>, %637, %cst_64 [1, 2] : vector<1x16x16xf32> to vector<1xf32>
      %639 = vector.shape_cast %638 : vector<1xf32> to vector<1x1x1xf32>
      %640 = vector.extract %639[0, 0, 0] : f32 from vector<1x1x1xf32>
      %641 = arith.addf %635, %640 : f32
      %c1_65 = arith.constant 1 : index
      %c1_66 = arith.constant 1 : index
      %642 = memref.load %arg15[%c1_65, %c1_66] : memref<2x3xf32, #tpu.memory_space<smem>>
      memref.store %641, %arg15[%c1_65, %c1_66] : memref<2x3xf32, #tpu.memory_space<smem>>
      %643 = vector.extract_strided_slice %604 {offsets = [2, 0, 0], sizes = [1, 16, 16], strides = [1, 1, 1]} : vector<3x16x16xf32> to vector<1x16x16xf32>
      %644 = vector.shape_cast %643 : vector<1x16x16xf32> to vector<16x16xf32>
      %c0_67 = arith.constant 0 : index
      %c2_68 = arith.constant 2 : index
      %645 = memref.load %arg15[%c0_67, %c2_68] : memref<2x3xf32, #tpu.memory_space<smem>>
      %646 = vector.shape_cast %644 : vector<16x16xf32> to vector<1x16x16xf32>
      %cst_69 = arith.constant dense<0.000000e+00> : vector<1xf32>
      %647 = vector.multi_reduction <add>, %646, %cst_69 [1, 2] : vector<1x16x16xf32> to vector<1xf32>
      %648 = vector.shape_cast %647 : vector<1xf32> to vector<1x1x1xf32>
      %649 = vector.extract %648[0, 0, 0] : f32 from vector<1x1x1xf32>
      %650 = arith.addf %645, %649 : f32
      %c0_70 = arith.constant 0 : index
      %c2_71 = arith.constant 2 : index
      %651 = memref.load %arg15[%c0_70, %c2_71] : memref<2x3xf32, #tpu.memory_space<smem>>
      memref.store %650, %arg15[%c0_70, %c2_71] : memref<2x3xf32, #tpu.memory_space<smem>>
      %c1_72 = arith.constant 1 : index
      %c2_73 = arith.constant 2 : index
      %652 = memref.load %arg15[%c1_72, %c2_73] : memref<2x3xf32, #tpu.memory_space<smem>>
      %653 = arith.mulf %644, %644 : vector<16x16xf32>
      %654 = vector.shape_cast %653 : vector<16x16xf32> to vector<1x16x16xf32>
      %cst_74 = arith.constant dense<0.000000e+00> : vector<1xf32>
      %655 = vector.multi_reduction <add>, %654, %cst_74 [1, 2] : vector<1x16x16xf32> to vector<1xf32>
      %656 = vector.shape_cast %655 : vector<1xf32> to vector<1x1x1xf32>
      %657 = vector.extract %656[0, 0, 0] : f32 from vector<1x1x1xf32>
      %658 = arith.addf %652, %657 : f32
      %c1_75 = arith.constant 1 : index
      %c2_76 = arith.constant 2 : index
      %659 = memref.load %arg15[%c1_75, %c2_76] : memref<2x3xf32, #tpu.memory_space<smem>>
      memref.store %658, %arg15[%c1_75, %c2_76] : memref<2x3xf32, #tpu.memory_space<smem>>
    } else {
    }
    %c2_i32 = arith.constant 2 : i32
    %6 = arith.cmpi eq, %arg0, %c2_i32 : i32
    %7 = arith.extui %6 : i1 to i32
    %c0_i32_2 = arith.constant 0 : i32
    %8 = arith.cmpi ne, %7, %c0_i32_2 : i32
    scf.if %8 {
      %9 = arith.index_cast %arg1 : i32 to index
      %c0 = arith.constant 0 : index
      %c0_3 = arith.constant 0 : index
      %c0_4 = arith.constant 0 : index
      %10 = vector.load %arg13[%9, %c0, %c0_3, %c0_4] : memref<2x3x16x16xf32, #tpu.memory_space<vmem>>, vector<1x3x16x16xf32>
      %11 = vector.shape_cast %10 : vector<1x3x16x16xf32> to vector<3x16x16xf32>
      %12 = vector.extract_strided_slice %11 {offsets = [0, 0, 0], sizes = [1, 16, 16], strides = [1, 1, 1]} : vector<3x16x16xf32> to vector<1x16x16xf32>
      %13 = vector.shape_cast %12 : vector<1x16x16xf32> to vector<16x16xf32>
      %c0_5 = arith.constant 0 : index
      %c0_6 = arith.constant 0 : index
      %14 = memref.load %arg15[%c0_5, %c0_6] : memref<2x3xf32, #tpu.memory_space<smem>>
      %cst = arith.constant 0.001953125 : f32
      %15 = arith.mulf %14, %cst : f32
      %c1 = arith.constant 1 : index
      %c0_7 = arith.constant 0 : index
      %16 = memref.load %arg15[%c1, %c0_7] : memref<2x3xf32, #tpu.memory_space<smem>>
      %cst_8 = arith.constant 0.001953125 : f32
      %17 = arith.mulf %16, %cst_8 : f32
      %18 = arith.mulf %15, %15 : f32
      %19 = arith.subf %17, %18 : f32
      %cst_9 = arith.constant 0.000000e+00 : f32
      %20 = vector.broadcast %cst_9 : f32 to vector<16x16xf32>
      %cst_10 = arith.constant 9.99999974E-6 : f32
      %21 = arith.addf %19, %cst_10 : f32
      %22 = vector.broadcast %21 : f32 to vector<16x16xf32>
      %23 = arith.addf %20, %22 : vector<16x16xf32>
      %24 = math.rsqrt %23 : vector<16x16xf32>
      %25 = vector.broadcast %15 : f32 to vector<16x16xf32>
      %26 = arith.subf %13, %25 : vector<16x16xf32>
      %27 = arith.mulf %26, %24 : vector<16x16xf32>
      %c0_11 = arith.constant 0 : index
      %28 = memref.load %arg9[%c0_11] : memref<3xf32, #tpu.memory_space<smem>>
      %29 = vector.broadcast %28 : f32 to vector<16x16xf32>
      %30 = arith.mulf %27, %29 : vector<16x16xf32>
      %c0_12 = arith.constant 0 : index
      %31 = memref.load %arg10[%c0_12] : memref<3xf32, #tpu.memory_space<smem>>
      %32 = vector.broadcast %31 : f32 to vector<16x16xf32>
      %33 = arith.addf %30, %32 : vector<16x16xf32>
      %34 = vector.extract_strided_slice %11 {offsets = [1, 0, 0], sizes = [1, 16, 16], strides = [1, 1, 1]} : vector<3x16x16xf32> to vector<1x16x16xf32>
      %35 = vector.shape_cast %34 : vector<1x16x16xf32> to vector<16x16xf32>
      %c0_13 = arith.constant 0 : index
      %c1_14 = arith.constant 1 : index
      %36 = memref.load %arg15[%c0_13, %c1_14] : memref<2x3xf32, #tpu.memory_space<smem>>
      %cst_15 = arith.constant 0.001953125 : f32
      %37 = arith.mulf %36, %cst_15 : f32
      %c1_16 = arith.constant 1 : index
      %c1_17 = arith.constant 1 : index
      %38 = memref.load %arg15[%c1_16, %c1_17] : memref<2x3xf32, #tpu.memory_space<smem>>
      %cst_18 = arith.constant 0.001953125 : f32
      %39 = arith.mulf %38, %cst_18 : f32
      %40 = arith.mulf %37, %37 : f32
      %41 = arith.subf %39, %40 : f32
      %cst_19 = arith.constant 0.000000e+00 : f32
      %42 = vector.broadcast %cst_19 : f32 to vector<16x16xf32>
      %cst_20 = arith.constant 9.99999974E-6 : f32
      %43 = arith.addf %41, %cst_20 : f32
      %44 = vector.broadcast %43 : f32 to vector<16x16xf32>
      %45 = arith.addf %42, %44 : vector<16x16xf32>
      %46 = math.rsqrt %45 : vector<16x16xf32>
      %47 = vector.broadcast %37 : f32 to vector<16x16xf32>
      %48 = arith.subf %35, %47 : vector<16x16xf32>
      %49 = arith.mulf %48, %46 : vector<16x16xf32>
      %c1_21 = arith.constant 1 : index
      %50 = memref.load %arg9[%c1_21] : memref<3xf32, #tpu.memory_space<smem>>
      %51 = vector.broadcast %50 : f32 to vector<16x16xf32>
      %52 = arith.mulf %49, %51 : vector<16x16xf32>
      %c1_22 = arith.constant 1 : index
      %53 = memref.load %arg10[%c1_22] : memref<3xf32, #tpu.memory_space<smem>>
      %54 = vector.broadcast %53 : f32 to vector<16x16xf32>
      %55 = arith.addf %52, %54 : vector<16x16xf32>
      %56 = vector.extract_strided_slice %11 {offsets = [2, 0, 0], sizes = [1, 16, 16], strides = [1, 1, 1]} : vector<3x16x16xf32> to vector<1x16x16xf32>
      %57 = vector.shape_cast %56 : vector<1x16x16xf32> to vector<16x16xf32>
      %c0_23 = arith.constant 0 : index
      %c2 = arith.constant 2 : index
      %58 = memref.load %arg15[%c0_23, %c2] : memref<2x3xf32, #tpu.memory_space<smem>>
      %cst_24 = arith.constant 0.001953125 : f32
      %59 = arith.mulf %58, %cst_24 : f32
      %c1_25 = arith.constant 1 : index
      %c2_26 = arith.constant 2 : index
      %60 = memref.load %arg15[%c1_25, %c2_26] : memref<2x3xf32, #tpu.memory_space<smem>>
      %cst_27 = arith.constant 0.001953125 : f32
      %61 = arith.mulf %60, %cst_27 : f32
      %62 = arith.mulf %59, %59 : f32
      %63 = arith.subf %61, %62 : f32
      %cst_28 = arith.constant 0.000000e+00 : f32
      %64 = vector.broadcast %cst_28 : f32 to vector<16x16xf32>
      %cst_29 = arith.constant 9.99999974E-6 : f32
      %65 = arith.addf %63, %cst_29 : f32
      %66 = vector.broadcast %65 : f32 to vector<16x16xf32>
      %67 = arith.addf %64, %66 : vector<16x16xf32>
      %68 = math.rsqrt %67 : vector<16x16xf32>
      %69 = vector.broadcast %59 : f32 to vector<16x16xf32>
      %70 = arith.subf %57, %69 : vector<16x16xf32>
      %71 = arith.mulf %70, %68 : vector<16x16xf32>
      %c2_30 = arith.constant 2 : index
      %72 = memref.load %arg9[%c2_30] : memref<3xf32, #tpu.memory_space<smem>>
      %73 = vector.broadcast %72 : f32 to vector<16x16xf32>
      %74 = arith.mulf %71, %73 : vector<16x16xf32>
      %c2_31 = arith.constant 2 : index
      %75 = memref.load %arg10[%c2_31] : memref<3xf32, #tpu.memory_space<smem>>
      %76 = vector.broadcast %75 : f32 to vector<16x16xf32>
      %77 = arith.addf %74, %76 : vector<16x16xf32>
      %78 = vector.shape_cast %33 : vector<16x16xf32> to vector<1x16x16xf32>
      %79 = vector.shape_cast %55 : vector<16x16xf32> to vector<1x16x16xf32>
      %80 = vector.shape_cast %77 : vector<16x16xf32> to vector<1x16x16xf32>
      %81 = tpu.concatenate %78, %79, %80 in 0 : vector<1x16x16xf32>, vector<1x16x16xf32>, vector<1x16x16xf32> -> vector<3x16x16xf32>
      %c0_32 = arith.constant 0 : index
      %c0_33 = arith.constant 0 : index
      %c0_34 = arith.constant 0 : index
      %c0_35 = arith.constant 0 : index
      %82 = vector.load %arg2[%c0_32, %c0_33, %c0_34, %c0_35] : memref<1x3x16x16xf32, #tpu.memory_space<vmem>>, vector<1x3x16x16xf32>
      %83 = vector.shape_cast %82 : vector<1x3x16x16xf32> to vector<3x16x16xf32>
      %84 = arith.addf %81, %83 : vector<3x16x16xf32>
      %c0_36 = arith.constant 0 : index
      %c0_37 = arith.constant 0 : index
      %c0_38 = arith.constant 0 : index
      %c0_39 = arith.constant 0 : index
      %85 = vector.load %arg11[%c0_36, %c0_37, %c0_38, %c0_39] : memref<1x3x16x16xf32, #tpu.memory_space<vmem>>, vector<1x3x16x16xf32>
      %86 = vector.shape_cast %85 : vector<1x3x16x16xf32> to vector<3x16x16xf32>
      %87 = vector.shape_cast %84 : vector<3x16x16xf32> to vector<1x3x16x16xf32>
      tpu.vector_store %arg11[%c0_36, %c0_37, %c0_38, %c0_39], %87 {strides = array<i32>} : memref<1x3x16x16xf32, #tpu.memory_space<vmem>>, vector<1x3x16x16xf32>,
    } else {
    }
    return
  }
  func.func @transform_0(%arg0: i32, %arg1: i32) -> (i32, i32, i32, i32) {
    %c0_i32 = arith.constant 0 : i32
    %c0_i32_0 = arith.constant 0 : i32
    %c0_i32_1 = arith.constant 0 : i32
    %c0_i32_2 = arith.constant 0 : i32
    return %arg1, %c0_i32, %c0_i32_0, %c0_i32_1 : i32, i32, i32, i32
  }
  func.func @transform_1(%arg0: i32, %arg1: i32) -> i32 {
    %c0_i32 = arith.constant 0 : i32
    %c0_i32_0 = arith.constant 0 : i32
    return %c0_i32 : i32
  }
  func.func @transform_2(%arg0: i32, %arg1: i32) -> i32 {
    %c0_i32 = arith.constant 0 : i32
    %c0_i32_0 = arith.constant 0 : i32
    return %c0_i32 : i32
  }
  func.func @transform_3(%arg0: i32, %arg1: i32) -> i32 {
    %c0_i32 = arith.constant 0 : i32
    %c0_i32_0 = arith.constant 0 : i32
    return %c0_i32 : i32
  }
  func.func @transform_4(%arg0: i32, %arg1: i32) -> i32 {
    %c0_i32 = arith.constant 0 : i32
    %c0_i32_0 = arith.constant 0 : i32
    return %c0_i32 : i32
  }
  func.func @transform_5(%arg0: i32, %arg1: i32) -> i32 {
    %c0_i32 = arith.constant 0 : i32
    %c0_i32_0 = arith.constant 0 : i32
    return %c0_i32 : i32
  }
  func.func @transform_6(%arg0: i32, %arg1: i32) -> i32 {
    %c0_i32 = arith.constant 0 : i32
    %c0_i32_0 = arith.constant 0 : i32
    return %c0_i32 : i32
  }
  func.func @transform_7(%arg0: i32, %arg1: i32) -> i32 {
    %c0_i32 = arith.constant 0 : i32
    %c0_i32_0 = arith.constant 0 : i32
    return %c0_i32 : i32
  }
  func.func @transform_8(%arg0: i32, %arg1: i32) -> i32 {
    %c0_i32 = arith.constant 0 : i32
    %c0_i32_0 = arith.constant 0 : i32
    return %c0_i32 : i32
  }
  func.func @transform_9(%arg0: i32, %arg1: i32) -> (i32, i32, i32, i32) {
    %c0_i32 = arith.constant 0 : i32
    %c0_i32_0 = arith.constant 0 : i32
    %c0_i32_1 = arith.constant 0 : i32
    %c0_i32_2 = arith.constant 0 : i32
    return %arg1, %c0_i32, %c0_i32_0, %c0_i32_1 : i32, i32, i32, i32
  }
}

</mosaic_0001>

<llo_original>
// kernel: residual_block_forward.1
$region0: #{residual_block_forward.1}
  #allocation0 [shape = 'u32[]', space=smem, size = 0x4, offset = 0x4, fixed_abs, tag = 'smem constant byte address 0x4 - core index']
  #allocation1 [shape = 'u32[144,128]{1,0:T(1,128)}', space=vmem, size = 0x12000, scoped, tag = 'internal scratch']
  #allocation2 [shape = 'f32[2,3,16,16]{3,2,1,0:T(8,128)}', space=vmem, size = 0xc000, scoped, tag = 'scratch operand']
  #allocation3 [shape = 'f32[2,3,16,16]{3,2,1,0:T(8,128)}', space=vmem, size = 0xc000, scoped, tag = 'scratch operand']
  #allocation4 [shape = 'f32[2,3]{1,0:T(2,128)}', space=smem, size = 0x400, scoped, tag = 'scratch operand']
  #allocation5 [shape = 'f32[2,3]{1,0:T(2,128)}', space=smem, size = 0x400, scoped, tag = 'scratch operand']
  %s0 = inlined_call_operand.hbm [shape: f32[2,3,16,16], index: 0, kind: input, shape index: {}]
  %s1 = inlined_call_operand.vmem [shape: f32[81], index: 1, kind: input, shape index: {}]
  %s2 = inlined_call_operand.vmem [shape: f32[3], index: 2, kind: input, shape index: {}]
  %s3 = inlined_call_operand.vmem [shape: f32[3], index: 3, kind: input, shape index: {}]
  %s4 = inlined_call_operand.vmem [shape: f32[3], index: 4, kind: input, shape index: {}]
  %s5 = inlined_call_operand.vmem [shape: f32[81], index: 5, kind: input, shape index: {}]
  %s6 = inlined_call_operand.vmem [shape: f32[3], index: 6, kind: input, shape index: {}]
  %s7 = inlined_call_operand.vmem [shape: f32[3], index: 7, kind: input, shape index: {}]
  %s8 = inlined_call_operand.vmem [shape: f32[3], index: 8, kind: input, shape index: {}]
  %s9 = inlined_call_operand.hbm [shape: f32[2,3,16,16], index: 9, kind: output, shape index: {}]
  %s10 = sld [smem:[#allocation0]]
  $region121: #{residual_block_forward.1} parent=0
    _
  %s12 = ssub.s32 1, %s10
  %s13 = scalar_select 0, %s12, %s10
  $region1: #{residual_block_forward.1} parent=0
    #allocation6 [shape = 'u8[49152]{0}', space=vmem, size = 0xc000, scoped, tag = 'input window, operand 0']
    #allocation7 [shape = 's32[2]{0}', space=sflag, size = 0x8, scoped, tag = 'scoped memory for residual_block_forward.1']
    #allocation8 [shape = 's32[2]{0}', space=sflag, size = 0x8, scoped, tag = 'scoped memory for residual_block_forward.1']
    #allocation9 [shape = 's32[2]{0}', space=sflag, size = 0x8, scoped, tag = 'scoped memory for residual_block_forward.1']
    #allocation10 [shape = 'u8[512]{0}', space=smem, size = 0x200, scoped, tag = 'input window, operand 1, single buffered']
    #allocation11 [shape = 'u8[512]{0}', space=smem, size = 0x200, scoped, tag = 'input window, operand 2, single buffered']
    #allocation12 [shape = 's32[1]{0}', space=sflag, size = 0x4, scoped, tag = 'scoped memory for residual_block_forward.1']
    #allocation13 [shape = 'u8[512]{0}', space=smem, size = 0x200, scoped, tag = 'input window, operand 3, single buffered']
    #allocation14 [shape = 'u8[512]{0}', space=smem, size = 0x200, scoped, tag = 'input window, operand 4, single buffered']
    #allocation15 [shape = 's32[1]{0}', space=sflag, size = 0x4, scoped, tag = 'scoped memory for residual_block_forward.1']
    #allocation16 [shape = 'u8[512]{0}', space=smem, size = 0x200, scoped, tag = 'input window, operand 5, single buffered']
    #allocation17 [shape = 'u8[512]{0}', space=smem, size = 0x200, scoped, tag = 'input window, operand 6, single buffered']
    #allocation18 [shape = 's32[1]{0}', space=sflag, size = 0x4, scoped, tag = 'scoped memory for residual_block_forward.1']
    #allocation19 [shape = 'u8[512]{0}', space=smem, size = 0x200, scoped, tag = 'input window, operand 7, single buffered']
    #allocation20 [shape = 'u8[512]{0}', space=smem, size = 0x200, scoped, tag = 'input window, operand 8, single buffered']
    #allocation21 [shape = 's32[1]{0}', space=sflag, size = 0x4, scoped, tag = 'scoped memory for residual_block_forward.1']
    #allocation22 [shape = 'u8[49152]{0}', space=vmem, size = 0xc000, scoped, tag = 'output window, operand 0']
    %14 = vsyncpa [#allocation7], 0
    %s15 = scalar_lea.sflag [#allocation7], 1
    %16 = vsyncpa %s15, 0
    %17 = vsyncpa [#allocation9], 0
    %18 = vsyncpa [#allocation12], 0
    %19 = vsyncpa [#allocation15], 0
    %20 = vsyncpa [#allocation18], 0
    %21 = vsyncpa [#allocation21], 0
    %22 = vsyncpa [#allocation8], 0
    %s23 = scalar_lea.sflag [#allocation8], 1
    %24 = vsyncpa %s23, 0
    loop: start=0, step=1, limit=8
    $region2: #{residual_block_forward.1} parent=1 // loop_pre_header
      _
    $region3: #{residual_block_forward.1} parent=1 // loop_header
      %s26 = sphi 0, %s30
      %p27 = scmp.ge.s32.totalorder %s26, 8
      %s33 = sphi 0, %s45
      %s34 = sphi 0, %s41
      %s35 = sphi 0, %s33
      %s36 = sphi 0, %s34
      %s37 = sphi 0, %s35
      %s38 = sphi 0, %s36
      %s48 = sphi 0, %s50
      %s51 = sphi 0, %s48
      %s52 = sphi 0, %s51
      %s68 = sphi 0, %s52
      %s72 = sphi 0, %s72
      %s74 = sphi 0, %s72
      %s75 = sphi 0, %s74
      %s89 = sphi 0, %s75
      %s93 = sphi 0, %s93
      %s95 = sphi 0, %s93
      %s96 = sphi 0, %s95
      %s110 = sphi 0, %s96
      %s114 = sphi 0, %s114
      %s116 = sphi 0, %s114
      %s117 = sphi 0, %s116
      %s131 = sphi 0, %s117
      %s135 = sphi 0, %s135
      %s137 = sphi 0, %s135
      %s138 = sphi 0, %s137
      %s152 = sphi 0, %s138
      %s156 = sphi 0, %s156
      %s158 = sphi 0, %s156
      %s159 = sphi 0, %s158
      %s173 = sphi 0, %s159
      %s177 = sphi 0, %s177
      %s179 = sphi 0, %s177
      %s180 = sphi 0, %s179
      %s194 = sphi 0, %s180
      %s198 = sphi 0, %s198
      %s200 = sphi 0, %s198
      %s201 = sphi 0, %s200
      %s215 = sphi 0, %s201
      %s219 = sphi 0, %s219
      %s221 = sphi 0, %s219
      %s222 = sphi 0, %s221
      %s236 = sphi 0, %s222
      %s242 = sphi 0, %s244
      %s245 = sphi 0, %s242
      %s246 = sphi 0, %s245
      %s262 = sphi 0, %s246
    $region4: #{residual_block_forward.1} parent=1 // loop_header_branch
      %29 = sbr.rel (%p27) target = $region8
    $region5: #{residual_block_forward.1} parent=1 // loop_body
      %s31 = ssub.s32 %s26, 1
      %s32 = ssub.s32 %s26, 2
      %s39 = sadd.s32 1, %s34
      %p40 = scmp.ge.s32.totalorder %s39, 2
      %s41 = scalar_select %p40, 0, %s39
      %s42 = sadd.s32 1, %s33
      %s43 = scalar_select %p40, %s42, %s33
      %p44 = scmp.ge.s32.totalorder %s43, 3
      %s45 = scalar_select %p44, 0, %s43
      %s46 = ssub.s32 %s34, %s41
      %p47 = scmp.eq.s32.totalorder %s46, 0
      %s49 = sadd.s32 %s48, 1
      %s50 = scalar_select %p47, %s48, %s49
      %p53 = pneg %p47
      %p54 = scmp.eq.s32.totalorder %s26, 5
      %p55 = por %p53, %p54
      %p56 = scmp.ne.s32.totalorder %s48, %s51
      %p57 = scmp.eq.s32.totalorder %s26, 0
      %p58 = por %p56, %p57
      %p59 = scmp.ne.s32.totalorder %s48, %s51
      %p60 = scmp.eq.s32.totalorder %s31, 5
      %p61 = por %p59, %p60
      %p62 = scmp.ne.s32.totalorder %s51, %s52
      %p63 = scmp.eq.s32.totalorder %s31, 0
      %p64 = por %p62, %p63
      %p65 = scmp.ne.s32.totalorder %s51, %s52
      %p66 = scmp.eq.s32.totalorder %s32, 5
      %p67 = por %p65, %p66
      %p69 = scmp.ne.s32.totalorder %s52, %s68
      %p70 = scmp.eq.s32.totalorder %s32, 0
      %p71 = por %p69, %p70
      %s73 = sadd.s32 %s72, 1
      %p76 = scmp.eq.s32.totalorder %s26, 5
      %p77 = scmp.ne.s32.totalorder %s72, %s74
      %p78 = scmp.eq.s32.totalorder %s26, 0
      %p79 = por %p77, %p78
      %p80 = scmp.ne.s32.totalorder %s72, %s74
      %p81 = scmp.eq.s32.totalorder %s31, 5
      %p82 = por %p80, %p81
      %p83 = scmp.ne.s32.totalorder %s74, %s75
      %p84 = scmp.eq.s32.totalorder %s31, 0
      %p85 = por %p83, %p84
      %p86 = scmp.ne.s32.totalorder %s74, %s75
      %p87 = scmp.eq.s32.totalorder %s32, 5
      %p88 = por %p86, %p87
      %p90 = scmp.ne.s32.totalorder %s75, %s89
      %p91 = scmp.eq.s32.totalorder %s32, 0
      %p92 = por %p90, %p91
      %s94 = sadd.s32 %s93, 1
      %p97 = scmp.eq.s32.totalorder %s26, 5
      %p98 = scmp.ne.s32.totalorder %s93, %s95
      %p99 = scmp.eq.s32.totalorder %s26, 0
      %p100 = por %p98, %p99
      %p101 = scmp.ne.s32.totalorder %s93, %s95
      %p102 = scmp.eq.s32.totalorder %s31, 5
      %p103 = por %p101, %p102
      %p104 = scmp.ne.s32.totalorder %s95, %s96
      %p105 = scmp.eq.s32.totalorder %s31, 0
      %p106 = por %p104, %p105
      %p107 = scmp.ne.s32.totalorder %s95, %s96
      %p108 = scmp.eq.s32.totalorder %s32, 5
      %p109 = por %p107, %p108
      %p111 = scmp.ne.s32.totalorder %s96, %s110
      %p112 = scmp.eq.s32.totalorder %s32, 0
      %p113 = por %p111, %p112
      %s115 = sadd.s32 %s114, 1
      %p118 = scmp.eq.s32.totalorder %s26, 5
      %p119 = scmp.ne.s32.totalorder %s114, %s116
      %p120 = scmp.eq.s32.totalorder %s26, 0
      %p121 = por %p119, %p120
      %p122 = scmp.ne.s32.totalorder %s114, %s116
      %p123 = scmp.eq.s32.totalorder %s31, 5
      %p124 = por %p122, %p123
      %p125 = scmp.ne.s32.totalorder %s116, %s117
      %p126 = scmp.eq.s32.totalorder %s31, 0
      %p127 = por %p125, %p126
      %p128 = scmp.ne.s32.totalorder %s116, %s117
      %p129 = scmp.eq.s32.totalorder %s32, 5
      %p130 = por %p128, %p129
      %p132 = scmp.ne.s32.totalorder %s117, %s131
      %p133 = scmp.eq.s32.totalorder %s32, 0
      %p134 = por %p132, %p133
      %s136 = sadd.s32 %s135, 1
      %p139 = scmp.eq.s32.totalorder %s26, 5
      %p140 = scmp.ne.s32.totalorder %s135, %s137
      %p141 = scmp.eq.s32.totalorder %s26, 0
      %p142 = por %p140, %p141
      %p143 = scmp.ne.s32.totalorder %s135, %s137
      %p144 = scmp.eq.s32.totalorder %s31, 5
      %p145 = por %p143, %p144
      %p146 = scmp.ne.s32.totalorder %s137, %s138
      %p147 = scmp.eq.s32.totalorder %s31, 0
      %p148 = por %p146, %p147
      %p149 = scmp.ne.s32.totalorder %s137, %s138
      %p150 = scmp.eq.s32.totalorder %s32, 5
      %p151 = por %p149, %p150
      %p153 = scmp.ne.s32.totalorder %s138, %s152
      %p154 = scmp.eq.s32.totalorder %s32, 0
      %p155 = por %p153, %p154
      %s157 = sadd.s32 %s156, 1
      %p160 = scmp.eq.s32.totalorder %s26, 5
      %p161 = scmp.ne.s32.totalorder %s156, %s158
      %p162 = scmp.eq.s32.totalorder %s26, 0
      %p163 = por %p161, %p162
      %p164 = scmp.ne.s32.totalorder %s156, %s158
      %p165 = scmp.eq.s32.totalorder %s31, 5
      %p166 = por %p164, %p165
      %p167 = scmp.ne.s32.totalorder %s158, %s159
      %p168 = scmp.eq.s32.totalorder %s31, 0
      %p169 = por %p167, %p168
      %p170 = scmp.ne.s32.totalorder %s158, %s159
      %p171 = scmp.eq.s32.totalorder %s32, 5
      %p172 = por %p170, %p171
      %p174 = scmp.ne.s32.totalorder %s159, %s173
      %p175 = scmp.eq.s32.totalorder %s32, 0
      %p176 = por %p174, %p175
      %s178 = sadd.s32 %s177, 1
      %p181 = scmp.eq.s32.totalorder %s26, 5
      %p182 = scmp.ne.s32.totalorder %s177, %s179
      %p183 = scmp.eq.s32.totalorder %s26, 0
      %p184 = por %p182, %p183
      %p185 = scmp.ne.s32.totalorder %s177, %s179
      %p186 = scmp.eq.s32.totalorder %s31, 5
      %p187 = por %p185, %p186
      %p188 = scmp.ne.s32.totalorder %s179, %s180
      %p189 = scmp.eq.s32.totalorder %s31, 0
      %p190 = por %p188, %p189
      %p191 = scmp.ne.s32.totalorder %s179, %s180
      %p192 = scmp.eq.s32.totalorder %s32, 5
      %p193 = por %p191, %p192
      %p195 = scmp.ne.s32.totalorder %s180, %s194
      %p196 = scmp.eq.s32.totalorder %s32, 0
      %p197 = por %p195, %p196
      %s199 = sadd.s32 %s198, 1
      %p202 = scmp.eq.s32.totalorder %s26, 5
      %p203 = scmp.ne.s32.totalorder %s198, %s200
      %p204 = scmp.eq.s32.totalorder %s26, 0
      %p205 = por %p203, %p204
      %p206 = scmp.ne.s32.totalorder %s198, %s200
      %p207 = scmp.eq.s32.totalorder %s31, 5
      %p208 = por %p206, %p207
      %p209 = scmp.ne.s32.totalorder %s200, %s201
      %p210 = scmp.eq.s32.totalorder %s31, 0
      %p211 = por %p209, %p210
      %p212 = scmp.ne.s32.totalorder %s200, %s201
      %p213 = scmp.eq.s32.totalorder %s32, 5
      %p214 = por %p212, %p213
      %p216 = scmp.ne.s32.totalorder %s201, %s215
      %p217 = scmp.eq.s32.totalorder %s32, 0
      %p218 = por %p216, %p217
      %s220 = sadd.s32 %s219, 1
      %p223 = scmp.eq.s32.totalorder %s26, 5
      %p224 = scmp.ne.s32.totalorder %s219, %s221
      %p225 = scmp.eq.s32.totalorder %s26, 0
      %p226 = por %p224, %p225
      %p227 = scmp.ne.s32.totalorder %s219, %s221
      %p228 = scmp.eq.s32.totalorder %s31, 5
      %p229 = por %p227, %p228
      %p230 = scmp.ne.s32.totalorder %s221, %s222
      %p231 = scmp.eq.s32.totalorder %s31, 0
      %p232 = por %p230, %p231
      %p233 = scmp.ne.s32.totalorder %s221, %s222
      %p234 = scmp.eq.s32.totalorder %s32, 5
      %p235 = por %p233, %p234
      %p237 = scmp.ne.s32.totalorder %s222, %s236
      %p238 = scmp.eq.s32.totalorder %s32, 0
      %p239 = por %p237, %p238
      %s240 = ssub.s32 %s34, %s41
      %p241 = scmp.eq.s32.totalorder %s240, 0
      %s243 = sadd.s32 %s242, 1
      %s244 = scalar_select %p241, %s242, %s243
      %p247 = pneg %p241
      %p248 = scmp.eq.s32.totalorder %s26, 5
      %p249 = por %p247, %p248
      %p250 = scmp.ne.s32.totalorder %s242, %s245
      %p251 = scmp.eq.s32.totalorder %s26, 0
      %p252 = por %p250, %p251
      %p253 = scmp.ne.s32.totalorder %s242, %s245
      %p254 = scmp.eq.s32.totalorder %s31, 5
      %p255 = por %p253, %p254
      %p256 = scmp.ne.s32.totalorder %s245, %s246
      %p257 = scmp.eq.s32.totalorder %s31, 0
      %p258 = por %p256, %p257
      %p259 = scmp.ne.s32.totalorder %s245, %s246
      %p260 = scmp.eq.s32.totalorder %s32, 5
      %p261 = por %p259, %p260
      %p263 = scmp.ne.s32.totalorder %s246, %s262
      %p264 = scmp.eq.s32.totalorder %s32, 0
      %p265 = por %p263, %p264
      %p266 = scmp.le.s32.totalorder 1, %s26
      %p267 = scmp.lt.s32.totalorder %s26, 7
      %p268 = pnand %p266, %p267
      %p269 = pneg %p268
      // Predicated region
      $region9: #{residual_block_forward.1} parent=5 // pred_check
        _
      $region10: #{residual_block_forward.1} parent=5 // pred_check_branch
        %271 = sbr.rel (%p268) target = $region12
      $region11: #{residual_block_forward.1} parent=5 // pred_region
        %s272 = ssub.s32 %s26, 1
        // Predicated region
        $region13: #{residual_block_forward.1} parent=11 // pred_check
          %p273 = pneg %p85
        $region14: #{residual_block_forward.1} parent=11 // pred_check_branch
          %275 = sbr.rel (%p273) target = $region16
        $region15: #{residual_block_forward.1} parent=11 // pred_region
          %s277 = ssub.s32 16, 16
          %278 = vsyncadd [#allocation9], %s277
          %s280 = sshll.u32 %s1, 4
          %s281 = int_to_ptr.vmem [resolvable:$true] %s280
          %283 = dma.vmem_to_smem %s281, 16, [#allocation10], [#allocation9]
        $region16: #{residual_block_forward.1} parent=11 // pred_fallthru
          _
        // Predicated region
        $region17: #{residual_block_forward.1} parent=11 // pred_check
          %p284 = pneg %p106
        $region18: #{residual_block_forward.1} parent=11 // pred_check_branch
          %286 = sbr.rel (%p284) target = $region20
        $region19: #{residual_block_forward.1} parent=11 // pred_region
          %s288 = ssub.s32 16, 16
          %289 = vsyncadd [#allocation12], %s288
          %s291 = sshll.u32 %s2, 4
          %s292 = int_to_ptr.vmem [resolvable:$true] %s291
          %294 = dma.vmem_to_smem %s292, 16, [#allocation11], [#allocation12]
        $region20: #{residual_block_forward.1} parent=11 // pred_fallthru
          _
        // Predicated region
        $region21: #{residual_block_forward.1} parent=11 // pred_check
          %p295 = pneg %p127
        $region22: #{residual_block_forward.1} parent=11 // pred_check_branch
          %297 = sbr.rel (%p295) target = $region24
        $region23: #{residual_block_forward.1} parent=11 // pred_region
          %s299 = ssub.s32 16, 16
          %300 = vsyncadd [#allocation12], %s299
          %s302 = sshll.u32 %s3, 4
          %s303 = int_to_ptr.vmem [resolvable:$true] %s302
          %305 = dma.vmem_to_smem %s303, 16, [#allocation13], [#allocation12]
        $region24: #{residual_block_forward.1} parent=11 // pred_fallthru
          _
        // Predicated region
        $region25: #{residual_block_forward.1} parent=11 // pred_check
          %p306 = pneg %p148
        $region26: #{residual_block_forward.1} parent=11 // pred_check_branch
          %308 = sbr.rel (%p306) target = $region28
        $region27: #{residual_block_forward.1} parent=11 // pred_region
          %s310 = ssub.s32 16, 16
          %311 = vsyncadd [#allocation15], %s310
          %s313 = sshll.u32 %s4, 4
          %s314 = int_to_ptr.vmem [resolvable:$true] %s313
          %316 = dma.vmem_to_smem %s314, 16, [#allocation14], [#allocation15]
        $region28: #{residual_block_forward.1} parent=11 // pred_fallthru
          _
        // Predicated region
        $region29: #{residual_block_forward.1} parent=11 // pred_check
          %p317 = pneg %p169
        $region30: #{residual_block_forward.1} parent=11 // pred_check_branch
          %319 = sbr.rel (%p317) target = $region32
        $region31: #{residual_block_forward.1} parent=11 // pred_region
          %s321 = ssub.s32 16, 16
          %322 = vsyncadd [#allocation15], %s321
          %s324 = sshll.u32 %s5, 4
          %s325 = int_to_ptr.vmem [resolvable:$true] %s324
          %327 = dma.vmem_to_smem %s325, 16, [#allocation16], [#allocation15]
        $region32: #{residual_block_forward.1} parent=11 // pred_fallthru
          _
        // Predicated region
        $region33: #{residual_block_forward.1} parent=11 // pred_check
          %p328 = pneg %p190
        $region34: #{residual_block_forward.1} parent=11 // pred_check_branch
          %330 = sbr.rel (%p328) target = $region36
        $region35: #{residual_block_forward.1} parent=11 // pred_region
          %s332 = ssub.s32 16, 16
          %333 = vsyncadd [#allocation18], %s332
          %s335 = sshll.u32 %s6, 4
          %s336 = int_to_ptr.vmem [resolvable:$true] %s335
          %338 = dma.vmem_to_smem %s336, 16, [#allocation17], [#allocation18]
        $region36: #{residual_block_forward.1} parent=11 // pred_fallthru
          _
        // Predicated region
        $region37: #{residual_block_forward.1} parent=11 // pred_check
          %p339 = pneg %p211
        $region38: #{residual_block_forward.1} parent=11 // pred_check_branch
          %341 = sbr.rel (%p339) target = $region40
        $region39: #{residual_block_forward.1} parent=11 // pred_region
          %s343 = ssub.s32 16, 16
          %344 = vsyncadd [#allocation18], %s343
          %s346 = sshll.u32 %s7, 4
          %s347 = int_to_ptr.vmem [resolvable:$true] %s346
          %349 = dma.vmem_to_smem %s347, 16, [#allocation19], [#allocation18]
        $region40: #{residual_block_forward.1} parent=11 // pred_fallthru
          _
        // Predicated region
        $region41: #{residual_block_forward.1} parent=11 // pred_check
          %p350 = pneg %p232
        $region42: #{residual_block_forward.1} parent=11 // pred_check_branch
          %352 = sbr.rel (%p350) target = $region44
        $region43: #{residual_block_forward.1} parent=11 // pred_region
          %s354 = ssub.s32 16, 16
          %355 = vsyncadd [#allocation21], %s354
          %s357 = sshll.u32 %s8, 4
          %s358 = int_to_ptr.vmem [resolvable:$true] %s357
          %360 = dma.vmem_to_smem %s358, 16, [#allocation20], [#allocation21]
        $region44: #{residual_block_forward.1} parent=11 // pred_fallthru
          _
      $region12: #{residual_block_forward.1} parent=5 // pred_fallthru
        _
      %p361 = scmp.lt.s32.totalorder %s26, 6
      // Predicated region
      $region45: #{residual_block_forward.1} parent=5 // pred_check
        %p362 = pneg %p361
      $region46: #{residual_block_forward.1} parent=5 // pred_check_branch
        %364 = sbr.rel (%p362) target = $region48
      $region47: #{residual_block_forward.1} parent=5 // pred_region
        // Predicated region
        $region49: #{residual_block_forward.1} parent=47 // pred_check
          %p365 = pneg %p58
        $region50: #{residual_block_forward.1} parent=47 // pred_check_branch
          %367 = sbr.rel (%p365) target = $region52
        $region51: #{residual_block_forward.1} parent=47 // pred_region
          %s368 = sand.u32 %s48, 1
          %s369 = scalar_lea.sflag [#allocation7], %s368
          %s370 = sand.u32 %s48, 1
          %s371 = smul.addr %s370, 48
          %s372 = scalar_lea.vmem [#allocation6], %s371
          %s374 = ssub.s32 768, 768
          %375 = vsyncadd %s369, %s374
          %s376 = smul.addr %s34, 6
          %s377 = smul.addr %s376, 128
          %s378 = scalar_lea.hbm %s0, %s377
          %s379 = sshll.u32 %s372, 4
          %s380 = int_to_ptr.vmem [resolvable:$true] %s379
          %385 = dma.hbm_to_vmem [thread:$0]  %s378, 768, %s380, %s369, 128, 128, 8
        $region52: #{residual_block_forward.1} parent=47 // pred_fallthru
          _
      $region48: #{residual_block_forward.1} parent=5 // pred_fallthru
        _
      %p386 = scmp.le.s32.totalorder 1, %s26
      %p387 = scmp.lt.s32.totalorder %s26, 7
      %p388 = pnand %p386, %p387
      %p389 = pneg %p388
      // Predicated region
      $region53: #{residual_block_forward.1} parent=5 // pred_check
        _
      $region54: #{residual_block_forward.1} parent=5 // pred_check_branch
        %391 = sbr.rel (%p388) target = $region56
      $region55: #{residual_block_forward.1} parent=5 // pred_region
        %s392 = ssub.s32 %s26, 1
        %s393 = sand.u32 %s51, 1
        %s394 = scalar_lea.sflag [#allocation7], %s393
        %s395 = sand.u32 %s51, 1
        %s396 = smul.addr %s395, 48
        %s397 = scalar_lea.vmem [#allocation6], %s396
        // Predicated region
        $region57: #{residual_block_forward.1} parent=55 // pred_check
          %p398 = pneg %p64
        $region58: #{residual_block_forward.1} parent=55 // pred_check_branch
          %400 = sbr.rel (%p398) target = $region60
        $region59: #{residual_block_forward.1} parent=55 // pred_region
          %401 = dma.done %s394, 768
        $region60: #{residual_block_forward.1} parent=55 // pred_fallthru
          _
        // Predicated region
        $region61: #{residual_block_forward.1} parent=55 // pred_check
          %p402 = pneg %p85
        $region62: #{residual_block_forward.1} parent=55 // pred_check_branch
          %404 = sbr.rel (%p402) target = $region64
        $region63: #{residual_block_forward.1} parent=55 // pred_region
          %405 = dma.done [#allocation9], 16
        $region64: #{residual_block_forward.1} parent=55 // pred_fallthru
          _
        // Predicated region
        $region65: #{residual_block_forward.1} parent=55 // pred_check
          %p406 = pneg %p106
        $region66: #{residual_block_forward.1} parent=55 // pred_check_branch
          %408 = sbr.rel (%p406) target = $region68
        $region67: #{residual_block_forward.1} parent=55 // pred_region
          %409 = dma.done [#allocation12], 16
        $region68: #{residual_block_forward.1} parent=55 // pred_fallthru
          _
        // Predicated region
        $region69: #{residual_block_forward.1} parent=55 // pred_check
          %p410 = pneg %p127
        $region70: #{residual_block_forward.1} parent=55 // pred_check_branch
          %412 = sbr.rel (%p410) target = $region72
        $region71: #{residual_block_forward.1} parent=55 // pred_region
          %413 = dma.done [#allocation12], 16
        $region72: #{residual_block_forward.1} parent=55 // pred_fallthru
          _
        // Predicated region
        $region73: #{residual_block_forward.1} parent=55 // pred_check
          %p414 = pneg %p148
        $region74: #{residual_block_forward.1} parent=55 // pred_check_branch
          %416 = sbr.rel (%p414) target = $region76
        $region75: #{residual_block_forward.1} parent=55 // pred_region
          %417 = dma.done [#allocation15], 16
        $region76: #{residual_block_forward.1} parent=55 // pred_fallthru
          _
        // Predicated region
        $region77: #{residual_block_forward.1} parent=55 // pred_check
          %p418 = pneg %p169
        $region78: #{residual_block_forward.1} parent=55 // pred_check_branch
          %420 = sbr.rel (%p418) target = $region80
        $region79: #{residual_block_forward.1} parent=55 // pred_region
          %421 = dma.done [#allocation15], 16
        $region80: #{residual_block_forward.1} parent=55 // pred_fallthru
          _
        // Predicated region
        $region81: #{residual_block_forward.1} parent=55 // pred_check
          %p422 = pneg %p190
        $region82: #{residual_block_forward.1} parent=55 // pred_check_branch
          %424 = sbr.rel (%p422) target = $region84
        $region83: #{residual_block_forward.1} parent=55 // pred_region
          %425 = dma.done [#allocation18], 16
        $region84: #{residual_block_forward.1} parent=55 // pred_fallthru
          _
        // Predicated region
        $region85: #{residual_block_forward.1} parent=55 // pred_check
          %p426 = pneg %p211
        $region86: #{residual_block_forward.1} parent=55 // pred_check_branch
          %428 = sbr.rel (%p426) target = $region88
        $region87: #{residual_block_forward.1} parent=55 // pred_region
          %429 = dma.done [#allocation18], 16
        $region88: #{residual_block_forward.1} parent=55 // pred_fallthru
          _
        // Predicated region
        $region89: #{residual_block_forward.1} parent=55 // pred_check
          %p430 = pneg %p232
        $region90: #{residual_block_forward.1} parent=55 // pred_check_branch
          %432 = sbr.rel (%p430) target = $region92
        $region91: #{residual_block_forward.1} parent=55 // pred_region
          %433 = dma.done [#allocation21], 16
        $region92: #{residual_block_forward.1} parent=55 // pred_fallthru
          _
        %434 = sfence
        %s435 = sand.u32 %s51, 1
        %s436 = scalar_lea.sflag [#allocation7], %s435
        %s437 = sand.u32 %s51, 1
        %s438 = smul.addr %s437, 48
        %s439 = scalar_lea.vmem [#allocation6], %s438
        %p440 = pneg %p64
        %p441 = pneg %p61
        %p442 = pneg %p85
        %p443 = pneg %p82
        %p444 = pneg %p106
        %p445 = pneg %p103
        %p446 = pneg %p127
        %p447 = pneg %p124
        %p448 = pneg %p148
        %p449 = pneg %p145
        %p450 = pneg %p169
        %p451 = pneg %p166
        %p452 = pneg %p190
        %p453 = pneg %p187
        %p454 = pneg %p211
        %p455 = pneg %p208
        %p456 = pneg %p232
        %p457 = pneg %p229
        %p458 = pneg %p258
        %p459 = pneg %p255
        %s460 = sand.u32 %s245, 1
        %s461 = scalar_lea.sflag [#allocation8], %s460
        %s462 = sand.u32 %s245, 1
        %s463 = smul.addr %s462, 48
        %s464 = scalar_lea.vmem [#allocation22], %s463
        %p465 = scmp.eq.s32.totalorder %s35, 0
        // Predicated region
        $region93: #{residual_block_forward.1} parent=55 // pred_check
          %p466 = pneg %p465
        $region94: #{residual_block_forward.1} parent=55 // pred_check_branch
          %468 = sbr.rel (%p466) target = $region96
        $region95: #{residual_block_forward.1} parent=55 // pred_region
          %p469 = scmp.eq.s32.totalorder %s36, 0
          // Predicated region
          $region97: #{residual_block_forward.1} parent=95 // pred_check
            %p470 = pneg %p469
          $region98: #{residual_block_forward.1} parent=95 // pred_check_branch
            %472 = sbr.rel (%p470) target = $region100
          $region99: #{residual_block_forward.1} parent=95 // pred_region
            %s473 = scalar_lea.smem [#allocation4], 0
            %474 = sst [smem:[%s473]] 0.0
            %s475 = scalar_lea.smem [#allocation5], 0
            %476 = sst [smem:[%s475]] 0.0
            %s477 = scalar_lea.smem [#allocation4], 1
            %478 = sst [smem:[%s477]] 0.0
            %s479 = scalar_lea.smem [#allocation5], 1
            %480 = sst [smem:[%s479]] 0.0
            %s481 = scalar_lea.smem [#allocation4], 2
            %482 = sst [smem:[%s481]] 0.0
            %s483 = scalar_lea.smem [#allocation5], 2
            %484 = sst [smem:[%s483]] 0.0
            %s485 = scalar_lea.smem [#allocation4], 128
            %486 = sst [smem:[%s485]] 0.0
            %s487 = scalar_lea.smem [#allocation5], 128
            %488 = sst [smem:[%s487]] 0.0
            %s489 = scalar_lea.smem [#allocation4], 129
            %490 = sst [smem:[%s489]] 0.0
            %s491 = scalar_lea.smem [#allocation5], 129
            %492 = sst [smem:[%s491]] 0.0
            %s493 = scalar_lea.smem [#allocation4], 130
            %494 = sst [smem:[%s493]] 0.0
            %s495 = scalar_lea.smem [#allocation5], 130
            %496 = sst [smem:[%s495]] 0.0
          $region100: #{residual_block_forward.1} parent=95 // pred_fallthru
            _
          %v497 = vld [vmem:[%s397] sm:$0xff]
          %v498 = vld [vmem:[%s397 + $0x8] sm:$0xff]
          %v499 = vld [vmem:[%s397 + $0x10] sm:$0xff]
          %v500 = vld [vmem:[%s397 + $0x18] sm:$0xff]
          %v501 = vld [vmem:[%s397 + $0x20] sm:$0xff]
          %v502 = vld [vmem:[%s397 + $0x28] sm:$0xff]
          %v506 = vrot.slane %v497, 1
          %v507 = vrot.slane %v499, 1
          %v508 = vrot.slane %v501, 1
          %vm515 = vcmask 1040384
          %v516 = vrot.slane %v497, 7
          %v517 = vrot.slane %v498, 7
          %v518 = vsel %vm515, %v516, %v517
          %v519 = vrot.slane %v499, 7
          %v520 = vrot.slane %v500, 7
          %v521 = vsel %vm515, %v519, %v520
          %v522 = vrot.slane %v501, 7
          %v523 = vrot.slane %v502, 7
          %v524 = vsel %vm515, %v522, %v523
          %v531 = vrot.slane %v498, 5
          %v532 = vrot.slane %v500, 5
          %v533 = vrot.slane %v502, 5
          %v537 = vsel %vm515, %v506, %v516
          %v538 = vsel %vm515, %v507, %v519
          %v539 = vsel %vm515, %v508, %v522
          %v540 = vsel %vm515, %v517, %v531
          %v541 = vsel %vm515, %v520, %v532
          %v542 = vsel %vm515, %v523, %v533
          %549 = vrot.lane.b32.xlu0 %v537, 127
          %v550 = vpop.permute.xlu0 %549
          %551 = vrot.lane.b32.xlu0 %v518, 127
          %v552 = vpop.permute.xlu0 %551
          %553 = vrot.lane.b32.xlu0 %v540, 127
          %v554 = vpop.permute.xlu0 %553
          %555 = vrot.lane.b32.xlu0 %v538, 127
          %v556 = vpop.permute.xlu0 %555
          %557 = vrot.lane.b32.xlu0 %v521, 127
          %v558 = vpop.permute.xlu0 %557
          %559 = vrot.lane.b32.xlu0 %v541, 127
          %v560 = vpop.permute.xlu0 %559
          %561 = vrot.lane.b32.xlu0 %v539, 127
          %v562 = vpop.permute.xlu0 %561
          %563 = vrot.lane.b32.xlu0 %v524, 127
          %v564 = vpop.permute.xlu0 %563
          %565 = vrot.lane.b32.xlu0 %v542, 127
          %v566 = vpop.permute.xlu0 %565
          %576 = vrot.lane.b32.xlu0 %v537, 1
          %v577 = vpop.permute.xlu0 %576
          %578 = vrot.lane.b32.xlu0 %v518, 1
          %v579 = vpop.permute.xlu0 %578
          %580 = vrot.lane.b32.xlu0 %v540, 1
          %v581 = vpop.permute.xlu0 %580
          %582 = vrot.lane.b32.xlu0 %v538, 1
          %v583 = vpop.permute.xlu0 %582
          %584 = vrot.lane.b32.xlu0 %v521, 1
          %v585 = vpop.permute.xlu0 %584
          %586 = vrot.lane.b32.xlu0 %v541, 1
          %v587 = vpop.permute.xlu0 %586
          %588 = vrot.lane.b32.xlu0 %v539, 1
          %v589 = vpop.permute.xlu0 %588
          %590 = vrot.lane.b32.xlu0 %v524, 1
          %v591 = vpop.permute.xlu0 %590
          %592 = vrot.lane.b32.xlu0 %v542, 1
          %v593 = vpop.permute.xlu0 %592
          %603 = vrot.lane.b32.xlu0 %v537, 3
          %v604 = vpop.permute.xlu0 %603
          %605 = vrot.lane.b32.xlu0 %v518, 3
          %v606 = vpop.permute.xlu0 %605
          %607 = vrot.lane.b32.xlu0 %v540, 3
          %v608 = vpop.permute.xlu0 %607
          %609 = vrot.lane.b32.xlu0 %v538, 3
          %v610 = vpop.permute.xlu0 %609
          %611 = vrot.lane.b32.xlu0 %v521, 3
          %v612 = vpop.permute.xlu0 %611
          %613 = vrot.lane.b32.xlu0 %v541, 3
          %v614 = vpop.permute.xlu0 %613
          %615 = vrot.lane.b32.xlu0 %v539, 3
          %v616 = vpop.permute.xlu0 %615
          %617 = vrot.lane.b32.xlu0 %v524, 3
          %v618 = vpop.permute.xlu0 %617
          %619 = vrot.lane.b32.xlu0 %v542, 3
          %v620 = vpop.permute.xlu0 %619
          %vm630 = vcmask 7168
          %v631 = vsel %vm630, %v550, %v577
          %v632 = vsel %vm630, %v552, %v579
          %v633 = vsel %vm630, %v554, %v581
          %v634 = vsel %vm630, %v556, %v583
          %v635 = vsel %vm630, %v558, %v585
          %v636 = vsel %vm630, %v560, %v587
          %v637 = vsel %vm630, %v562, %v589
          %v638 = vsel %vm630, %v564, %v591
          %v639 = vsel %vm630, %v566, %v593
          %vm640 = vcmask 138240
          %v641 = vsel %vm640, %v631, %v604
          %v642 = vsel %vm640, %v632, %v606
          %v643 = vsel %vm640, %v633, %v608
          %v644 = vsel %vm640, %v634, %v610
          %v645 = vsel %vm640, %v635, %v612
          %v646 = vsel %vm640, %v636, %v614
          %v647 = vsel %vm640, %v637, %v616
          %v648 = vsel %vm640, %v638, %v618
          %v649 = vsel %vm640, %v639, %v620
          %s650 = sld [smem:[#allocation11]]
          %v651 = vstv %s650
          %v652 = vadd.f32 %v651, 0.0
          %s653 = sld [smem:[#allocation10]]
          %v654 = vstv %s653
          %v655 = vmul.f32 %v654, %v641
          %v656 = vmul.f32 %v654, %v642
          %v657 = vadd.f32 %v652, %v655
          %v658 = vadd.f32 %v652, %v656
          %s659 = sld [smem:[#allocation10 + $0x1]]
          %v660 = vstv %s659
          %v661 = vmul.f32 %v660, %v641
          %v662 = vmul.f32 %v660, %v642
          %665 = vrot.lane.b32.xlu0 %v661, 127
          %v666 = vpop.permute.xlu0 %665
          %667 = vrot.lane.b32.xlu0 %v662, 127
          %v668 = vpop.permute.xlu0 %667
          %v671 = vadd.f32 %v657, %v666
          %v672 = vadd.f32 %v658, %v668
          %s673 = sld [smem:[#allocation10 + $0x2]]
          %v674 = vstv %s673
          %v675 = vmul.f32 %v674, %v641
          %v676 = vmul.f32 %v674, %v642
          %679 = vrot.lane.b32.xlu0 %v675, 126
          %v680 = vpop.permute.xlu0 %679
          %681 = vrot.lane.b32.xlu0 %v676, 126
          %v682 = vpop.permute.xlu0 %681
          %v685 = vadd.f32 %v671, %v680
          %v686 = vadd.f32 %v672, %v682
          %s687 = sld [smem:[#allocation10 + $0x3]]
          %v688 = vstv %s687
          %v689 = vmul.f32 %v688, %v641
          %v690 = vmul.f32 %v688, %v642
          %v691 = vmul.f32 %v688, %v643
          %vm695 = vcmask 1046528
          %v696 = vrot.slane %v689, 1
          %v697 = vrot.slane %v690, 1
          %v698 = vsel %vm695, %v696, %v697
          %v699 = vrot.slane %v691, 1
          %v700 = vsel %vm695, %v697, %v699
          %v703 = vadd.f32 %v685, %v698
          %v704 = vadd.f32 %v686, %v700
          %s705 = sld [smem:[#allocation10 + $0x4]]
          %v706 = vstv %s705
          %v707 = vmul.f32 %v706, %v641
          %v708 = vmul.f32 %v706, %v642
          %v709 = vmul.f32 %v706, %v643
          %v713 = vrot.slane %v707, 1
          %v714 = vrot.slane %v708, 1
          %v715 = vsel %vm695, %v713, %v714
          %v716 = vrot.slane %v709, 1
          %v717 = vsel %vm695, %v714, %v716
          %718 = vrot.lane.b32.xlu0 %v715, 127
          %v719 = vpop.permute.xlu0 %718
          %720 = vrot.lane.b32.xlu0 %v717, 127
          %v721 = vpop.permute.xlu0 %720
          %v724 = vadd.f32 %v703, %v719
          %v725 = vadd.f32 %v704, %v721
          %s726 = sld [smem:[#allocation10 + $0x5]]
          %v727 = vstv %s726
          %v728 = vmul.f32 %v727, %v641
          %v729 = vmul.f32 %v727, %v642
          %v730 = vmul.f32 %v727, %v643
          %v734 = vrot.slane %v728, 1
          %v735 = vrot.slane %v729, 1
          %v736 = vsel %vm695, %v734, %v735
          %v737 = vrot.slane %v730, 1
          %v738 = vsel %vm695, %v735, %v737
          %739 = vrot.lane.b32.xlu0 %v736, 126
          %v740 = vpop.permute.xlu0 %739
          %741 = vrot.lane.b32.xlu0 %v738, 126
          %v742 = vpop.permute.xlu0 %741
          %v745 = vadd.f32 %v724, %v740
          %v746 = vadd.f32 %v725, %v742
          %s747 = sld [smem:[#allocation10 + $0x6]]
          %v748 = vstv %s747
          %v749 = vmul.f32 %v748, %v641
          %v750 = vmul.f32 %v748, %v642
          %v751 = vmul.f32 %v748, %v643
          %vm755 = vcmask 1045504
          %v756 = vrot.slane %v749, 2
          %v757 = vrot.slane %v750, 2
          %v758 = vsel %vm755, %v756, %v757
          %v759 = vrot.slane %v751, 2
          %v760 = vsel %vm755, %v757, %v759
          %v763 = vadd.f32 %v745, %v758
          %v764 = vadd.f32 %v746, %v760
          %s765 = sld [smem:[#allocation10 + $0x7]]
          %v766 = vstv %s765
          %v767 = vmul.f32 %v766, %v641
          %v768 = vmul.f32 %v766, %v642
          %v769 = vmul.f32 %v766, %v643
          %v773 = vrot.slane %v767, 2
          %v774 = vrot.slane %v768, 2
          %v775 = vsel %vm755, %v773, %v774
          %v776 = vrot.slane %v769, 2
          %v777 = vsel %vm755, %v774, %v776
          %778 = vrot.lane.b32.xlu0 %v775, 127
          %v779 = vpop.permute.xlu0 %778
          %780 = vrot.lane.b32.xlu0 %v777, 127
          %v781 = vpop.permute.xlu0 %780
          %v784 = vadd.f32 %v763, %v779
          %v785 = vadd.f32 %v764, %v781
          %s786 = sld [smem:[#allocation10 + $0x8]]
          %v787 = vstv %s786
          %v788 = vmul.f32 %v787, %v641
          %v789 = vmul.f32 %v787, %v642
          %v790 = vmul.f32 %v787, %v643
          %v794 = vrot.slane %v788, 2
          %v795 = vrot.slane %v789, 2
          %v796 = vsel %vm755, %v794, %v795
          %v797 = vrot.slane %v790, 2
          %v798 = vsel %vm755, %v795, %v797
          %799 = vrot.lane.b32.xlu0 %v796, 126
          %v800 = vpop.permute.xlu0 %799
          %801 = vrot.lane.b32.xlu0 %v798, 126
          %v802 = vpop.permute.xlu0 %801
          %v805 = vadd.f32 %v784, %v800
          %v806 = vadd.f32 %v785, %v802
          %s807 = sld [smem:[#allocation10 + $0x9]]
          %v808 = vstv %s807
          %v809 = vmul.f32 %v808, %v644
          %v810 = vmul.f32 %v808, %v645
          %v811 = vadd.f32 %v805, %v809
          %v812 = vadd.f32 %v806, %v810
          %s813 = sld [smem:[#allocation10 + $0xa]]
          %v814 = vstv %s813
          %v815 = vmul.f32 %v814, %v644
          %v816 = vmul.f32 %v814, %v645
          %819 = vrot.lane.b32.xlu0 %v815, 127
          %v820 = vpop.permute.xlu0 %819
          %821 = vrot.lane.b32.xlu0 %v816, 127
          %v822 = vpop.permute.xlu0 %821
          %v825 = vadd.f32 %v811, %v820
          %v826 = vadd.f32 %v812, %v822
          %s827 = sld [smem:[#allocation10 + $0xb]]
          %v828 = vstv %s827
          %v829 = vmul.f32 %v828, %v644
          %v830 = vmul.f32 %v828, %v645
          %833 = vrot.lane.b32.xlu0 %v829, 126
          %v834 = vpop.permute.xlu0 %833
          %835 = vrot.lane.b32.xlu0 %v830, 126
          %v836 = vpop.permute.xlu0 %835
          %v839 = vadd.f32 %v825, %v834
          %v840 = vadd.f32 %v826, %v836
          %s841 = sld [smem:[#allocation10 + $0xc]]
          %v842 = vstv %s841
          %v843 = vmul.f32 %v842, %v644
          %v844 = vmul.f32 %v842, %v645
          %v845 = vmul.f32 %v842, %v646
          %v849 = vrot.slane %v843, 1
          %v850 = vrot.slane %v844, 1
          %v851 = vsel %vm695, %v849, %v850
          %v852 = vrot.slane %v845, 1
          %v853 = vsel %vm695, %v850, %v852
          %v856 = vadd.f32 %v839, %v851
          %v857 = vadd.f32 %v840, %v853
          %s858 = sld [smem:[#allocation10 + $0xd]]
          %v859 = vstv %s858
          %v860 = vmul.f32 %v859, %v644
          %v861 = vmul.f32 %v859, %v645
          %v862 = vmul.f32 %v859, %v646
          %v866 = vrot.slane %v860, 1
          %v867 = vrot.slane %v861, 1
          %v868 = vsel %vm695, %v866, %v867
          %v869 = vrot.slane %v862, 1
          %v870 = vsel %vm695, %v867, %v869
          %871 = vrot.lane.b32.xlu0 %v868, 127
          %v872 = vpop.permute.xlu0 %871
          %873 = vrot.lane.b32.xlu0 %v870, 127
          %v874 = vpop.permute.xlu0 %873
          %v877 = vadd.f32 %v856, %v872
          %v878 = vadd.f32 %v857, %v874
          %s879 = sld [smem:[#allocation10 + $0xe]]
          %v880 = vstv %s879
          %v881 = vmul.f32 %v880, %v644
          %v882 = vmul.f32 %v880, %v645
          %v883 = vmul.f32 %v880, %v646
          %v887 = vrot.slane %v881, 1
          %v888 = vrot.slane %v882, 1
          %v889 = vsel %vm695, %v887, %v888
          %v890 = vrot.slane %v883, 1
          %v891 = vsel %vm695, %v888, %v890
          %892 = vrot.lane.b32.xlu0 %v889, 126
          %v893 = vpop.permute.xlu0 %892
          %894 = vrot.lane.b32.xlu0 %v891, 126
          %v895 = vpop.permute.xlu0 %894
          %v898 = vadd.f32 %v877, %v893
          %v899 = vadd.f32 %v878, %v895
          %s900 = sld [smem:[#allocation10 + $0xf]]
          %v901 = vstv %s900
          %v902 = vmul.f32 %v901, %v644
          %v903 = vmul.f32 %v901, %v645
          %v904 = vmul.f32 %v901, %v646
          %v908 = vrot.slane %v902, 2
          %v909 = vrot.slane %v903, 2
          %v910 = vsel %vm755, %v908, %v909
          %v911 = vrot.slane %v904, 2
          %v912 = vsel %vm755, %v909, %v911
          %v915 = vadd.f32 %v898, %v910
          %v916 = vadd.f32 %v899, %v912
          %s917 = sld [smem:[#allocation10 + $0x10]]
          %v918 = vstv %s917
          %v919 = vmul.f32 %v918, %v644
          %v920 = vmul.f32 %v918, %v645
          %v921 = vmul.f32 %v918, %v646
          %v925 = vrot.slane %v919, 2
          %v926 = vrot.slane %v920, 2
          %v927 = vsel %vm755, %v925, %v926
          %v928 = vrot.slane %v921, 2
          %v929 = vsel %vm755, %v926, %v928
          %930 = vrot.lane.b32.xlu0 %v927, 127
          %v931 = vpop.permute.xlu0 %930
          %932 = vrot.lane.b32.xlu0 %v929, 127
          %v933 = vpop.permute.xlu0 %932
          %v936 = vadd.f32 %v915, %v931
          %v937 = vadd.f32 %v916, %v933
          %s938 = sld [smem:[#allocation10 + $0x11]]
          %v939 = vstv %s938
          %v940 = vmul.f32 %v939, %v644
          %v941 = vmul.f32 %v939, %v645
          %v942 = vmul.f32 %v939, %v646
          %v946 = vrot.slane %v940, 2
          %v947 = vrot.slane %v941, 2
          %v948 = vsel %vm755, %v946, %v947
          %v949 = vrot.slane %v942, 2
          %v950 = vsel %vm755, %v947, %v949
          %951 = vrot.lane.b32.xlu0 %v948, 126
          %v952 = vpop.permute.xlu0 %951
          %953 = vrot.lane.b32.xlu0 %v950, 126
          %v954 = vpop.permute.xlu0 %953
          %v957 = vadd.f32 %v936, %v952
          %v958 = vadd.f32 %v937, %v954
          %s959 = sld [smem:[#allocation10 + $0x12]]
          %v960 = vstv %s959
          %v961 = vmul.f32 %v960, %v647
          %v962 = vmul.f32 %v960, %v648
          %v963 = vadd.f32 %v957, %v961
          %v964 = vadd.f32 %v958, %v962
          %s965 = sld [smem:[#allocation10 + $0x13]]
          %v966 = vstv %s965
          %v967 = vmul.f32 %v966, %v647
          %v968 = vmul.f32 %v966, %v648
          %971 = vrot.lane.b32.xlu0 %v967, 127
          %v972 = vpop.permute.xlu0 %971
          %973 = vrot.lane.b32.xlu0 %v968, 127
          %v974 = vpop.permute.xlu0 %973
          %v977 = vadd.f32 %v963, %v972
          %v978 = vadd.f32 %v964, %v974
          %s979 = sld [smem:[#allocation10 + $0x14]]
          %v980 = vstv %s979
          %v981 = vmul.f32 %v980, %v647
          %v982 = vmul.f32 %v980, %v648
          %985 = vrot.lane.b32.xlu0 %v981, 126
          %v986 = vpop.permute.xlu0 %985
          %987 = vrot.lane.b32.xlu0 %v982, 126
          %v988 = vpop.permute.xlu0 %987
          %v991 = vadd.f32 %v977, %v986
          %v992 = vadd.f32 %v978, %v988
          %s993 = sld [smem:[#allocation10 + $0x15]]
          %v994 = vstv %s993
          %v995 = vmul.f32 %v994, %v647
          %v996 = vmul.f32 %v994, %v648
          %v997 = vmul.f32 %v994, %v649
          %v1001 = vrot.slane %v995, 1
          %v1002 = vrot.slane %v996, 1
          %v1003 = vsel %vm695, %v1001, %v1002
          %v1004 = vrot.slane %v997, 1
          %v1005 = vsel %vm695, %v1002, %v1004
          %v1008 = vadd.f32 %v991, %v1003
          %v1009 = vadd.f32 %v992, %v1005
          %s1010 = sld [smem:[#allocation10 + $0x16]]
          %v1011 = vstv %s1010
          %v1012 = vmul.f32 %v1011, %v647
          %v1013 = vmul.f32 %v1011, %v648
          %v1014 = vmul.f32 %v1011, %v649
          %v1018 = vrot.slane %v1012, 1
          %v1019 = vrot.slane %v1013, 1
          %v1020 = vsel %vm695, %v1018, %v1019
          %v1021 = vrot.slane %v1014, 1
          %v1022 = vsel %vm695, %v1019, %v1021
          %1023 = vrot.lane.b32.xlu0 %v1020, 127
          %v1024 = vpop.permute.xlu0 %1023
          %1025 = vrot.lane.b32.xlu0 %v1022, 127
          %v1026 = vpop.permute.xlu0 %1025
          %v1029 = vadd.f32 %v1008, %v1024
          %v1030 = vadd.f32 %v1009, %v1026
          %s1031 = sld [smem:[#allocation10 + $0x17]]
          %v1032 = vstv %s1031
          %v1033 = vmul.f32 %v1032, %v647
          %v1034 = vmul.f32 %v1032, %v648
          %v1035 = vmul.f32 %v1032, %v649
          %v1039 = vrot.slane %v1033, 1
          %v1040 = vrot.slane %v1034, 1
          %v1041 = vsel %vm695, %v1039, %v1040
          %v1042 = vrot.slane %v1035, 1
          %v1043 = vsel %vm695, %v1040, %v1042
          %1044 = vrot.lane.b32.xlu0 %v1041, 126
          %v1045 = vpop.permute.xlu0 %1044
          %1046 = vrot.lane.b32.xlu0 %v1043, 126
          %v1047 = vpop.permute.xlu0 %1046
          %v1050 = vadd.f32 %v1029, %v1045
          %v1051 = vadd.f32 %v1030, %v1047
          %s1052 = sld [smem:[#allocation10 + $0x18]]
          %v1053 = vstv %s1052
          %v1054 = vmul.f32 %v1053, %v647
          %v1055 = vmul.f32 %v1053, %v648
          %v1056 = vmul.f32 %v1053, %v649
          %v1060 = vrot.slane %v1054, 2
          %v1061 = vrot.slane %v1055, 2
          %v1062 = vsel %vm755, %v1060, %v1061
          %v1063 = vrot.slane %v1056, 2
          %v1064 = vsel %vm755, %v1061, %v1063
          %v1067 = vadd.f32 %v1050, %v1062
          %v1068 = vadd.f32 %v1051, %v1064
          %s1069 = sld [smem:[#allocation10 + $0x19]]
          %v1070 = vstv %s1069
          %v1071 = vmul.f32 %v1070, %v647
          %v1072 = vmul.f32 %v1070, %v648
          %v1073 = vmul.f32 %v1070, %v649
          %v1077 = vrot.slane %v1071, 2
          %v1078 = vrot.slane %v1072, 2
          %v1079 = vsel %vm755, %v1077, %v1078
          %v1080 = vrot.slane %v1073, 2
          %v1081 = vsel %vm755, %v1078, %v1080
          %1082 = vrot.lane.b32.xlu0 %v1079, 127
          %v1083 = vpop.permute.xlu0 %1082
          %1084 = vrot.lane.b32.xlu0 %v1081, 127
          %v1085 = vpop.permute.xlu0 %1084
          %v1088 = vadd.f32 %v1067, %v1083
          %v1089 = vadd.f32 %v1068, %v1085
          %s1090 = sld [smem:[#allocation10 + $0x1a]]
          %v1091 = vstv %s1090
          %v1092 = vmul.f32 %v1091, %v647
          %v1093 = vmul.f32 %v1091, %v648
          %v1094 = vmul.f32 %v1091, %v649
          %v1098 = vrot.slane %v1092, 2
          %v1099 = vrot.slane %v1093, 2
          %v1100 = vsel %vm755, %v1098, %v1099
          %v1101 = vrot.slane %v1094, 2
          %v1102 = vsel %vm755, %v1099, %v1101
          %1103 = vrot.lane.b32.xlu0 %v1100, 126
          %v1104 = vpop.permute.xlu0 %1103
          %1105 = vrot.lane.b32.xlu0 %v1102, 126
          %v1106 = vpop.permute.xlu0 %1105
          %v1109 = vadd.f32 %v1088, %v1104
          %v1110 = vadd.f32 %v1089, %v1106
          %s1111 = sld [smem:[#allocation11 + $0x1]]
          %v1112 = vstv %s1111
          %v1113 = vadd.f32 %v1112, 0.0
          %s1114 = sld [smem:[#allocation10 + $0x1b]]
          %v1115 = vstv %s1114
          %v1116 = vmul.f32 %v1115, %v641
          %v1117 = vmul.f32 %v1115, %v642
          %v1118 = vadd.f32 %v1113, %v1116
          %v1119 = vadd.f32 %v1113, %v1117
          %s1120 = sld [smem:[#allocation10 + $0x1c]]
          %v1121 = vstv %s1120
          %v1122 = vmul.f32 %v1121, %v641
          %v1123 = vmul.f32 %v1121, %v642
          %1126 = vrot.lane.b32.xlu0 %v1122, 127
          %v1127 = vpop.permute.xlu0 %1126
          %1128 = vrot.lane.b32.xlu0 %v1123, 127
          %v1129 = vpop.permute.xlu0 %1128
          %v1132 = vadd.f32 %v1118, %v1127
          %v1133 = vadd.f32 %v1119, %v1129
          %s1134 = sld [smem:[#allocation10 + $0x1d]]
          %v1135 = vstv %s1134
          %v1136 = vmul.f32 %v1135, %v641
          %v1137 = vmul.f32 %v1135, %v642
          %1140 = vrot.lane.b32.xlu0 %v1136, 126
          %v1141 = vpop.permute.xlu0 %1140
          %1142 = vrot.lane.b32.xlu0 %v1137, 126
          %v1143 = vpop.permute.xlu0 %1142
          %v1146 = vadd.f32 %v1132, %v1141
          %v1147 = vadd.f32 %v1133, %v1143
          %s1148 = sld [smem:[#allocation10 + $0x1e]]
          %v1149 = vstv %s1148
          %v1150 = vmul.f32 %v1149, %v641
          %v1151 = vmul.f32 %v1149, %v642
          %v1152 = vmul.f32 %v1149, %v643
          %v1156 = vrot.slane %v1150, 1
          %v1157 = vrot.slane %v1151, 1
          %v1158 = vsel %vm695, %v1156, %v1157
          %v1159 = vrot.slane %v1152, 1
          %v1160 = vsel %vm695, %v1157, %v1159
          %v1163 = vadd.f32 %v1146, %v1158
          %v1164 = vadd.f32 %v1147, %v1160
          %s1165 = sld [smem:[#allocation10 + $0x1f]]
          %v1166 = vstv %s1165
          %v1167 = vmul.f32 %v1166, %v641
          %v1168 = vmul.f32 %v1166, %v642
          %v1169 = vmul.f32 %v1166, %v643
          %v1173 = vrot.slane %v1167, 1
          %v1174 = vrot.slane %v1168, 1
          %v1175 = vsel %vm695, %v1173, %v1174
          %v1176 = vrot.slane %v1169, 1
          %v1177 = vsel %vm695, %v1174, %v1176
          %1178 = vrot.lane.b32.xlu0 %v1175, 127
          %v1179 = vpop.permute.xlu0 %1178
          %1180 = vrot.lane.b32.xlu0 %v1177, 127
          %v1181 = vpop.permute.xlu0 %1180
          %v1184 = vadd.f32 %v1163, %v1179
          %v1185 = vadd.f32 %v1164, %v1181
          %s1186 = sld [smem:[#allocation10 + $0x20]]
          %v1187 = vstv %s1186
          %v1188 = vmul.f32 %v1187, %v641
          %v1189 = vmul.f32 %v1187, %v642
          %v1190 = vmul.f32 %v1187, %v643
          %v1194 = vrot.slane %v1188, 1
          %v1195 = vrot.slane %v1189, 1
          %v1196 = vsel %vm695, %v1194, %v1195
          %v1197 = vrot.slane %v1190, 1
          %v1198 = vsel %vm695, %v1195, %v1197
          %1199 = vrot.lane.b32.xlu0 %v1196, 126
          %v1200 = vpop.permute.xlu0 %1199
          %1201 = vrot.lane.b32.xlu0 %v1198, 126
          %v1202 = vpop.permute.xlu0 %1201
          %v1205 = vadd.f32 %v1184, %v1200
          %v1206 = vadd.f32 %v1185, %v1202
          %s1207 = sld [smem:[#allocation10 + $0x21]]
          %v1208 = vstv %s1207
          %v1209 = vmul.f32 %v1208, %v641
          %v1210 = vmul.f32 %v1208, %v642
          %v1211 = vmul.f32 %v1208, %v643
          %v1215 = vrot.slane %v1209, 2
          %v1216 = vrot.slane %v1210, 2
          %v1217 = vsel %vm755, %v1215, %v1216
          %v1218 = vrot.slane %v1211, 2
          %v1219 = vsel %vm755, %v1216, %v1218
          %v1222 = vadd.f32 %v1205, %v1217
          %v1223 = vadd.f32 %v1206, %v1219
          %s1224 = sld [smem:[#allocation10 + $0x22]]
          %v1225 = vstv %s1224
          %v1226 = vmul.f32 %v1225, %v641
          %v1227 = vmul.f32 %v1225, %v642
          %v1228 = vmul.f32 %v1225, %v643
          %v1232 = vrot.slane %v1226, 2
          %v1233 = vrot.slane %v1227, 2
          %v1234 = vsel %vm755, %v1232, %v1233
          %v1235 = vrot.slane %v1228, 2
          %v1236 = vsel %vm755, %v1233, %v1235
          %1237 = vrot.lane.b32.xlu0 %v1234, 127
          %v1238 = vpop.permute.xlu0 %1237
          %1239 = vrot.lane.b32.xlu0 %v1236, 127
          %v1240 = vpop.permute.xlu0 %1239
          %v1243 = vadd.f32 %v1222, %v1238
          %v1244 = vadd.f32 %v1223, %v1240
          %s1245 = sld [smem:[#allocation10 + $0x23]]
          %v1246 = vstv %s1245
          %v1247 = vmul.f32 %v1246, %v641
          %v1248 = vmul.f32 %v1246, %v642
          %v1249 = vmul.f32 %v1246, %v643
          %v1253 = vrot.slane %v1247, 2
          %v1254 = vrot.slane %v1248, 2
          %v1255 = vsel %vm755, %v1253, %v1254
          %v1256 = vrot.slane %v1249, 2
          %v1257 = vsel %vm755, %v1254, %v1256
          %1258 = vrot.lane.b32.xlu0 %v1255, 126
          %v1259 = vpop.permute.xlu0 %1258
          %1260 = vrot.lane.b32.xlu0 %v1257, 126
          %v1261 = vpop.permute.xlu0 %1260
          %v1264 = vadd.f32 %v1243, %v1259
          %v1265 = vadd.f32 %v1244, %v1261
          %s1266 = sld [smem:[#allocation10 + $0x24]]
          %v1267 = vstv %s1266
          %v1268 = vmul.f32 %v1267, %v644
          %v1269 = vmul.f32 %v1267, %v645
          %v1270 = vadd.f32 %v1264, %v1268
          %v1271 = vadd.f32 %v1265, %v1269
          %s1272 = sld [smem:[#allocation10 + $0x25]]
          %v1273 = vstv %s1272
          %v1274 = vmul.f32 %v1273, %v644
          %v1275 = vmul.f32 %v1273, %v645
          %1278 = vrot.lane.b32.xlu0 %v1274, 127
          %v1279 = vpop.permute.xlu0 %1278
          %1280 = vrot.lane.b32.xlu0 %v1275, 127
          %v1281 = vpop.permute.xlu0 %1280
          %v1284 = vadd.f32 %v1270, %v1279
          %v1285 = vadd.f32 %v1271, %v1281
          %s1286 = sld [smem:[#allocation10 + $0x26]]
          %v1287 = vstv %s1286
          %v1288 = vmul.f32 %v1287, %v644
          %v1289 = vmul.f32 %v1287, %v645
          %1292 = vrot.lane.b32.xlu0 %v1288, 126
          %v1293 = vpop.permute.xlu0 %1292
          %1294 = vrot.lane.b32.xlu0 %v1289, 126
          %v1295 = vpop.permute.xlu0 %1294
          %v1298 = vadd.f32 %v1284, %v1293
          %v1299 = vadd.f32 %v1285, %v1295
          %s1300 = sld [smem:[#allocation10 + $0x27]]
          %v1301 = vstv %s1300
          %v1302 = vmul.f32 %v1301, %v644
          %v1303 = vmul.f32 %v1301, %v645
          %v1304 = vmul.f32 %v1301, %v646
          %v1308 = vrot.slane %v1302, 1
          %v1309 = vrot.slane %v1303, 1
          %v1310 = vsel %vm695, %v1308, %v1309
          %v1311 = vrot.slane %v1304, 1
          %v1312 = vsel %vm695, %v1309, %v1311
          %v1315 = vadd.f32 %v1298, %v1310
          %v1316 = vadd.f32 %v1299, %v1312
          %s1317 = sld [smem:[#allocation10 + $0x28]]
          %v1318 = vstv %s1317
          %v1319 = vmul.f32 %v1318, %v644
          %v1320 = vmul.f32 %v1318, %v645
          %v1321 = vmul.f32 %v1318, %v646
          %v1325 = vrot.slane %v1319, 1
          %v1326 = vrot.slane %v1320, 1
          %v1327 = vsel %vm695, %v1325, %v1326
          %v1328 = vrot.slane %v1321, 1
          %v1329 = vsel %vm695, %v1326, %v1328
          %1330 = vrot.lane.b32.xlu0 %v1327, 127
          %v1331 = vpop.permute.xlu0 %1330
          %1332 = vrot.lane.b32.xlu0 %v1329, 127
          %v1333 = vpop.permute.xlu0 %1332
          %v1336 = vadd.f32 %v1315, %v1331
          %v1337 = vadd.f32 %v1316, %v1333
          %s1338 = sld [smem:[#allocation10 + $0x29]]
          %v1339 = vstv %s1338
          %v1340 = vmul.f32 %v1339, %v644
          %v1341 = vmul.f32 %v1339, %v645
          %v1342 = vmul.f32 %v1339, %v646
          %v1346 = vrot.slane %v1340, 1
          %v1347 = vrot.slane %v1341, 1
          %v1348 = vsel %vm695, %v1346, %v1347
          %v1349 = vrot.slane %v1342, 1
          %v1350 = vsel %vm695, %v1347, %v1349
          %1351 = vrot.lane.b32.xlu0 %v1348, 126
          %v1352 = vpop.permute.xlu0 %1351
          %1353 = vrot.lane.b32.xlu0 %v1350, 126
          %v1354 = vpop.permute.xlu0 %1353
          %v1357 = vadd.f32 %v1336, %v1352
          %v1358 = vadd.f32 %v1337, %v1354
          %s1359 = sld [smem:[#allocation10 + $0x2a]]
          %v1360 = vstv %s1359
          %v1361 = vmul.f32 %v1360, %v644
          %v1362 = vmul.f32 %v1360, %v645
          %v1363 = vmul.f32 %v1360, %v646
          %v1367 = vrot.slane %v1361, 2
          %v1368 = vrot.slane %v1362, 2
          %v1369 = vsel %vm755, %v1367, %v1368
          %v1370 = vrot.slane %v1363, 2
          %v1371 = vsel %vm755, %v1368, %v1370
          %v1374 = vadd.f32 %v1357, %v1369
          %v1375 = vadd.f32 %v1358, %v1371
          %s1376 = sld [smem:[#allocation10 + $0x2b]]
          %v1377 = vstv %s1376
          %v1378 = vmul.f32 %v1377, %v644
          %v1379 = vmul.f32 %v1377, %v645
          %v1380 = vmul.f32 %v1377, %v646
          %v1384 = vrot.slane %v1378, 2
          %v1385 = vrot.slane %v1379, 2
          %v1386 = vsel %vm755, %v1384, %v1385
          %v1387 = vrot.slane %v1380, 2
          %v1388 = vsel %vm755, %v1385, %v1387
          %1389 = vrot.lane.b32.xlu0 %v1386, 127
          %v1390 = vpop.permute.xlu0 %1389
          %1391 = vrot.lane.b32.xlu0 %v1388, 127
          %v1392 = vpop.permute.xlu0 %1391
          %v1395 = vadd.f32 %v1374, %v1390
          %v1396 = vadd.f32 %v1375, %v1392
          %s1397 = sld [smem:[#allocation10 + $0x2c]]
          %v1398 = vstv %s1397
          %v1399 = vmul.f32 %v1398, %v644
          %v1400 = vmul.f32 %v1398, %v645
          %v1401 = vmul.f32 %v1398, %v646
          %v1405 = vrot.slane %v1399, 2
          %v1406 = vrot.slane %v1400, 2
          %v1407 = vsel %vm755, %v1405, %v1406
          %v1408 = vrot.slane %v1401, 2
          %v1409 = vsel %vm755, %v1406, %v1408
          %1410 = vrot.lane.b32.xlu0 %v1407, 126
          %v1411 = vpop.permute.xlu0 %1410
          %1412 = vrot.lane.b32.xlu0 %v1409, 126
          %v1413 = vpop.permute.xlu0 %1412
          %v1416 = vadd.f32 %v1395, %v1411
          %v1417 = vadd.f32 %v1396, %v1413
          %s1418 = sld [smem:[#allocation10 + $0x2d]]
          %v1419 = vstv %s1418
          %v1420 = vmul.f32 %v1419, %v647
          %v1421 = vmul.f32 %v1419, %v648
          %v1422 = vadd.f32 %v1416, %v1420
          %v1423 = vadd.f32 %v1417, %v1421
          %s1424 = sld [smem:[#allocation10 + $0x2e]]
          %v1425 = vstv %s1424
          %v1426 = vmul.f32 %v1425, %v647
          %v1427 = vmul.f32 %v1425, %v648
          %1430 = vrot.lane.b32.xlu0 %v1426, 127
          %v1431 = vpop.permute.xlu0 %1430
          %1432 = vrot.lane.b32.xlu0 %v1427, 127
          %v1433 = vpop.permute.xlu0 %1432
          %v1436 = vadd.f32 %v1422, %v1431
          %v1437 = vadd.f32 %v1423, %v1433
          %s1438 = sld [smem:[#allocation10 + $0x2f]]
          %v1439 = vstv %s1438
          %v1440 = vmul.f32 %v1439, %v647
          %v1441 = vmul.f32 %v1439, %v648
          %1444 = vrot.lane.b32.xlu0 %v1440, 126
          %v1445 = vpop.permute.xlu0 %1444
          %1446 = vrot.lane.b32.xlu0 %v1441, 126
          %v1447 = vpop.permute.xlu0 %1446
          %v1450 = vadd.f32 %v1436, %v1445
          %v1451 = vadd.f32 %v1437, %v1447
          %s1452 = sld [smem:[#allocation10 + $0x30]]
          %v1453 = vstv %s1452
          %v1454 = vmul.f32 %v1453, %v647
          %v1455 = vmul.f32 %v1453, %v648
          %v1456 = vmul.f32 %v1453, %v649
          %v1460 = vrot.slane %v1454, 1
          %v1461 = vrot.slane %v1455, 1
          %v1462 = vsel %vm695, %v1460, %v1461
          %v1463 = vrot.slane %v1456, 1
          %v1464 = vsel %vm695, %v1461, %v1463
          %v1467 = vadd.f32 %v1450, %v1462
          %v1468 = vadd.f32 %v1451, %v1464
          %s1469 = sld [smem:[#allocation10 + $0x31]]
          %v1470 = vstv %s1469
          %v1471 = vmul.f32 %v1470, %v647
          %v1472 = vmul.f32 %v1470, %v648
          %v1473 = vmul.f32 %v1470, %v649
          %v1477 = vrot.slane %v1471, 1
          %v1478 = vrot.slane %v1472, 1
          %v1479 = vsel %vm695, %v1477, %v1478
          %v1480 = vrot.slane %v1473, 1
          %v1481 = vsel %vm695, %v1478, %v1480
          %1482 = vrot.lane.b32.xlu0 %v1479, 127
          %v1483 = vpop.permute.xlu0 %1482
          %1484 = vrot.lane.b32.xlu0 %v1481, 127
          %v1485 = vpop.permute.xlu0 %1484
          %v1488 = vadd.f32 %v1467, %v1483
          %v1489 = vadd.f32 %v1468, %v1485
          %s1490 = sld [smem:[#allocation10 + $0x32]]
          %v1491 = vstv %s1490
          %v1492 = vmul.f32 %v1491, %v647
          %v1493 = vmul.f32 %v1491, %v648
          %v1494 = vmul.f32 %v1491, %v649
          %v1498 = vrot.slane %v1492, 1
          %v1499 = vrot.slane %v1493, 1
          %v1500 = vsel %vm695, %v1498, %v1499
          %v1501 = vrot.slane %v1494, 1
          %v1502 = vsel %vm695, %v1499, %v1501
          %1503 = vrot.lane.b32.xlu0 %v1500, 126
          %v1504 = vpop.permute.xlu0 %1503
          %1505 = vrot.lane.b32.xlu0 %v1502, 126
          %v1506 = vpop.permute.xlu0 %1505
          %v1509 = vadd.f32 %v1488, %v1504
          %v1510 = vadd.f32 %v1489, %v1506
          %s1511 = sld [smem:[#allocation10 + $0x33]]
          %v1512 = vstv %s1511
          %v1513 = vmul.f32 %v1512, %v647
          %v1514 = vmul.f32 %v1512, %v648
          %v1515 = vmul.f32 %v1512, %v649
          %v1519 = vrot.slane %v1513, 2
          %v1520 = vrot.slane %v1514, 2
          %v1521 = vsel %vm755, %v1519, %v1520
          %v1522 = vrot.slane %v1515, 2
          %v1523 = vsel %vm755, %v1520, %v1522
          %v1526 = vadd.f32 %v1509, %v1521
          %v1527 = vadd.f32 %v1510, %v1523
          %s1528 = sld [smem:[#allocation10 + $0x34]]
          %v1529 = vstv %s1528
          %v1530 = vmul.f32 %v1529, %v647
          %v1531 = vmul.f32 %v1529, %v648
          %v1532 = vmul.f32 %v1529, %v649
          %v1536 = vrot.slane %v1530, 2
          %v1537 = vrot.slane %v1531, 2
          %v1538 = vsel %vm755, %v1536, %v1537
          %v1539 = vrot.slane %v1532, 2
          %v1540 = vsel %vm755, %v1537, %v1539
          %1541 = vrot.lane.b32.xlu0 %v1538, 127
          %v1542 = vpop.permute.xlu0 %1541
          %1543 = vrot.lane.b32.xlu0 %v1540, 127
          %v1544 = vpop.permute.xlu0 %1543
          %v1547 = vadd.f32 %v1526, %v1542
          %v1548 = vadd.f32 %v1527, %v1544
          %s1549 = sld [smem:[#allocation10 + $0x35]]
          %v1550 = vstv %s1549
          %v1551 = vmul.f32 %v1550, %v647
          %v1552 = vmul.f32 %v1550, %v648
          %v1553 = vmul.f32 %v1550, %v649
          %v1557 = vrot.slane %v1551, 2
          %v1558 = vrot.slane %v1552, 2
          %v1559 = vsel %vm755, %v1557, %v1558
          %v1560 = vrot.slane %v1553, 2
          %v1561 = vsel %vm755, %v1558, %v1560
          %1562 = vrot.lane.b32.xlu0 %v1559, 126
          %v1563 = vpop.permute.xlu0 %1562
          %1564 = vrot.lane.b32.xlu0 %v1561, 126
          %v1565 = vpop.permute.xlu0 %1564
          %v1568 = vadd.f32 %v1547, %v1563
          %v1569 = vadd.f32 %v1548, %v1565
          %s1570 = sld [smem:[#allocation11 + $0x2]]
          %v1571 = vstv %s1570
          %v1572 = vadd.f32 %v1571, 0.0
          %s1573 = sld [smem:[#allocation10 + $0x36]]
          %v1574 = vstv %s1573
          %v1575 = vmul.f32 %v1574, %v641
          %v1576 = vmul.f32 %v1574, %v642
          %v1577 = vadd.f32 %v1572, %v1575
          %v1578 = vadd.f32 %v1572, %v1576
          %s1579 = sld [smem:[#allocation10 + $0x37]]
          %v1580 = vstv %s1579
          %v1581 = vmul.f32 %v1580, %v641
          %v1582 = vmul.f32 %v1580, %v642
          %1585 = vrot.lane.b32.xlu0 %v1581, 127
          %v1586 = vpop.permute.xlu0 %1585
          %1587 = vrot.lane.b32.xlu0 %v1582, 127
          %v1588 = vpop.permute.xlu0 %1587
          %v1591 = vadd.f32 %v1577, %v1586
          %v1592 = vadd.f32 %v1578, %v1588
          %s1593 = sld [smem:[#allocation10 + $0x38]]
          %v1594 = vstv %s1593
          %v1595 = vmul.f32 %v1594, %v641
          %v1596 = vmul.f32 %v1594, %v642
          %1599 = vrot.lane.b32.xlu0 %v1595, 126
          %v1600 = vpop.permute.xlu0 %1599
          %1601 = vrot.lane.b32.xlu0 %v1596, 126
          %v1602 = vpop.permute.xlu0 %1601
          %v1605 = vadd.f32 %v1591, %v1600
          %v1606 = vadd.f32 %v1592, %v1602
          %s1607 = sld [smem:[#allocation10 + $0x39]]
          %v1608 = vstv %s1607
          %v1609 = vmul.f32 %v1608, %v641
          %v1610 = vmul.f32 %v1608, %v642
          %v1611 = vmul.f32 %v1608, %v643
          %v1615 = vrot.slane %v1609, 1
          %v1616 = vrot.slane %v1610, 1
          %v1617 = vsel %vm695, %v1615, %v1616
          %v1618 = vrot.slane %v1611, 1
          %v1619 = vsel %vm695, %v1616, %v1618
          %v1622 = vadd.f32 %v1605, %v1617
          %v1623 = vadd.f32 %v1606, %v1619
          %s1624 = sld [smem:[#allocation10 + $0x3a]]
          %v1625 = vstv %s1624
          %v1626 = vmul.f32 %v1625, %v641
          %v1627 = vmul.f32 %v1625, %v642
          %v1628 = vmul.f32 %v1625, %v643
          %v1632 = vrot.slane %v1626, 1
          %v1633 = vrot.slane %v1627, 1
          %v1634 = vsel %vm695, %v1632, %v1633
          %v1635 = vrot.slane %v1628, 1
          %v1636 = vsel %vm695, %v1633, %v1635
          %1637 = vrot.lane.b32.xlu0 %v1634, 127
          %v1638 = vpop.permute.xlu0 %1637
          %1639 = vrot.lane.b32.xlu0 %v1636, 127
          %v1640 = vpop.permute.xlu0 %1639
          %v1643 = vadd.f32 %v1622, %v1638
          %v1644 = vadd.f32 %v1623, %v1640
          %s1645 = sld [smem:[#allocation10 + $0x3b]]
          %v1646 = vstv %s1645
          %v1647 = vmul.f32 %v1646, %v641
          %v1648 = vmul.f32 %v1646, %v642
          %v1649 = vmul.f32 %v1646, %v643
          %v1653 = vrot.slane %v1647, 1
          %v1654 = vrot.slane %v1648, 1
          %v1655 = vsel %vm695, %v1653, %v1654
          %v1656 = vrot.slane %v1649, 1
          %v1657 = vsel %vm695, %v1654, %v1656
          %1658 = vrot.lane.b32.xlu0 %v1655, 126
          %v1659 = vpop.permute.xlu0 %1658
          %1660 = vrot.lane.b32.xlu0 %v1657, 126
          %v1661 = vpop.permute.xlu0 %1660
          %v1664 = vadd.f32 %v1643, %v1659
          %v1665 = vadd.f32 %v1644, %v1661
          %s1666 = sld [smem:[#allocation10 + $0x3c]]
          %v1667 = vstv %s1666
          %v1668 = vmul.f32 %v1667, %v641
          %v1669 = vmul.f32 %v1667, %v642
          %v1670 = vmul.f32 %v1667, %v643
          %v1674 = vrot.slane %v1668, 2
          %v1675 = vrot.slane %v1669, 2
          %v1676 = vsel %vm755, %v1674, %v1675
          %v1677 = vrot.slane %v1670, 2
          %v1678 = vsel %vm755, %v1675, %v1677
          %v1681 = vadd.f32 %v1664, %v1676
          %v1682 = vadd.f32 %v1665, %v1678
          %s1683 = sld [smem:[#allocation10 + $0x3d]]
          %v1684 = vstv %s1683
          %v1685 = vmul.f32 %v1684, %v641
          %v1686 = vmul.f32 %v1684, %v642
          %v1687 = vmul.f32 %v1684, %v643
          %v1691 = vrot.slane %v1685, 2
          %v1692 = vrot.slane %v1686, 2
          %v1693 = vsel %vm755, %v1691, %v1692
          %v1694 = vrot.slane %v1687, 2
          %v1695 = vsel %vm755, %v1692, %v1694
          %1696 = vrot.lane.b32.xlu0 %v1693, 127
          %v1697 = vpop.permute.xlu0 %1696
          %1698 = vrot.lane.b32.xlu0 %v1695, 127
          %v1699 = vpop.permute.xlu0 %1698
          %v1702 = vadd.f32 %v1681, %v1697
          %v1703 = vadd.f32 %v1682, %v1699
          %s1704 = sld [smem:[#allocation10 + $0x3e]]
          %v1705 = vstv %s1704
          %v1706 = vmul.f32 %v1705, %v641
          %v1707 = vmul.f32 %v1705, %v642
          %v1708 = vmul.f32 %v1705, %v643
          %v1712 = vrot.slane %v1706, 2
          %v1713 = vrot.slane %v1707, 2
          %v1714 = vsel %vm755, %v1712, %v1713
          %v1715 = vrot.slane %v1708, 2
          %v1716 = vsel %vm755, %v1713, %v1715
          %1717 = vrot.lane.b32.xlu0 %v1714, 126
          %v1718 = vpop.permute.xlu0 %1717
          %1719 = vrot.lane.b32.xlu0 %v1716, 126
          %v1720 = vpop.permute.xlu0 %1719
          %v1723 = vadd.f32 %v1702, %v1718
          %v1724 = vadd.f32 %v1703, %v1720
          %s1725 = sld [smem:[#allocation10 + $0x3f]]
          %v1726 = vstv %s1725
          %v1727 = vmul.f32 %v1726, %v644
          %v1728 = vmul.f32 %v1726, %v645
          %v1729 = vadd.f32 %v1723, %v1727
          %v1730 = vadd.f32 %v1724, %v1728
          %s1731 = sld [smem:[#allocation10 + $0x40]]
          %v1732 = vstv %s1731
          %v1733 = vmul.f32 %v1732, %v644
          %v1734 = vmul.f32 %v1732, %v645
          %1737 = vrot.lane.b32.xlu0 %v1733, 127
          %v1738 = vpop.permute.xlu0 %1737
          %1739 = vrot.lane.b32.xlu0 %v1734, 127
          %v1740 = vpop.permute.xlu0 %1739
          %v1743 = vadd.f32 %v1729, %v1738
          %v1744 = vadd.f32 %v1730, %v1740
          %s1745 = sld [smem:[#allocation10 + $0x41]]
          %v1746 = vstv %s1745
          %v1747 = vmul.f32 %v1746, %v644
          %v1748 = vmul.f32 %v1746, %v645
          %1751 = vrot.lane.b32.xlu0 %v1747, 126
          %v1752 = vpop.permute.xlu0 %1751
          %1753 = vrot.lane.b32.xlu0 %v1748, 126
          %v1754 = vpop.permute.xlu0 %1753
          %v1757 = vadd.f32 %v1743, %v1752
          %v1758 = vadd.f32 %v1744, %v1754
          %s1759 = sld [smem:[#allocation10 + $0x42]]
          %v1760 = vstv %s1759
          %v1761 = vmul.f32 %v1760, %v644
          %v1762 = vmul.f32 %v1760, %v645
          %v1763 = vmul.f32 %v1760, %v646
          %v1767 = vrot.slane %v1761, 1
          %v1768 = vrot.slane %v1762, 1
          %v1769 = vsel %vm695, %v1767, %v1768
          %v1770 = vrot.slane %v1763, 1
          %v1771 = vsel %vm695, %v1768, %v1770
          %v1774 = vadd.f32 %v1757, %v1769
          %v1775 = vadd.f32 %v1758, %v1771
          %s1776 = sld [smem:[#allocation10 + $0x43]]
          %v1777 = vstv %s1776
          %v1778 = vmul.f32 %v1777, %v644
          %v1779 = vmul.f32 %v1777, %v645
          %v1780 = vmul.f32 %v1777, %v646
          %v1784 = vrot.slane %v1778, 1
          %v1785 = vrot.slane %v1779, 1
          %v1786 = vsel %vm695, %v1784, %v1785
          %v1787 = vrot.slane %v1780, 1
          %v1788 = vsel %vm695, %v1785, %v1787
          %1789 = vrot.lane.b32.xlu0 %v1786, 127
          %v1790 = vpop.permute.xlu0 %1789
          %1791 = vrot.lane.b32.xlu0 %v1788, 127
          %v1792 = vpop.permute.xlu0 %1791
          %v1795 = vadd.f32 %v1774, %v1790
          %v1796 = vadd.f32 %v1775, %v1792
          %s1797 = sld [smem:[#allocation10 + $0x44]]
          %v1798 = vstv %s1797
          %v1799 = vmul.f32 %v1798, %v644
          %v1800 = vmul.f32 %v1798, %v645
          %v1801 = vmul.f32 %v1798, %v646
          %v1805 = vrot.slane %v1799, 1
          %v1806 = vrot.slane %v1800, 1
          %v1807 = vsel %vm695, %v1805, %v1806
          %v1808 = vrot.slane %v1801, 1
          %v1809 = vsel %vm695, %v1806, %v1808
          %1810 = vrot.lane.b32.xlu0 %v1807, 126
          %v1811 = vpop.permute.xlu0 %1810
          %1812 = vrot.lane.b32.xlu0 %v1809, 126
          %v1813 = vpop.permute.xlu0 %1812
          %v1816 = vadd.f32 %v1795, %v1811
          %v1817 = vadd.f32 %v1796, %v1813
          %s1818 = sld [smem:[#allocation10 + $0x45]]
          %v1819 = vstv %s1818
          %v1820 = vmul.f32 %v1819, %v644
          %v1821 = vmul.f32 %v1819, %v645
          %v1822 = vmul.f32 %v1819, %v646
          %v1826 = vrot.slane %v1820, 2
          %v1827 = vrot.slane %v1821, 2
          %v1828 = vsel %vm755, %v1826, %v1827
          %v1829 = vrot.slane %v1822, 2
          %v1830 = vsel %vm755, %v1827, %v1829
          %v1833 = vadd.f32 %v1816, %v1828
          %v1834 = vadd.f32 %v1817, %v1830
          %s1835 = sld [smem:[#allocation10 + $0x46]]
          %v1836 = vstv %s1835
          %v1837 = vmul.f32 %v1836, %v644
          %v1838 = vmul.f32 %v1836, %v645
          %v1839 = vmul.f32 %v1836, %v646
          %v1843 = vrot.slane %v1837, 2
          %v1844 = vrot.slane %v1838, 2
          %v1845 = vsel %vm755, %v1843, %v1844
          %v1846 = vrot.slane %v1839, 2
          %v1847 = vsel %vm755, %v1844, %v1846
          %1848 = vrot.lane.b32.xlu0 %v1845, 127
          %v1849 = vpop.permute.xlu0 %1848
          %1850 = vrot.lane.b32.xlu0 %v1847, 127
          %v1851 = vpop.permute.xlu0 %1850
          %v1854 = vadd.f32 %v1833, %v1849
          %v1855 = vadd.f32 %v1834, %v1851
          %s1856 = sld [smem:[#allocation10 + $0x47]]
          %v1857 = vstv %s1856
          %v1858 = vmul.f32 %v1857, %v644
          %v1859 = vmul.f32 %v1857, %v645
          %v1860 = vmul.f32 %v1857, %v646
          %v1864 = vrot.slane %v1858, 2
          %v1865 = vrot.slane %v1859, 2
          %v1866 = vsel %vm755, %v1864, %v1865
          %v1867 = vrot.slane %v1860, 2
          %v1868 = vsel %vm755, %v1865, %v1867
          %1869 = vrot.lane.b32.xlu0 %v1866, 126
          %v1870 = vpop.permute.xlu0 %1869
          %1871 = vrot.lane.b32.xlu0 %v1868, 126
          %v1872 = vpop.permute.xlu0 %1871
          %v1875 = vadd.f32 %v1854, %v1870
          %v1876 = vadd.f32 %v1855, %v1872
          %s1877 = sld [smem:[#allocation10 + $0x48]]
          %v1878 = vstv %s1877
          %v1879 = vmul.f32 %v1878, %v647
          %v1880 = vmul.f32 %v1878, %v648
          %v1881 = vadd.f32 %v1875, %v1879
          %v1882 = vadd.f32 %v1876, %v1880
          %s1883 = sld [smem:[#allocation10 + $0x49]]
          %v1884 = vstv %s1883
          %v1885 = vmul.f32 %v1884, %v647
          %v1886 = vmul.f32 %v1884, %v648
          %1889 = vrot.lane.b32.xlu0 %v1885, 127
          %v1890 = vpop.permute.xlu0 %1889
          %1891 = vrot.lane.b32.xlu0 %v1886, 127
          %v1892 = vpop.permute.xlu0 %1891
          %v1895 = vadd.f32 %v1881, %v1890
          %v1896 = vadd.f32 %v1882, %v1892
          %s1897 = sld [smem:[#allocation10 + $0x4a]]
          %v1898 = vstv %s1897
          %v1899 = vmul.f32 %v1898, %v647
          %v1900 = vmul.f32 %v1898, %v648
          %1903 = vrot.lane.b32.xlu0 %v1899, 126
          %v1904 = vpop.permute.xlu0 %1903
          %1905 = vrot.lane.b32.xlu0 %v1900, 126
          %v1906 = vpop.permute.xlu0 %1905
          %v1909 = vadd.f32 %v1895, %v1904
          %v1910 = vadd.f32 %v1896, %v1906
          %s1911 = sld [smem:[#allocation10 + $0x4b]]
          %v1912 = vstv %s1911
          %v1913 = vmul.f32 %v1912, %v647
          %v1914 = vmul.f32 %v1912, %v648
          %v1915 = vmul.f32 %v1912, %v649
          %v1919 = vrot.slane %v1913, 1
          %v1920 = vrot.slane %v1914, 1
          %v1921 = vsel %vm695, %v1919, %v1920
          %v1922 = vrot.slane %v1915, 1
          %v1923 = vsel %vm695, %v1920, %v1922
          %v1926 = vadd.f32 %v1909, %v1921
          %v1927 = vadd.f32 %v1910, %v1923
          %s1928 = sld [smem:[#allocation10 + $0x4c]]
          %v1929 = vstv %s1928
          %v1930 = vmul.f32 %v1929, %v647
          %v1931 = vmul.f32 %v1929, %v648
          %v1932 = vmul.f32 %v1929, %v649
          %v1936 = vrot.slane %v1930, 1
          %v1937 = vrot.slane %v1931, 1
          %v1938 = vsel %vm695, %v1936, %v1937
          %v1939 = vrot.slane %v1932, 1
          %v1940 = vsel %vm695, %v1937, %v1939
          %1941 = vrot.lane.b32.xlu0 %v1938, 127
          %v1942 = vpop.permute.xlu0 %1941
          %1943 = vrot.lane.b32.xlu0 %v1940, 127
          %v1944 = vpop.permute.xlu0 %1943
          %v1947 = vadd.f32 %v1926, %v1942
          %v1948 = vadd.f32 %v1927, %v1944
          %s1949 = sld [smem:[#allocation10 + $0x4d]]
          %v1950 = vstv %s1949
          %v1951 = vmul.f32 %v1950, %v647
          %v1952 = vmul.f32 %v1950, %v648
          %v1953 = vmul.f32 %v1950, %v649
          %v1957 = vrot.slane %v1951, 1
          %v1958 = vrot.slane %v1952, 1
          %v1959 = vsel %vm695, %v1957, %v1958
          %v1960 = vrot.slane %v1953, 1
          %v1961 = vsel %vm695, %v1958, %v1960
          %1962 = vrot.lane.b32.xlu0 %v1959, 126
          %v1963 = vpop.permute.xlu0 %1962
          %1964 = vrot.lane.b32.xlu0 %v1961, 126
          %v1965 = vpop.permute.xlu0 %1964
          %v1968 = vadd.f32 %v1947, %v1963
          %v1969 = vadd.f32 %v1948, %v1965
          %s1970 = sld [smem:[#allocation10 + $0x4e]]
          %v1971 = vstv %s1970
          %v1972 = vmul.f32 %v1971, %v647
          %v1973 = vmul.f32 %v1971, %v648
          %v1974 = vmul.f32 %v1971, %v649
          %v1978 = vrot.slane %v1972, 2
          %v1979 = vrot.slane %v1973, 2
          %v1980 = vsel %vm755, %v1978, %v1979
          %v1981 = vrot.slane %v1974, 2
          %v1982 = vsel %vm755, %v1979, %v1981
          %v1985 = vadd.f32 %v1968, %v1980
          %v1986 = vadd.f32 %v1969, %v1982
          %s1987 = sld [smem:[#allocation10 + $0x4f]]
          %v1988 = vstv %s1987
          %v1989 = vmul.f32 %v1988, %v647
          %v1990 = vmul.f32 %v1988, %v648
          %v1991 = vmul.f32 %v1988, %v649
          %v1995 = vrot.slane %v1989, 2
          %v1996 = vrot.slane %v1990, 2
          %v1997 = vsel %vm755, %v1995, %v1996
          %v1998 = vrot.slane %v1991, 2
          %v1999 = vsel %vm755, %v1996, %v1998
          %2000 = vrot.lane.b32.xlu0 %v1997, 127
          %v2001 = vpop.permute.xlu0 %2000
          %2002 = vrot.lane.b32.xlu0 %v1999, 127
          %v2003 = vpop.permute.xlu0 %2002
          %v2006 = vadd.f32 %v1985, %v2001
          %v2007 = vadd.f32 %v1986, %v2003
          %s2008 = sld [smem:[#allocation10 + $0x50]]
          %v2009 = vstv %s2008
          %v2010 = vmul.f32 %v2009, %v647
          %v2011 = vmul.f32 %v2009, %v648
          %v2012 = vmul.f32 %v2009, %v649
          %v2016 = vrot.slane %v2010, 2
          %v2017 = vrot.slane %v2011, 2
          %v2018 = vsel %vm755, %v2016, %v2017
          %v2019 = vrot.slane %v2012, 2
          %v2020 = vsel %vm755, %v2017, %v2019
          %2021 = vrot.lane.b32.xlu0 %v2018, 126
          %v2022 = vpop.permute.xlu0 %2021
          %2023 = vrot.lane.b32.xlu0 %v2020, 126
          %v2024 = vpop.permute.xlu0 %2023
          %v2027 = vadd.f32 %v2006, %v2022
          %v2028 = vadd.f32 %v2007, %v2024
          %s2029 = smul.u32 %s36, 48
          %s2030 = scalar_lea.vmem [#allocation2], %s2029
          %vm2031 = vcmask 130048
          %2032 = vst.msk [vmem:[%s2030] sm:$0xff] %vm2031, %v1109
          %2033 = vst.msk [vmem:[%s2030 + $0x8] sm:$0xff] %vm2031, %v1110
          %2034 = vst.msk [vmem:[%s2030 + $0x10] sm:$0xff] %vm2031, %v1568
          %2035 = vst.msk [vmem:[%s2030 + $0x18] sm:$0xff] %vm2031, %v1569
          %2036 = vst.msk [vmem:[%s2030 + $0x20] sm:$0xff] %vm2031, %v2027
          %2037 = vst.msk [vmem:[%s2030 + $0x28] sm:$0xff] %vm2031, %v2028
          %s2038 = sld [smem:[#allocation4]]
          %v2039 = vsel %vm2031, %v1109, 0.0
          %v2040 = vsel %vm2031, %v1110, 0.0
          %v2041 = vadd.f32 %v2039, %v2040
          %2042 = vadd.xlane.f32.xlu0 %v2041
          %v2043 = vpop.xlane.xlu0 %2042
          %v2044 = vrot.slane %v2043, 4
          %v2045 = vadd.f32 %v2043, %v2044
          %v2046 = vrot.slane %v2045, 2
          %v2047 = vadd.f32 %v2045, %v2046
          %v2048 = vrot.slane %v2047, 1
          %v2049 = vadd.f32 %v2047, %v2048
          %s2050 = vtos %v2049
          %s2051 = sadd.f32 %s2038, %s2050
          %s2052 = scalar_lea.smem [#allocation4], 0
          %2053 = sst [smem:[%s2052]] %s2051
          %s2054 = sld [smem:[#allocation4 + $0x80]]
          %v2055 = vmul.f32 %v1109, %v1109
          %v2056 = vmul.f32 %v1110, %v1110
          %v2057 = vsel %vm2031, %v2055, 0.0
          %v2058 = vsel %vm2031, %v2056, 0.0
          %v2059 = vadd.f32 %v2057, %v2058
          %2060 = vadd.xlane.f32.xlu0 %v2059
          %v2061 = vpop.xlane.xlu0 %2060
          %v2062 = vrot.slane %v2061, 4
          %v2063 = vadd.f32 %v2061, %v2062
          %v2064 = vrot.slane %v2063, 2
          %v2065 = vadd.f32 %v2063, %v2064
          %v2066 = vrot.slane %v2065, 1
          %v2067 = vadd.f32 %v2065, %v2066
          %s2068 = vtos %v2067
          %s2069 = sadd.f32 %s2054, %s2068
          %s2070 = scalar_lea.smem [#allocation4], 128
          %2071 = sst [smem:[%s2070]] %s2069
          %s2072 = sld [smem:[#allocation4 + $0x1]]
          %v2073 = vsel %vm2031, %v1568, 0.0
          %v2074 = vsel %vm2031, %v1569, 0.0
          %v2075 = vadd.f32 %v2073, %v2074
          %2076 = vadd.xlane.f32.xlu0 %v2075
          %v2077 = vpop.xlane.xlu0 %2076
          %v2078 = vrot.slane %v2077, 4
          %v2079 = vadd.f32 %v2077, %v2078
          %v2080 = vrot.slane %v2079, 2
          %v2081 = vadd.f32 %v2079, %v2080
          %v2082 = vrot.slane %v2081, 1
          %v2083 = vadd.f32 %v2081, %v2082
          %s2084 = vtos %v2083
          %s2085 = sadd.f32 %s2072, %s2084
          %s2086 = scalar_lea.smem [#allocation4], 1
          %2087 = sst [smem:[%s2086]] %s2085
          %s2088 = sld [smem:[#allocation4 + $0x81]]
          %v2089 = vmul.f32 %v1568, %v1568
          %v2090 = vmul.f32 %v1569, %v1569
          %v2091 = vsel %vm2031, %v2089, 0.0
          %v2092 = vsel %vm2031, %v2090, 0.0
          %v2093 = vadd.f32 %v2091, %v2092
          %2094 = vadd.xlane.f32.xlu0 %v2093
          %v2095 = vpop.xlane.xlu0 %2094
          %v2096 = vrot.slane %v2095, 4
          %v2097 = vadd.f32 %v2095, %v2096
          %v2098 = vrot.slane %v2097, 2
          %v2099 = vadd.f32 %v2097, %v2098
          %v2100 = vrot.slane %v2099, 1
          %v2101 = vadd.f32 %v2099, %v2100
          %s2102 = vtos %v2101
          %s2103 = sadd.f32 %s2088, %s2102
          %s2104 = scalar_lea.smem [#allocation4], 129
          %2105 = sst [smem:[%s2104]] %s2103
          %s2106 = sld [smem:[#allocation4 + $0x2]]
          %v2107 = vsel %vm2031, %v2027, 0.0
          %v2108 = vsel %vm2031, %v2028, 0.0
          %v2109 = vadd.f32 %v2107, %v2108
          %2110 = vadd.xlane.f32.xlu0 %v2109
          %v2111 = vpop.xlane.xlu0 %2110
          %v2112 = vrot.slane %v2111, 4
          %v2113 = vadd.f32 %v2111, %v2112
          %v2114 = vrot.slane %v2113, 2
          %v2115 = vadd.f32 %v2113, %v2114
          %v2116 = vrot.slane %v2115, 1
          %v2117 = vadd.f32 %v2115, %v2116
          %s2118 = vtos %v2117
          %s2119 = sadd.f32 %s2106, %s2118
          %s2120 = scalar_lea.smem [#allocation4], 2
          %2121 = sst [smem:[%s2120]] %s2119
          %s2122 = sld [smem:[#allocation4 + $0x82]]
          %v2123 = vmul.f32 %v2027, %v2027
          %v2124 = vmul.f32 %v2028, %v2028
          %v2125 = vsel %vm2031, %v2123, 0.0
          %v2126 = vsel %vm2031, %v2124, 0.0
          %v2127 = vadd.f32 %v2125, %v2126
          %2128 = vadd.xlane.f32.xlu0 %v2127
          %v2129 = vpop.xlane.xlu0 %2128
          %v2130 = vrot.slane %v2129, 4
          %v2131 = vadd.f32 %v2129, %v2130
          %v2132 = vrot.slane %v2131, 2
          %v2133 = vadd.f32 %v2131, %v2132
          %v2134 = vrot.slane %v2133, 1
          %v2135 = vadd.f32 %v2133, %v2134
          %s2136 = vtos %v2135
          %s2137 = sadd.f32 %s2122, %s2136
          %s2138 = scalar_lea.smem [#allocation4], 130
          %2139 = sst [smem:[%s2138]] %s2137
        $region96: #{residual_block_forward.1} parent=55 // pred_fallthru
          _
        %p2140 = scmp.eq.s32.totalorder %s35, 1
        // Predicated region
        $region101: #{residual_block_forward.1} parent=55 // pred_check
          %p2141 = pneg %p2140
        $region102: #{residual_block_forward.1} parent=55 // pred_check_branch
          %2143 = sbr.rel (%p2141) target = $region104
        $region103: #{residual_block_forward.1} parent=55 // pred_region
          %s2144 = smul.u32 %s36, 48
          %s2145 = scalar_lea.vmem [#allocation2], %s2144
          %v2146 = vld [vmem:[%s2145] sm:$0xff]
          %v2147 = vld [vmem:[%s2145 + $0x8] sm:$0xff]
          %v2148 = vld [vmem:[%s2145 + $0x10] sm:$0xff]
          %v2149 = vld [vmem:[%s2145 + $0x18] sm:$0xff]
          %v2150 = vld [vmem:[%s2145 + $0x20] sm:$0xff]
          %v2151 = vld [vmem:[%s2145 + $0x28] sm:$0xff]
          %s2152 = sld [smem:[#allocation4]]
          %s2153 = smul.f32 %s2152, 0.001953125
          %s2154 = sld [smem:[#allocation4 + $0x80]]
          %s2155 = smul.f32 %s2154, 0.001953125
          %s2156 = smul.f32 %s2153, %s2153
          %s2157 = ssub.f32 %s2155, %s2156
          %s2158 = sadd.f32 %s2157, 1e-05
          %v2159 = vstv %s2158
          %v2160 = vadd.f32 %v2159, 0.0
          %v2161 = vrsqrt.pop %v2160
          %v2162 = vstv %s2153
          %v2163 = vsub.f32 %v2146, %v2162
          %v2164 = vsub.f32 %v2147, %v2162
          %v2165 = vmul.f32 %v2163, %v2161
          %v2166 = vmul.f32 %v2164, %v2161
          %s2167 = sld [smem:[#allocation13]]
          %v2168 = vstv %s2167
          %v2169 = vmul.f32 %v2165, %v2168
          %v2170 = vmul.f32 %v2166, %v2168
          %s2171 = sld [smem:[#allocation14]]
          %v2172 = vstv %s2171
          %v2173 = vadd.f32 %v2169, %v2172
          %v2174 = vadd.f32 %v2170, %v2172
          %v2175 = vmax.f32 %v2173, 0.0
          %v2176 = vmax.f32 %v2174, 0.0
          %s2177 = sld [smem:[#allocation4 + $0x1]]
          %s2178 = smul.f32 %s2177, 0.001953125
          %s2179 = sld [smem:[#allocation4 + $0x81]]
          %s2180 = smul.f32 %s2179, 0.001953125
          %s2181 = smul.f32 %s2178, %s2178
          %s2182 = ssub.f32 %s2180, %s2181
          %s2183 = sadd.f32 %s2182, 1e-05
          %v2184 = vstv %s2183
          %v2185 = vadd.f32 %v2184, 0.0
          %v2186 = vrsqrt.pop %v2185
          %v2187 = vstv %s2178
          %v2188 = vsub.f32 %v2148, %v2187
          %v2189 = vsub.f32 %v2149, %v2187
          %v2190 = vmul.f32 %v2188, %v2186
          %v2191 = vmul.f32 %v2189, %v2186
          %s2192 = sld [smem:[#allocation13 + $0x1]]
          %v2193 = vstv %s2192
          %v2194 = vmul.f32 %v2190, %v2193
          %v2195 = vmul.f32 %v2191, %v2193
          %s2196 = sld [smem:[#allocation14 + $0x1]]
          %v2197 = vstv %s2196
          %v2198 = vadd.f32 %v2194, %v2197
          %v2199 = vadd.f32 %v2195, %v2197
          %v2200 = vmax.f32 %v2198, 0.0
          %v2201 = vmax.f32 %v2199, 0.0
          %s2202 = sld [smem:[#allocation4 + $0x2]]
          %s2203 = smul.f32 %s2202, 0.001953125
          %s2204 = sld [smem:[#allocation4 + $0x82]]
          %s2205 = smul.f32 %s2204, 0.001953125
          %s2206 = smul.f32 %s2203, %s2203
          %s2207 = ssub.f32 %s2205, %s2206
          %s2208 = sadd.f32 %s2207, 1e-05
          %v2209 = vstv %s2208
          %v2210 = vadd.f32 %v2209, 0.0
          %v2211 = vrsqrt.pop %v2210
          %v2212 = vstv %s2203
          %v2213 = vsub.f32 %v2150, %v2212
          %v2214 = vsub.f32 %v2151, %v2212
          %v2215 = vmul.f32 %v2213, %v2211
          %v2216 = vmul.f32 %v2214, %v2211
          %s2217 = sld [smem:[#allocation13 + $0x2]]
          %v2218 = vstv %s2217
          %v2219 = vmul.f32 %v2215, %v2218
          %v2220 = vmul.f32 %v2216, %v2218
          %s2221 = sld [smem:[#allocation14 + $0x2]]
          %v2222 = vstv %s2221
          %v2223 = vadd.f32 %v2219, %v2222
          %v2224 = vadd.f32 %v2220, %v2222
          %v2225 = vmax.f32 %v2223, 0.0
          %v2226 = vmax.f32 %v2224, 0.0
          %v2230 = vrot.slane %v2175, 1
          %v2231 = vrot.slane %v2200, 1
          %v2232 = vrot.slane %v2225, 1
          %vm2239 = vcmask 1040384
          %v2240 = vrot.slane %v2175, 7
          %v2241 = vrot.slane %v2176, 7
          %v2242 = vsel %vm2239, %v2240, %v2241
          %v2243 = vrot.slane %v2200, 7
          %v2244 = vrot.slane %v2201, 7
          %v2245 = vsel %vm2239, %v2243, %v2244
          %v2246 = vrot.slane %v2225, 7
          %v2247 = vrot.slane %v2226, 7
          %v2248 = vsel %vm2239, %v2246, %v2247
          %v2255 = vrot.slane %v2176, 5
          %v2256 = vrot.slane %v2201, 5
          %v2257 = vrot.slane %v2226, 5
          %v2261 = vsel %vm2239, %v2230, %v2240
          %v2262 = vsel %vm2239, %v2231, %v2243
          %v2263 = vsel %vm2239, %v2232, %v2246
          %v2264 = vsel %vm2239, %v2241, %v2255
          %v2265 = vsel %vm2239, %v2244, %v2256
          %v2266 = vsel %vm2239, %v2247, %v2257
          %2273 = vrot.lane.b32.xlu0 %v2261, 127
          %v2274 = vpop.permute.xlu0 %2273
          %2275 = vrot.lane.b32.xlu0 %v2242, 127
          %v2276 = vpop.permute.xlu0 %2275
          %2277 = vrot.lane.b32.xlu0 %v2264, 127
          %v2278 = vpop.permute.xlu0 %2277
          %2279 = vrot.lane.b32.xlu0 %v2262, 127
          %v2280 = vpop.permute.xlu0 %2279
          %2281 = vrot.lane.b32.xlu0 %v2245, 127
          %v2282 = vpop.permute.xlu0 %2281
          %2283 = vrot.lane.b32.xlu0 %v2265, 127
          %v2284 = vpop.permute.xlu0 %2283
          %2285 = vrot.lane.b32.xlu0 %v2263, 127
          %v2286 = vpop.permute.xlu0 %2285
          %2287 = vrot.lane.b32.xlu0 %v2248, 127
          %v2288 = vpop.permute.xlu0 %2287
          %2289 = vrot.lane.b32.xlu0 %v2266, 127
          %v2290 = vpop.permute.xlu0 %2289
          %2300 = vrot.lane.b32.xlu0 %v2261, 1
          %v2301 = vpop.permute.xlu0 %2300
          %2302 = vrot.lane.b32.xlu0 %v2242, 1
          %v2303 = vpop.permute.xlu0 %2302
          %2304 = vrot.lane.b32.xlu0 %v2264, 1
          %v2305 = vpop.permute.xlu0 %2304
          %2306 = vrot.lane.b32.xlu0 %v2262, 1
          %v2307 = vpop.permute.xlu0 %2306
          %2308 = vrot.lane.b32.xlu0 %v2245, 1
          %v2309 = vpop.permute.xlu0 %2308
          %2310 = vrot.lane.b32.xlu0 %v2265, 1
          %v2311 = vpop.permute.xlu0 %2310
          %2312 = vrot.lane.b32.xlu0 %v2263, 1
          %v2313 = vpop.permute.xlu0 %2312
          %2314 = vrot.lane.b32.xlu0 %v2248, 1
          %v2315 = vpop.permute.xlu0 %2314
          %2316 = vrot.lane.b32.xlu0 %v2266, 1
          %v2317 = vpop.permute.xlu0 %2316
          %2327 = vrot.lane.b32.xlu0 %v2261, 3
          %v2328 = vpop.permute.xlu0 %2327
          %2329 = vrot.lane.b32.xlu0 %v2242, 3
          %v2330 = vpop.permute.xlu0 %2329
          %2331 = vrot.lane.b32.xlu0 %v2264, 3
          %v2332 = vpop.permute.xlu0 %2331
          %2333 = vrot.lane.b32.xlu0 %v2262, 3
          %v2334 = vpop.permute.xlu0 %2333
          %2335 = vrot.lane.b32.xlu0 %v2245, 3
          %v2336 = vpop.permute.xlu0 %2335
          %2337 = vrot.lane.b32.xlu0 %v2265, 3
          %v2338 = vpop.permute.xlu0 %2337
          %2339 = vrot.lane.b32.xlu0 %v2263, 3
          %v2340 = vpop.permute.xlu0 %2339
          %2341 = vrot.lane.b32.xlu0 %v2248, 3
          %v2342 = vpop.permute.xlu0 %2341
          %2343 = vrot.lane.b32.xlu0 %v2266, 3
          %v2344 = vpop.permute.xlu0 %2343
          %vm2354 = vcmask 7168
          %v2355 = vsel %vm2354, %v2274, %v2301
          %v2356 = vsel %vm2354, %v2276, %v2303
          %v2357 = vsel %vm2354, %v2278, %v2305
          %v2358 = vsel %vm2354, %v2280, %v2307
          %v2359 = vsel %vm2354, %v2282, %v2309
          %v2360 = vsel %vm2354, %v2284, %v2311
          %v2361 = vsel %vm2354, %v2286, %v2313
          %v2362 = vsel %vm2354, %v2288, %v2315
          %v2363 = vsel %vm2354, %v2290, %v2317
          %vm2364 = vcmask 138240
          %v2365 = vsel %vm2364, %v2355, %v2328
          %v2366 = vsel %vm2364, %v2356, %v2330
          %v2367 = vsel %vm2364, %v2357, %v2332
          %v2368 = vsel %vm2364, %v2358, %v2334
          %v2369 = vsel %vm2364, %v2359, %v2336
          %v2370 = vsel %vm2364, %v2360, %v2338
          %v2371 = vsel %vm2364, %v2361, %v2340
          %v2372 = vsel %vm2364, %v2362, %v2342
          %v2373 = vsel %vm2364, %v2363, %v2344
          %s2374 = sld [smem:[#allocation17]]
          %v2375 = vstv %s2374
          %v2376 = vadd.f32 %v2375, 0.0
          %s2377 = sld [smem:[#allocation16]]
          %v2378 = vstv %s2377
          %v2379 = vmul.f32 %v2378, %v2365
          %v2380 = vmul.f32 %v2378, %v2366
          %v2381 = vadd.f32 %v2376, %v2379
          %v2382 = vadd.f32 %v2376, %v2380
          %s2383 = sld [smem:[#allocation16 + $0x1]]
          %v2384 = vstv %s2383
          %v2385 = vmul.f32 %v2384, %v2365
          %v2386 = vmul.f32 %v2384, %v2366
          %2389 = vrot.lane.b32.xlu0 %v2385, 127
          %v2390 = vpop.permute.xlu0 %2389
          %2391 = vrot.lane.b32.xlu0 %v2386, 127
          %v2392 = vpop.permute.xlu0 %2391
          %v2395 = vadd.f32 %v2381, %v2390
          %v2396 = vadd.f32 %v2382, %v2392
          %s2397 = sld [smem:[#allocation16 + $0x2]]
          %v2398 = vstv %s2397
          %v2399 = vmul.f32 %v2398, %v2365
          %v2400 = vmul.f32 %v2398, %v2366
          %2403 = vrot.lane.b32.xlu0 %v2399, 126
          %v2404 = vpop.permute.xlu0 %2403
          %2405 = vrot.lane.b32.xlu0 %v2400, 126
          %v2406 = vpop.permute.xlu0 %2405
          %v2409 = vadd.f32 %v2395, %v2404
          %v2410 = vadd.f32 %v2396, %v2406
          %s2411 = sld [smem:[#allocation16 + $0x3]]
          %v2412 = vstv %s2411
          %v2413 = vmul.f32 %v2412, %v2365
          %v2414 = vmul.f32 %v2412, %v2366
          %v2415 = vmul.f32 %v2412, %v2367
          %vm2419 = vcmask 1046528
          %v2420 = vrot.slane %v2413, 1
          %v2421 = vrot.slane %v2414, 1
          %v2422 = vsel %vm2419, %v2420, %v2421
          %v2423 = vrot.slane %v2415, 1
          %v2424 = vsel %vm2419, %v2421, %v2423
          %v2427 = vadd.f32 %v2409, %v2422
          %v2428 = vadd.f32 %v2410, %v2424
          %s2429 = sld [smem:[#allocation16 + $0x4]]
          %v2430 = vstv %s2429
          %v2431 = vmul.f32 %v2430, %v2365
          %v2432 = vmul.f32 %v2430, %v2366
          %v2433 = vmul.f32 %v2430, %v2367
          %v2437 = vrot.slane %v2431, 1
          %v2438 = vrot.slane %v2432, 1
          %v2439 = vsel %vm2419, %v2437, %v2438
          %v2440 = vrot.slane %v2433, 1
          %v2441 = vsel %vm2419, %v2438, %v2440
          %2442 = vrot.lane.b32.xlu0 %v2439, 127
          %v2443 = vpop.permute.xlu0 %2442
          %2444 = vrot.lane.b32.xlu0 %v2441, 127
          %v2445 = vpop.permute.xlu0 %2444
          %v2448 = vadd.f32 %v2427, %v2443
          %v2449 = vadd.f32 %v2428, %v2445
          %s2450 = sld [smem:[#allocation16 + $0x5]]
          %v2451 = vstv %s2450
          %v2452 = vmul.f32 %v2451, %v2365
          %v2453 = vmul.f32 %v2451, %v2366
          %v2454 = vmul.f32 %v2451, %v2367
          %v2458 = vrot.slane %v2452, 1
          %v2459 = vrot.slane %v2453, 1
          %v2460 = vsel %vm2419, %v2458, %v2459
          %v2461 = vrot.slane %v2454, 1
          %v2462 = vsel %vm2419, %v2459, %v2461
          %2463 = vrot.lane.b32.xlu0 %v2460, 126
          %v2464 = vpop.permute.xlu0 %2463
          %2465 = vrot.lane.b32.xlu0 %v2462, 126
          %v2466 = vpop.permute.xlu0 %2465
          %v2469 = vadd.f32 %v2448, %v2464
          %v2470 = vadd.f32 %v2449, %v2466
          %s2471 = sld [smem:[#allocation16 + $0x6]]
          %v2472 = vstv %s2471
          %v2473 = vmul.f32 %v2472, %v2365
          %v2474 = vmul.f32 %v2472, %v2366
          %v2475 = vmul.f32 %v2472, %v2367
          %vm2479 = vcmask 1045504
          %v2480 = vrot.slane %v2473, 2
          %v2481 = vrot.slane %v2474, 2
          %v2482 = vsel %vm2479, %v2480, %v2481
          %v2483 = vrot.slane %v2475, 2
          %v2484 = vsel %vm2479, %v2481, %v2483
          %v2487 = vadd.f32 %v2469, %v2482
          %v2488 = vadd.f32 %v2470, %v2484
          %s2489 = sld [smem:[#allocation16 + $0x7]]
          %v2490 = vstv %s2489
          %v2491 = vmul.f32 %v2490, %v2365
          %v2492 = vmul.f32 %v2490, %v2366
          %v2493 = vmul.f32 %v2490, %v2367
          %v2497 = vrot.slane %v2491, 2
          %v2498 = vrot.slane %v2492, 2
          %v2499 = vsel %vm2479, %v2497, %v2498
          %v2500 = vrot.slane %v2493, 2
          %v2501 = vsel %vm2479, %v2498, %v2500
          %2502 = vrot.lane.b32.xlu0 %v2499, 127
          %v2503 = vpop.permute.xlu0 %2502
          %2504 = vrot.lane.b32.xlu0 %v2501, 127
          %v2505 = vpop.permute.xlu0 %2504
          %v2508 = vadd.f32 %v2487, %v2503
          %v2509 = vadd.f32 %v2488, %v2505
          %s2510 = sld [smem:[#allocation16 + $0x8]]
          %v2511 = vstv %s2510
          %v2512 = vmul.f32 %v2511, %v2365
          %v2513 = vmul.f32 %v2511, %v2366
          %v2514 = vmul.f32 %v2511, %v2367
          %v2518 = vrot.slane %v2512, 2
          %v2519 = vrot.slane %v2513, 2
          %v2520 = vsel %vm2479, %v2518, %v2519
          %v2521 = vrot.slane %v2514, 2
          %v2522 = vsel %vm2479, %v2519, %v2521
          %2523 = vrot.lane.b32.xlu0 %v2520, 126
          %v2524 = vpop.permute.xlu0 %2523
          %2525 = vrot.lane.b32.xlu0 %v2522, 126
          %v2526 = vpop.permute.xlu0 %2525
          %v2529 = vadd.f32 %v2508, %v2524
          %v2530 = vadd.f32 %v2509, %v2526
          %s2531 = sld [smem:[#allocation16 + $0x9]]
          %v2532 = vstv %s2531
          %v2533 = vmul.f32 %v2532, %v2368
          %v2534 = vmul.f32 %v2532, %v2369
          %v2535 = vadd.f32 %v2529, %v2533
          %v2536 = vadd.f32 %v2530, %v2534
          %s2537 = sld [smem:[#allocation16 + $0xa]]
          %v2538 = vstv %s2537
          %v2539 = vmul.f32 %v2538, %v2368
          %v2540 = vmul.f32 %v2538, %v2369
          %2543 = vrot.lane.b32.xlu0 %v2539, 127
          %v2544 = vpop.permute.xlu0 %2543
          %2545 = vrot.lane.b32.xlu0 %v2540, 127
          %v2546 = vpop.permute.xlu0 %2545
          %v2549 = vadd.f32 %v2535, %v2544
          %v2550 = vadd.f32 %v2536, %v2546
          %s2551 = sld [smem:[#allocation16 + $0xb]]
          %v2552 = vstv %s2551
          %v2553 = vmul.f32 %v2552, %v2368
          %v2554 = vmul.f32 %v2552, %v2369
          %2557 = vrot.lane.b32.xlu0 %v2553, 126
          %v2558 = vpop.permute.xlu0 %2557
          %2559 = vrot.lane.b32.xlu0 %v2554, 126
          %v2560 = vpop.permute.xlu0 %2559
          %v2563 = vadd.f32 %v2549, %v2558
          %v2564 = vadd.f32 %v2550, %v2560
          %s2565 = sld [smem:[#allocation16 + $0xc]]
          %v2566 = vstv %s2565
          %v2567 = vmul.f32 %v2566, %v2368
          %v2568 = vmul.f32 %v2566, %v2369
          %v2569 = vmul.f32 %v2566, %v2370
          %v2573 = vrot.slane %v2567, 1
          %v2574 = vrot.slane %v2568, 1
          %v2575 = vsel %vm2419, %v2573, %v2574
          %v2576 = vrot.slane %v2569, 1
          %v2577 = vsel %vm2419, %v2574, %v2576
          %v2580 = vadd.f32 %v2563, %v2575
          %v2581 = vadd.f32 %v2564, %v2577
          %s2582 = sld [smem:[#allocation16 + $0xd]]
          %v2583 = vstv %s2582
          %v2584 = vmul.f32 %v2583, %v2368
          %v2585 = vmul.f32 %v2583, %v2369
          %v2586 = vmul.f32 %v2583, %v2370
          %v2590 = vrot.slane %v2584, 1
          %v2591 = vrot.slane %v2585, 1
          %v2592 = vsel %vm2419, %v2590, %v2591
          %v2593 = vrot.slane %v2586, 1
          %v2594 = vsel %vm2419, %v2591, %v2593
          %2595 = vrot.lane.b32.xlu0 %v2592, 127
          %v2596 = vpop.permute.xlu0 %2595
          %2597 = vrot.lane.b32.xlu0 %v2594, 127
          %v2598 = vpop.permute.xlu0 %2597
          %v2601 = vadd.f32 %v2580, %v2596
          %v2602 = vadd.f32 %v2581, %v2598
          %s2603 = sld [smem:[#allocation16 + $0xe]]
          %v2604 = vstv %s2603
          %v2605 = vmul.f32 %v2604, %v2368
          %v2606 = vmul.f32 %v2604, %v2369
          %v2607 = vmul.f32 %v2604, %v2370
          %v2611 = vrot.slane %v2605, 1
          %v2612 = vrot.slane %v2606, 1
          %v2613 = vsel %vm2419, %v2611, %v2612
          %v2614 = vrot.slane %v2607, 1
          %v2615 = vsel %vm2419, %v2612, %v2614
          %2616 = vrot.lane.b32.xlu0 %v2613, 126
          %v2617 = vpop.permute.xlu0 %2616
          %2618 = vrot.lane.b32.xlu0 %v2615, 126
          %v2619 = vpop.permute.xlu0 %2618
          %v2622 = vadd.f32 %v2601, %v2617
          %v2623 = vadd.f32 %v2602, %v2619
          %s2624 = sld [smem:[#allocation16 + $0xf]]
          %v2625 = vstv %s2624
          %v2626 = vmul.f32 %v2625, %v2368
          %v2627 = vmul.f32 %v2625, %v2369
          %v2628 = vmul.f32 %v2625, %v2370
          %v2632 = vrot.slane %v2626, 2
          %v2633 = vrot.slane %v2627, 2
          %v2634 = vsel %vm2479, %v2632, %v2633
          %v2635 = vrot.slane %v2628, 2
          %v2636 = vsel %vm2479, %v2633, %v2635
          %v2639 = vadd.f32 %v2622, %v2634
          %v2640 = vadd.f32 %v2623, %v2636
          %s2641 = sld [smem:[#allocation16 + $0x10]]
          %v2642 = vstv %s2641
          %v2643 = vmul.f32 %v2642, %v2368
          %v2644 = vmul.f32 %v2642, %v2369
          %v2645 = vmul.f32 %v2642, %v2370
          %v2649 = vrot.slane %v2643, 2
          %v2650 = vrot.slane %v2644, 2
          %v2651 = vsel %vm2479, %v2649, %v2650
          %v2652 = vrot.slane %v2645, 2
          %v2653 = vsel %vm2479, %v2650, %v2652
          %2654 = vrot.lane.b32.xlu0 %v2651, 127
          %v2655 = vpop.permute.xlu0 %2654
          %2656 = vrot.lane.b32.xlu0 %v2653, 127
          %v2657 = vpop.permute.xlu0 %2656
          %v2660 = vadd.f32 %v2639, %v2655
          %v2661 = vadd.f32 %v2640, %v2657
          %s2662 = sld [smem:[#allocation16 + $0x11]]
          %v2663 = vstv %s2662
          %v2664 = vmul.f32 %v2663, %v2368
          %v2665 = vmul.f32 %v2663, %v2369
          %v2666 = vmul.f32 %v2663, %v2370
          %v2670 = vrot.slane %v2664, 2
          %v2671 = vrot.slane %v2665, 2
          %v2672 = vsel %vm2479, %v2670, %v2671
          %v2673 = vrot.slane %v2666, 2
          %v2674 = vsel %vm2479, %v2671, %v2673
          %2675 = vrot.lane.b32.xlu0 %v2672, 126
          %v2676 = vpop.permute.xlu0 %2675
          %2677 = vrot.lane.b32.xlu0 %v2674, 126
          %v2678 = vpop.permute.xlu0 %2677
          %v2681 = vadd.f32 %v2660, %v2676
          %v2682 = vadd.f32 %v2661, %v2678
          %s2683 = sld [smem:[#allocation16 + $0x12]]
          %v2684 = vstv %s2683
          %v2685 = vmul.f32 %v2684, %v2371
          %v2686 = vmul.f32 %v2684, %v2372
          %v2687 = vadd.f32 %v2681, %v2685
          %v2688 = vadd.f32 %v2682, %v2686
          %s2689 = sld [smem:[#allocation16 + $0x13]]
          %v2690 = vstv %s2689
          %v2691 = vmul.f32 %v2690, %v2371
          %v2692 = vmul.f32 %v2690, %v2372
          %2695 = vrot.lane.b32.xlu0 %v2691, 127
          %v2696 = vpop.permute.xlu0 %2695
          %2697 = vrot.lane.b32.xlu0 %v2692, 127
          %v2698 = vpop.permute.xlu0 %2697
          %v2701 = vadd.f32 %v2687, %v2696
          %v2702 = vadd.f32 %v2688, %v2698
          %s2703 = sld [smem:[#allocation16 + $0x14]]
          %v2704 = vstv %s2703
          %v2705 = vmul.f32 %v2704, %v2371
          %v2706 = vmul.f32 %v2704, %v2372
          %2709 = vrot.lane.b32.xlu0 %v2705, 126
          %v2710 = vpop.permute.xlu0 %2709
          %2711 = vrot.lane.b32.xlu0 %v2706, 126
          %v2712 = vpop.permute.xlu0 %2711
          %v2715 = vadd.f32 %v2701, %v2710
          %v2716 = vadd.f32 %v2702, %v2712
          %s2717 = sld [smem:[#allocation16 + $0x15]]
          %v2718 = vstv %s2717
          %v2719 = vmul.f32 %v2718, %v2371
          %v2720 = vmul.f32 %v2718, %v2372
          %v2721 = vmul.f32 %v2718, %v2373
          %v2725 = vrot.slane %v2719, 1
          %v2726 = vrot.slane %v2720, 1
          %v2727 = vsel %vm2419, %v2725, %v2726
          %v2728 = vrot.slane %v2721, 1
          %v2729 = vsel %vm2419, %v2726, %v2728
          %v2732 = vadd.f32 %v2715, %v2727
          %v2733 = vadd.f32 %v2716, %v2729
          %s2734 = sld [smem:[#allocation16 + $0x16]]
          %v2735 = vstv %s2734
          %v2736 = vmul.f32 %v2735, %v2371
          %v2737 = vmul.f32 %v2735, %v2372
          %v2738 = vmul.f32 %v2735, %v2373
          %v2742 = vrot.slane %v2736, 1
          %v2743 = vrot.slane %v2737, 1
          %v2744 = vsel %vm2419, %v2742, %v2743
          %v2745 = vrot.slane %v2738, 1
          %v2746 = vsel %vm2419, %v2743, %v2745
          %2747 = vrot.lane.b32.xlu0 %v2744, 127
          %v2748 = vpop.permute.xlu0 %2747
          %2749 = vrot.lane.b32.xlu0 %v2746, 127
          %v2750 = vpop.permute.xlu0 %2749
          %v2753 = vadd.f32 %v2732, %v2748
          %v2754 = vadd.f32 %v2733, %v2750
          %s2755 = sld [smem:[#allocation16 + $0x17]]
          %v2756 = vstv %s2755
          %v2757 = vmul.f32 %v2756, %v2371
          %v2758 = vmul.f32 %v2756, %v2372
          %v2759 = vmul.f32 %v2756, %v2373
          %v2763 = vrot.slane %v2757, 1
          %v2764 = vrot.slane %v2758, 1
          %v2765 = vsel %vm2419, %v2763, %v2764
          %v2766 = vrot.slane %v2759, 1
          %v2767 = vsel %vm2419, %v2764, %v2766
          %2768 = vrot.lane.b32.xlu0 %v2765, 126
          %v2769 = vpop.permute.xlu0 %2768
          %2770 = vrot.lane.b32.xlu0 %v2767, 126
          %v2771 = vpop.permute.xlu0 %2770
          %v2774 = vadd.f32 %v2753, %v2769
          %v2775 = vadd.f32 %v2754, %v2771
          %s2776 = sld [smem:[#allocation16 + $0x18]]
          %v2777 = vstv %s2776
          %v2778 = vmul.f32 %v2777, %v2371
          %v2779 = vmul.f32 %v2777, %v2372
          %v2780 = vmul.f32 %v2777, %v2373
          %v2784 = vrot.slane %v2778, 2
          %v2785 = vrot.slane %v2779, 2
          %v2786 = vsel %vm2479, %v2784, %v2785
          %v2787 = vrot.slane %v2780, 2
          %v2788 = vsel %vm2479, %v2785, %v2787
          %v2791 = vadd.f32 %v2774, %v2786
          %v2792 = vadd.f32 %v2775, %v2788
          %s2793 = sld [smem:[#allocation16 + $0x19]]
          %v2794 = vstv %s2793
          %v2795 = vmul.f32 %v2794, %v2371
          %v2796 = vmul.f32 %v2794, %v2372
          %v2797 = vmul.f32 %v2794, %v2373
          %v2801 = vrot.slane %v2795, 2
          %v2802 = vrot.slane %v2796, 2
          %v2803 = vsel %vm2479, %v2801, %v2802
          %v2804 = vrot.slane %v2797, 2
          %v2805 = vsel %vm2479, %v2802, %v2804
          %2806 = vrot.lane.b32.xlu0 %v2803, 127
          %v2807 = vpop.permute.xlu0 %2806
          %2808 = vrot.lane.b32.xlu0 %v2805, 127
          %v2809 = vpop.permute.xlu0 %2808
          %v2812 = vadd.f32 %v2791, %v2807
          %v2813 = vadd.f32 %v2792, %v2809
          %s2814 = sld [smem:[#allocation16 + $0x1a]]
          %v2815 = vstv %s2814
          %v2816 = vmul.f32 %v2815, %v2371
          %v2817 = vmul.f32 %v2815, %v2372
          %v2818 = vmul.f32 %v2815, %v2373
          %v2822 = vrot.slane %v2816, 2
          %v2823 = vrot.slane %v2817, 2
          %v2824 = vsel %vm2479, %v2822, %v2823
          %v2825 = vrot.slane %v2818, 2
          %v2826 = vsel %vm2479, %v2823, %v2825
          %2827 = vrot.lane.b32.xlu0 %v2824, 126
          %v2828 = vpop.permute.xlu0 %2827
          %2829 = vrot.lane.b32.xlu0 %v2826, 126
          %v2830 = vpop.permute.xlu0 %2829
          %v2833 = vadd.f32 %v2812, %v2828
          %v2834 = vadd.f32 %v2813, %v2830
          %s2835 = sld [smem:[#allocation17 + $0x1]]
          %v2836 = vstv %s2835
          %v2837 = vadd.f32 %v2836, 0.0
          %s2838 = sld [smem:[#allocation16 + $0x1b]]
          %v2839 = vstv %s2838
          %v2840 = vmul.f32 %v2839, %v2365
          %v2841 = vmul.f32 %v2839, %v2366
          %v2842 = vadd.f32 %v2837, %v2840
          %v2843 = vadd.f32 %v2837, %v2841
          %s2844 = sld [smem:[#allocation16 + $0x1c]]
          %v2845 = vstv %s2844
          %v2846 = vmul.f32 %v2845, %v2365
          %v2847 = vmul.f32 %v2845, %v2366
          %2850 = vrot.lane.b32.xlu0 %v2846, 127
          %v2851 = vpop.permute.xlu0 %2850
          %2852 = vrot.lane.b32.xlu0 %v2847, 127
          %v2853 = vpop.permute.xlu0 %2852
          %v2856 = vadd.f32 %v2842, %v2851
          %v2857 = vadd.f32 %v2843, %v2853
          %s2858 = sld [smem:[#allocation16 + $0x1d]]
          %v2859 = vstv %s2858
          %v2860 = vmul.f32 %v2859, %v2365
          %v2861 = vmul.f32 %v2859, %v2366
          %2864 = vrot.lane.b32.xlu0 %v2860, 126
          %v2865 = vpop.permute.xlu0 %2864
          %2866 = vrot.lane.b32.xlu0 %v2861, 126
          %v2867 = vpop.permute.xlu0 %2866
          %v2870 = vadd.f32 %v2856, %v2865
          %v2871 = vadd.f32 %v2857, %v2867
          %s2872 = sld [smem:[#allocation16 + $0x1e]]
          %v2873 = vstv %s2872
          %v2874 = vmul.f32 %v2873, %v2365
          %v2875 = vmul.f32 %v2873, %v2366
          %v2876 = vmul.f32 %v2873, %v2367
          %v2880 = vrot.slane %v2874, 1
          %v2881 = vrot.slane %v2875, 1
          %v2882 = vsel %vm2419, %v2880, %v2881
          %v2883 = vrot.slane %v2876, 1
          %v2884 = vsel %vm2419, %v2881, %v2883
          %v2887 = vadd.f32 %v2870, %v2882
          %v2888 = vadd.f32 %v2871, %v2884
          %s2889 = sld [smem:[#allocation16 + $0x1f]]
          %v2890 = vstv %s2889
          %v2891 = vmul.f32 %v2890, %v2365
          %v2892 = vmul.f32 %v2890, %v2366
          %v2893 = vmul.f32 %v2890, %v2367
          %v2897 = vrot.slane %v2891, 1
          %v2898 = vrot.slane %v2892, 1
          %v2899 = vsel %vm2419, %v2897, %v2898
          %v2900 = vrot.slane %v2893, 1
          %v2901 = vsel %vm2419, %v2898, %v2900
          %2902 = vrot.lane.b32.xlu0 %v2899, 127
          %v2903 = vpop.permute.xlu0 %2902
          %2904 = vrot.lane.b32.xlu0 %v2901, 127
          %v2905 = vpop.permute.xlu0 %2904
          %v2908 = vadd.f32 %v2887, %v2903
          %v2909 = vadd.f32 %v2888, %v2905
          %s2910 = sld [smem:[#allocation16 + $0x20]]
          %v2911 = vstv %s2910
          %v2912 = vmul.f32 %v2911, %v2365
          %v2913 = vmul.f32 %v2911, %v2366
          %v2914 = vmul.f32 %v2911, %v2367
          %v2918 = vrot.slane %v2912, 1
          %v2919 = vrot.slane %v2913, 1
          %v2920 = vsel %vm2419, %v2918, %v2919
          %v2921 = vrot.slane %v2914, 1
          %v2922 = vsel %vm2419, %v2919, %v2921
          %2923 = vrot.lane.b32.xlu0 %v2920, 126
          %v2924 = vpop.permute.xlu0 %2923
          %2925 = vrot.lane.b32.xlu0 %v2922, 126
          %v2926 = vpop.permute.xlu0 %2925
          %v2929 = vadd.f32 %v2908, %v2924
          %v2930 = vadd.f32 %v2909, %v2926
          %s2931 = sld [smem:[#allocation16 + $0x21]]
          %v2932 = vstv %s2931
          %v2933 = vmul.f32 %v2932, %v2365
          %v2934 = vmul.f32 %v2932, %v2366
          %v2935 = vmul.f32 %v2932, %v2367
          %v2939 = vrot.slane %v2933, 2
          %v2940 = vrot.slane %v2934, 2
          %v2941 = vsel %vm2479, %v2939, %v2940
          %v2942 = vrot.slane %v2935, 2
          %v2943 = vsel %vm2479, %v2940, %v2942
          %v2946 = vadd.f32 %v2929, %v2941
          %v2947 = vadd.f32 %v2930, %v2943
          %s2948 = sld [smem:[#allocation16 + $0x22]]
          %v2949 = vstv %s2948
          %v2950 = vmul.f32 %v2949, %v2365
          %v2951 = vmul.f32 %v2949, %v2366
          %v2952 = vmul.f32 %v2949, %v2367
          %v2956 = vrot.slane %v2950, 2
          %v2957 = vrot.slane %v2951, 2
          %v2958 = vsel %vm2479, %v2956, %v2957
          %v2959 = vrot.slane %v2952, 2
          %v2960 = vsel %vm2479, %v2957, %v2959
          %2961 = vrot.lane.b32.xlu0 %v2958, 127
          %v2962 = vpop.permute.xlu0 %2961
          %2963 = vrot.lane.b32.xlu0 %v2960, 127
          %v2964 = vpop.permute.xlu0 %2963
          %v2967 = vadd.f32 %v2946, %v2962
          %v2968 = vadd.f32 %v2947, %v2964
          %s2969 = sld [smem:[#allocation16 + $0x23]]
          %v2970 = vstv %s2969
          %v2971 = vmul.f32 %v2970, %v2365
          %v2972 = vmul.f32 %v2970, %v2366
          %v2973 = vmul.f32 %v2970, %v2367
          %v2977 = vrot.slane %v2971, 2
          %v2978 = vrot.slane %v2972, 2
          %v2979 = vsel %vm2479, %v2977, %v2978
          %v2980 = vrot.slane %v2973, 2
          %v2981 = vsel %vm2479, %v2978, %v2980
          %2982 = vrot.lane.b32.xlu0 %v2979, 126
          %v2983 = vpop.permute.xlu0 %2982
          %2984 = vrot.lane.b32.xlu0 %v2981, 126
          %v2985 = vpop.permute.xlu0 %2984
          %v2988 = vadd.f32 %v2967, %v2983
          %v2989 = vadd.f32 %v2968, %v2985
          %s2990 = sld [smem:[#allocation16 + $0x24]]
          %v2991 = vstv %s2990
          %v2992 = vmul.f32 %v2991, %v2368
          %v2993 = vmul.f32 %v2991, %v2369
          %v2994 = vadd.f32 %v2988, %v2992
          %v2995 = vadd.f32 %v2989, %v2993
          %s2996 = sld [smem:[#allocation16 + $0x25]]
          %v2997 = vstv %s2996
          %v2998 = vmul.f32 %v2997, %v2368
          %v2999 = vmul.f32 %v2997, %v2369
          %3002 = vrot.lane.b32.xlu0 %v2998, 127
          %v3003 = vpop.permute.xlu0 %3002
          %3004 = vrot.lane.b32.xlu0 %v2999, 127
          %v3005 = vpop.permute.xlu0 %3004
          %v3008 = vadd.f32 %v2994, %v3003
          %v3009 = vadd.f32 %v2995, %v3005
          %s3010 = sld [smem:[#allocation16 + $0x26]]
          %v3011 = vstv %s3010
          %v3012 = vmul.f32 %v3011, %v2368
          %v3013 = vmul.f32 %v3011, %v2369
          %3016 = vrot.lane.b32.xlu0 %v3012, 126
          %v3017 = vpop.permute.xlu0 %3016
          %3018 = vrot.lane.b32.xlu0 %v3013, 126
          %v3019 = vpop.permute.xlu0 %3018
          %v3022 = vadd.f32 %v3008, %v3017
          %v3023 = vadd.f32 %v3009, %v3019
          %s3024 = sld [smem:[#allocation16 + $0x27]]
          %v3025 = vstv %s3024
          %v3026 = vmul.f32 %v3025, %v2368
          %v3027 = vmul.f32 %v3025, %v2369
          %v3028 = vmul.f32 %v3025, %v2370
          %v3032 = vrot.slane %v3026, 1
          %v3033 = vrot.slane %v3027, 1
          %v3034 = vsel %vm2419, %v3032, %v3033
          %v3035 = vrot.slane %v3028, 1
          %v3036 = vsel %vm2419, %v3033, %v3035
          %v3039 = vadd.f32 %v3022, %v3034
          %v3040 = vadd.f32 %v3023, %v3036
          %s3041 = sld [smem:[#allocation16 + $0x28]]
          %v3042 = vstv %s3041
          %v3043 = vmul.f32 %v3042, %v2368
          %v3044 = vmul.f32 %v3042, %v2369
          %v3045 = vmul.f32 %v3042, %v2370
          %v3049 = vrot.slane %v3043, 1
          %v3050 = vrot.slane %v3044, 1
          %v3051 = vsel %vm2419, %v3049, %v3050
          %v3052 = vrot.slane %v3045, 1
          %v3053 = vsel %vm2419, %v3050, %v3052
          %3054 = vrot.lane.b32.xlu0 %v3051, 127
          %v3055 = vpop.permute.xlu0 %3054
          %3056 = vrot.lane.b32.xlu0 %v3053, 127
          %v3057 = vpop.permute.xlu0 %3056
          %v3060 = vadd.f32 %v3039, %v3055
          %v3061 = vadd.f32 %v3040, %v3057
          %s3062 = sld [smem:[#allocation16 + $0x29]]
          %v3063 = vstv %s3062
          %v3064 = vmul.f32 %v3063, %v2368
          %v3065 = vmul.f32 %v3063, %v2369
          %v3066 = vmul.f32 %v3063, %v2370
          %v3070 = vrot.slane %v3064, 1
          %v3071 = vrot.slane %v3065, 1
          %v3072 = vsel %vm2419, %v3070, %v3071
          %v3073 = vrot.slane %v3066, 1
          %v3074 = vsel %vm2419, %v3071, %v3073
          %3075 = vrot.lane.b32.xlu0 %v3072, 126
          %v3076 = vpop.permute.xlu0 %3075
          %3077 = vrot.lane.b32.xlu0 %v3074, 126
          %v3078 = vpop.permute.xlu0 %3077
          %v3081 = vadd.f32 %v3060, %v3076
          %v3082 = vadd.f32 %v3061, %v3078
          %s3083 = sld [smem:[#allocation16 + $0x2a]]
          %v3084 = vstv %s3083
          %v3085 = vmul.f32 %v3084, %v2368
          %v3086 = vmul.f32 %v3084, %v2369
          %v3087 = vmul.f32 %v3084, %v2370
          %v3091 = vrot.slane %v3085, 2
          %v3092 = vrot.slane %v3086, 2
          %v3093 = vsel %vm2479, %v3091, %v3092
          %v3094 = vrot.slane %v3087, 2
          %v3095 = vsel %vm2479, %v3092, %v3094
          %v3098 = vadd.f32 %v3081, %v3093
          %v3099 = vadd.f32 %v3082, %v3095
          %s3100 = sld [smem:[#allocation16 + $0x2b]]
          %v3101 = vstv %s3100
          %v3102 = vmul.f32 %v3101, %v2368
          %v3103 = vmul.f32 %v3101, %v2369
          %v3104 = vmul.f32 %v3101, %v2370
          %v3108 = vrot.slane %v3102, 2
          %v3109 = vrot.slane %v3103, 2
          %v3110 = vsel %vm2479, %v3108, %v3109
          %v3111 = vrot.slane %v3104, 2
          %v3112 = vsel %vm2479, %v3109, %v3111
          %3113 = vrot.lane.b32.xlu0 %v3110, 127
          %v3114 = vpop.permute.xlu0 %3113
          %3115 = vrot.lane.b32.xlu0 %v3112, 127
          %v3116 = vpop.permute.xlu0 %3115
          %v3119 = vadd.f32 %v3098, %v3114
          %v3120 = vadd.f32 %v3099, %v3116
          %s3121 = sld [smem:[#allocation16 + $0x2c]]
          %v3122 = vstv %s3121
          %v3123 = vmul.f32 %v3122, %v2368
          %v3124 = vmul.f32 %v3122, %v2369
          %v3125 = vmul.f32 %v3122, %v2370
          %v3129 = vrot.slane %v3123, 2
          %v3130 = vrot.slane %v3124, 2
          %v3131 = vsel %vm2479, %v3129, %v3130
          %v3132 = vrot.slane %v3125, 2
          %v3133 = vsel %vm2479, %v3130, %v3132
          %3134 = vrot.lane.b32.xlu0 %v3131, 126
          %v3135 = vpop.permute.xlu0 %3134
          %3136 = vrot.lane.b32.xlu0 %v3133, 126
          %v3137 = vpop.permute.xlu0 %3136
          %v3140 = vadd.f32 %v3119, %v3135
          %v3141 = vadd.f32 %v3120, %v3137
          %s3142 = sld [smem:[#allocation16 + $0x2d]]
          %v3143 = vstv %s3142
          %v3144 = vmul.f32 %v3143, %v2371
          %v3145 = vmul.f32 %v3143, %v2372
          %v3146 = vadd.f32 %v3140, %v3144
          %v3147 = vadd.f32 %v3141, %v3145
          %s3148 = sld [smem:[#allocation16 + $0x2e]]
          %v3149 = vstv %s3148
          %v3150 = vmul.f32 %v3149, %v2371
          %v3151 = vmul.f32 %v3149, %v2372
          %3154 = vrot.lane.b32.xlu0 %v3150, 127
          %v3155 = vpop.permute.xlu0 %3154
          %3156 = vrot.lane.b32.xlu0 %v3151, 127
          %v3157 = vpop.permute.xlu0 %3156
          %v3160 = vadd.f32 %v3146, %v3155
          %v3161 = vadd.f32 %v3147, %v3157
          %s3162 = sld [smem:[#allocation16 + $0x2f]]
          %v3163 = vstv %s3162
          %v3164 = vmul.f32 %v3163, %v2371
          %v3165 = vmul.f32 %v3163, %v2372
          %3168 = vrot.lane.b32.xlu0 %v3164, 126
          %v3169 = vpop.permute.xlu0 %3168
          %3170 = vrot.lane.b32.xlu0 %v3165, 126
          %v3171 = vpop.permute.xlu0 %3170
          %v3174 = vadd.f32 %v3160, %v3169
          %v3175 = vadd.f32 %v3161, %v3171
          %s3176 = sld [smem:[#allocation16 + $0x30]]
          %v3177 = vstv %s3176
          %v3178 = vmul.f32 %v3177, %v2371
          %v3179 = vmul.f32 %v3177, %v2372
          %v3180 = vmul.f32 %v3177, %v2373
          %v3184 = vrot.slane %v3178, 1
          %v3185 = vrot.slane %v3179, 1
          %v3186 = vsel %vm2419, %v3184, %v3185
          %v3187 = vrot.slane %v3180, 1
          %v3188 = vsel %vm2419, %v3185, %v3187
          %v3191 = vadd.f32 %v3174, %v3186
          %v3192 = vadd.f32 %v3175, %v3188
          %s3193 = sld [smem:[#allocation16 + $0x31]]
          %v3194 = vstv %s3193
          %v3195 = vmul.f32 %v3194, %v2371
          %v3196 = vmul.f32 %v3194, %v2372
          %v3197 = vmul.f32 %v3194, %v2373
          %v3201 = vrot.slane %v3195, 1
          %v3202 = vrot.slane %v3196, 1
          %v3203 = vsel %vm2419, %v3201, %v3202
          %v3204 = vrot.slane %v3197, 1
          %v3205 = vsel %vm2419, %v3202, %v3204
          %3206 = vrot.lane.b32.xlu0 %v3203, 127
          %v3207 = vpop.permute.xlu0 %3206
          %3208 = vrot.lane.b32.xlu0 %v3205, 127
          %v3209 = vpop.permute.xlu0 %3208
          %v3212 = vadd.f32 %v3191, %v3207
          %v3213 = vadd.f32 %v3192, %v3209
          %s3214 = sld [smem:[#allocation16 + $0x32]]
          %v3215 = vstv %s3214
          %v3216 = vmul.f32 %v3215, %v2371
          %v3217 = vmul.f32 %v3215, %v2372
          %v3218 = vmul.f32 %v3215, %v2373
          %v3222 = vrot.slane %v3216, 1
          %v3223 = vrot.slane %v3217, 1
          %v3224 = vsel %vm2419, %v3222, %v3223
          %v3225 = vrot.slane %v3218, 1
          %v3226 = vsel %vm2419, %v3223, %v3225
          %3227 = vrot.lane.b32.xlu0 %v3224, 126
          %v3228 = vpop.permute.xlu0 %3227
          %3229 = vrot.lane.b32.xlu0 %v3226, 126
          %v3230 = vpop.permute.xlu0 %3229
          %v3233 = vadd.f32 %v3212, %v3228
          %v3234 = vadd.f32 %v3213, %v3230
          %s3235 = sld [smem:[#allocation16 + $0x33]]
          %v3236 = vstv %s3235
          %v3237 = vmul.f32 %v3236, %v2371
          %v3238 = vmul.f32 %v3236, %v2372
          %v3239 = vmul.f32 %v3236, %v2373
          %v3243 = vrot.slane %v3237, 2
          %v3244 = vrot.slane %v3238, 2
          %v3245 = vsel %vm2479, %v3243, %v3244
          %v3246 = vrot.slane %v3239, 2
          %v3247 = vsel %vm2479, %v3244, %v3246
          %v3250 = vadd.f32 %v3233, %v3245
          %v3251 = vadd.f32 %v3234, %v3247
          %s3252 = sld [smem:[#allocation16 + $0x34]]
          %v3253 = vstv %s3252
          %v3254 = vmul.f32 %v3253, %v2371
          %v3255 = vmul.f32 %v3253, %v2372
          %v3256 = vmul.f32 %v3253, %v2373
          %v3260 = vrot.slane %v3254, 2
          %v3261 = vrot.slane %v3255, 2
          %v3262 = vsel %vm2479, %v3260, %v3261
          %v3263 = vrot.slane %v3256, 2
          %v3264 = vsel %vm2479, %v3261, %v3263
          %3265 = vrot.lane.b32.xlu0 %v3262, 127
          %v3266 = vpop.permute.xlu0 %3265
          %3267 = vrot.lane.b32.xlu0 %v3264, 127
          %v3268 = vpop.permute.xlu0 %3267
          %v3271 = vadd.f32 %v3250, %v3266
          %v3272 = vadd.f32 %v3251, %v3268
          %s3273 = sld [smem:[#allocation16 + $0x35]]
          %v3274 = vstv %s3273
          %v3275 = vmul.f32 %v3274, %v2371
          %v3276 = vmul.f32 %v3274, %v2372
          %v3277 = vmul.f32 %v3274, %v2373
          %v3281 = vrot.slane %v3275, 2
          %v3282 = vrot.slane %v3276, 2
          %v3283 = vsel %vm2479, %v3281, %v3282
          %v3284 = vrot.slane %v3277, 2
          %v3285 = vsel %vm2479, %v3282, %v3284
          %3286 = vrot.lane.b32.xlu0 %v3283, 126
          %v3287 = vpop.permute.xlu0 %3286
          %3288 = vrot.lane.b32.xlu0 %v3285, 126
          %v3289 = vpop.permute.xlu0 %3288
          %v3292 = vadd.f32 %v3271, %v3287
          %v3293 = vadd.f32 %v3272, %v3289
          %s3294 = sld [smem:[#allocation17 + $0x2]]
          %v3295 = vstv %s3294
          %v3296 = vadd.f32 %v3295, 0.0
          %s3297 = sld [smem:[#allocation16 + $0x36]]
          %v3298 = vstv %s3297
          %v3299 = vmul.f32 %v3298, %v2365
          %v3300 = vmul.f32 %v3298, %v2366
          %v3301 = vadd.f32 %v3296, %v3299
          %v3302 = vadd.f32 %v3296, %v3300
          %s3303 = sld [smem:[#allocation16 + $0x37]]
          %v3304 = vstv %s3303
          %v3305 = vmul.f32 %v3304, %v2365
          %v3306 = vmul.f32 %v3304, %v2366
          %3309 = vrot.lane.b32.xlu0 %v3305, 127
          %v3310 = vpop.permute.xlu0 %3309
          %3311 = vrot.lane.b32.xlu0 %v3306, 127
          %v3312 = vpop.permute.xlu0 %3311
          %v3315 = vadd.f32 %v3301, %v3310
          %v3316 = vadd.f32 %v3302, %v3312
          %s3317 = sld [smem:[#allocation16 + $0x38]]
          %v3318 = vstv %s3317
          %v3319 = vmul.f32 %v3318, %v2365
          %v3320 = vmul.f32 %v3318, %v2366
          %3323 = vrot.lane.b32.xlu0 %v3319, 126
          %v3324 = vpop.permute.xlu0 %3323
          %3325 = vrot.lane.b32.xlu0 %v3320, 126
          %v3326 = vpop.permute.xlu0 %3325
          %v3329 = vadd.f32 %v3315, %v3324
          %v3330 = vadd.f32 %v3316, %v3326
          %s3331 = sld [smem:[#allocation16 + $0x39]]
          %v3332 = vstv %s3331
          %v3333 = vmul.f32 %v3332, %v2365
          %v3334 = vmul.f32 %v3332, %v2366
          %v3335 = vmul.f32 %v3332, %v2367
          %v3339 = vrot.slane %v3333, 1
          %v3340 = vrot.slane %v3334, 1
          %v3341 = vsel %vm2419, %v3339, %v3340
          %v3342 = vrot.slane %v3335, 1
          %v3343 = vsel %vm2419, %v3340, %v3342
          %v3346 = vadd.f32 %v3329, %v3341
          %v3347 = vadd.f32 %v3330, %v3343
          %s3348 = sld [smem:[#allocation16 + $0x3a]]
          %v3349 = vstv %s3348
          %v3350 = vmul.f32 %v3349, %v2365
          %v3351 = vmul.f32 %v3349, %v2366
          %v3352 = vmul.f32 %v3349, %v2367
          %v3356 = vrot.slane %v3350, 1
          %v3357 = vrot.slane %v3351, 1
          %v3358 = vsel %vm2419, %v3356, %v3357
          %v3359 = vrot.slane %v3352, 1
          %v3360 = vsel %vm2419, %v3357, %v3359
          %3361 = vrot.lane.b32.xlu0 %v3358, 127
          %v3362 = vpop.permute.xlu0 %3361
          %3363 = vrot.lane.b32.xlu0 %v3360, 127
          %v3364 = vpop.permute.xlu0 %3363
          %v3367 = vadd.f32 %v3346, %v3362
          %v3368 = vadd.f32 %v3347, %v3364
          %s3369 = sld [smem:[#allocation16 + $0x3b]]
          %v3370 = vstv %s3369
          %v3371 = vmul.f32 %v3370, %v2365
          %v3372 = vmul.f32 %v3370, %v2366
          %v3373 = vmul.f32 %v3370, %v2367
          %v3377 = vrot.slane %v3371, 1
          %v3378 = vrot.slane %v3372, 1
          %v3379 = vsel %vm2419, %v3377, %v3378
          %v3380 = vrot.slane %v3373, 1
          %v3381 = vsel %vm2419, %v3378, %v3380
          %3382 = vrot.lane.b32.xlu0 %v3379, 126
          %v3383 = vpop.permute.xlu0 %3382
          %3384 = vrot.lane.b32.xlu0 %v3381, 126
          %v3385 = vpop.permute.xlu0 %3384
          %v3388 = vadd.f32 %v3367, %v3383
          %v3389 = vadd.f32 %v3368, %v3385
          %s3390 = sld [smem:[#allocation16 + $0x3c]]
          %v3391 = vstv %s3390
          %v3392 = vmul.f32 %v3391, %v2365
          %v3393 = vmul.f32 %v3391, %v2366
          %v3394 = vmul.f32 %v3391, %v2367
          %v3398 = vrot.slane %v3392, 2
          %v3399 = vrot.slane %v3393, 2
          %v3400 = vsel %vm2479, %v3398, %v3399
          %v3401 = vrot.slane %v3394, 2
          %v3402 = vsel %vm2479, %v3399, %v3401
          %v3405 = vadd.f32 %v3388, %v3400
          %v3406 = vadd.f32 %v3389, %v3402
          %s3407 = sld [smem:[#allocation16 + $0x3d]]
          %v3408 = vstv %s3407
          %v3409 = vmul.f32 %v3408, %v2365
          %v3410 = vmul.f32 %v3408, %v2366
          %v3411 = vmul.f32 %v3408, %v2367
          %v3415 = vrot.slane %v3409, 2
          %v3416 = vrot.slane %v3410, 2
          %v3417 = vsel %vm2479, %v3415, %v3416
          %v3418 = vrot.slane %v3411, 2
          %v3419 = vsel %vm2479, %v3416, %v3418
          %3420 = vrot.lane.b32.xlu0 %v3417, 127
          %v3421 = vpop.permute.xlu0 %3420
          %3422 = vrot.lane.b32.xlu0 %v3419, 127
          %v3423 = vpop.permute.xlu0 %3422
          %v3426 = vadd.f32 %v3405, %v3421
          %v3427 = vadd.f32 %v3406, %v3423
          %s3428 = sld [smem:[#allocation16 + $0x3e]]
          %v3429 = vstv %s3428
          %v3430 = vmul.f32 %v3429, %v2365
          %v3431 = vmul.f32 %v3429, %v2366
          %v3432 = vmul.f32 %v3429, %v2367
          %v3436 = vrot.slane %v3430, 2
          %v3437 = vrot.slane %v3431, 2
          %v3438 = vsel %vm2479, %v3436, %v3437
          %v3439 = vrot.slane %v3432, 2
          %v3440 = vsel %vm2479, %v3437, %v3439
          %3441 = vrot.lane.b32.xlu0 %v3438, 126
          %v3442 = vpop.permute.xlu0 %3441
          %3443 = vrot.lane.b32.xlu0 %v3440, 126
          %v3444 = vpop.permute.xlu0 %3443
          %v3447 = vadd.f32 %v3426, %v3442
          %v3448 = vadd.f32 %v3427, %v3444
          %s3449 = sld [smem:[#allocation16 + $0x3f]]
          %v3450 = vstv %s3449
          %v3451 = vmul.f32 %v3450, %v2368
          %v3452 = vmul.f32 %v3450, %v2369
          %v3453 = vadd.f32 %v3447, %v3451
          %v3454 = vadd.f32 %v3448, %v3452
          %s3455 = sld [smem:[#allocation16 + $0x40]]
          %v3456 = vstv %s3455
          %v3457 = vmul.f32 %v3456, %v2368
          %v3458 = vmul.f32 %v3456, %v2369
          %3461 = vrot.lane.b32.xlu0 %v3457, 127
          %v3462 = vpop.permute.xlu0 %3461
          %3463 = vrot.lane.b32.xlu0 %v3458, 127
          %v3464 = vpop.permute.xlu0 %3463
          %v3467 = vadd.f32 %v3453, %v3462
          %v3468 = vadd.f32 %v3454, %v3464
          %s3469 = sld [smem:[#allocation16 + $0x41]]
          %v3470 = vstv %s3469
          %v3471 = vmul.f32 %v3470, %v2368
          %v3472 = vmul.f32 %v3470, %v2369
          %3475 = vrot.lane.b32.xlu0 %v3471, 126
          %v3476 = vpop.permute.xlu0 %3475
          %3477 = vrot.lane.b32.xlu0 %v3472, 126
          %v3478 = vpop.permute.xlu0 %3477
          %v3481 = vadd.f32 %v3467, %v3476
          %v3482 = vadd.f32 %v3468, %v3478
          %s3483 = sld [smem:[#allocation16 + $0x42]]
          %v3484 = vstv %s3483
          %v3485 = vmul.f32 %v3484, %v2368
          %v3486 = vmul.f32 %v3484, %v2369
          %v3487 = vmul.f32 %v3484, %v2370
          %v3491 = vrot.slane %v3485, 1
          %v3492 = vrot.slane %v3486, 1
          %v3493 = vsel %vm2419, %v3491, %v3492
          %v3494 = vrot.slane %v3487, 1
          %v3495 = vsel %vm2419, %v3492, %v3494
          %v3498 = vadd.f32 %v3481, %v3493
          %v3499 = vadd.f32 %v3482, %v3495
          %s3500 = sld [smem:[#allocation16 + $0x43]]
          %v3501 = vstv %s3500
          %v3502 = vmul.f32 %v3501, %v2368
          %v3503 = vmul.f32 %v3501, %v2369
          %v3504 = vmul.f32 %v3501, %v2370
          %v3508 = vrot.slane %v3502, 1
          %v3509 = vrot.slane %v3503, 1
          %v3510 = vsel %vm2419, %v3508, %v3509
          %v3511 = vrot.slane %v3504, 1
          %v3512 = vsel %vm2419, %v3509, %v3511
          %3513 = vrot.lane.b32.xlu0 %v3510, 127
          %v3514 = vpop.permute.xlu0 %3513
          %3515 = vrot.lane.b32.xlu0 %v3512, 127
          %v3516 = vpop.permute.xlu0 %3515
          %v3519 = vadd.f32 %v3498, %v3514
          %v3520 = vadd.f32 %v3499, %v3516
          %s3521 = sld [smem:[#allocation16 + $0x44]]
          %v3522 = vstv %s3521
          %v3523 = vmul.f32 %v3522, %v2368
          %v3524 = vmul.f32 %v3522, %v2369
          %v3525 = vmul.f32 %v3522, %v2370
          %v3529 = vrot.slane %v3523, 1
          %v3530 = vrot.slane %v3524, 1
          %v3531 = vsel %vm2419, %v3529, %v3530
          %v3532 = vrot.slane %v3525, 1
          %v3533 = vsel %vm2419, %v3530, %v3532
          %3534 = vrot.lane.b32.xlu0 %v3531, 126
          %v3535 = vpop.permute.xlu0 %3534
          %3536 = vrot.lane.b32.xlu0 %v3533, 126
          %v3537 = vpop.permute.xlu0 %3536
          %v3540 = vadd.f32 %v3519, %v3535
          %v3541 = vadd.f32 %v3520, %v3537
          %s3542 = sld [smem:[#allocation16 + $0x45]]
          %v3543 = vstv %s3542
          %v3544 = vmul.f32 %v3543, %v2368
          %v3545 = vmul.f32 %v3543, %v2369
          %v3546 = vmul.f32 %v3543, %v2370
          %v3550 = vrot.slane %v3544, 2
          %v3551 = vrot.slane %v3545, 2
          %v3552 = vsel %vm2479, %v3550, %v3551
          %v3553 = vrot.slane %v3546, 2
          %v3554 = vsel %vm2479, %v3551, %v3553
          %v3557 = vadd.f32 %v3540, %v3552
          %v3558 = vadd.f32 %v3541, %v3554
          %s3559 = sld [smem:[#allocation16 + $0x46]]
          %v3560 = vstv %s3559
          %v3561 = vmul.f32 %v3560, %v2368
          %v3562 = vmul.f32 %v3560, %v2369
          %v3563 = vmul.f32 %v3560, %v2370
          %v3567 = vrot.slane %v3561, 2
          %v3568 = vrot.slane %v3562, 2
          %v3569 = vsel %vm2479, %v3567, %v3568
          %v3570 = vrot.slane %v3563, 2
          %v3571 = vsel %vm2479, %v3568, %v3570
          %3572 = vrot.lane.b32.xlu0 %v3569, 127
          %v3573 = vpop.permute.xlu0 %3572
          %3574 = vrot.lane.b32.xlu0 %v3571, 127
          %v3575 = vpop.permute.xlu0 %3574
          %v3578 = vadd.f32 %v3557, %v3573
          %v3579 = vadd.f32 %v3558, %v3575
          %s3580 = sld [smem:[#allocation16 + $0x47]]
          %v3581 = vstv %s3580
          %v3582 = vmul.f32 %v3581, %v2368
          %v3583 = vmul.f32 %v3581, %v2369
          %v3584 = vmul.f32 %v3581, %v2370
          %v3588 = vrot.slane %v3582, 2
          %v3589 = vrot.slane %v3583, 2
          %v3590 = vsel %vm2479, %v3588, %v3589
          %v3591 = vrot.slane %v3584, 2
          %v3592 = vsel %vm2479, %v3589, %v3591
          %3593 = vrot.lane.b32.xlu0 %v3590, 126
          %v3594 = vpop.permute.xlu0 %3593
          %3595 = vrot.lane.b32.xlu0 %v3592, 126
          %v3596 = vpop.permute.xlu0 %3595
          %v3599 = vadd.f32 %v3578, %v3594
          %v3600 = vadd.f32 %v3579, %v3596
          %s3601 = sld [smem:[#allocation16 + $0x48]]
          %v3602 = vstv %s3601
          %v3603 = vmul.f32 %v3602, %v2371
          %v3604 = vmul.f32 %v3602, %v2372
          %v3605 = vadd.f32 %v3599, %v3603
          %v3606 = vadd.f32 %v3600, %v3604
          %s3607 = sld [smem:[#allocation16 + $0x49]]
          %v3608 = vstv %s3607
          %v3609 = vmul.f32 %v3608, %v2371
          %v3610 = vmul.f32 %v3608, %v2372
          %3613 = vrot.lane.b32.xlu0 %v3609, 127
          %v3614 = vpop.permute.xlu0 %3613
          %3615 = vrot.lane.b32.xlu0 %v3610, 127
          %v3616 = vpop.permute.xlu0 %3615
          %v3619 = vadd.f32 %v3605, %v3614
          %v3620 = vadd.f32 %v3606, %v3616
          %s3621 = sld [smem:[#allocation16 + $0x4a]]
          %v3622 = vstv %s3621
          %v3623 = vmul.f32 %v3622, %v2371
          %v3624 = vmul.f32 %v3622, %v2372
          %3627 = vrot.lane.b32.xlu0 %v3623, 126
          %v3628 = vpop.permute.xlu0 %3627
          %3629 = vrot.lane.b32.xlu0 %v3624, 126
          %v3630 = vpop.permute.xlu0 %3629
          %v3633 = vadd.f32 %v3619, %v3628
          %v3634 = vadd.f32 %v3620, %v3630
          %s3635 = sld [smem:[#allocation16 + $0x4b]]
          %v3636 = vstv %s3635
          %v3637 = vmul.f32 %v3636, %v2371
          %v3638 = vmul.f32 %v3636, %v2372
          %v3639 = vmul.f32 %v3636, %v2373
          %v3643 = vrot.slane %v3637, 1
          %v3644 = vrot.slane %v3638, 1
          %v3645 = vsel %vm2419, %v3643, %v3644
          %v3646 = vrot.slane %v3639, 1
          %v3647 = vsel %vm2419, %v3644, %v3646
          %v3650 = vadd.f32 %v3633, %v3645
          %v3651 = vadd.f32 %v3634, %v3647
          %s3652 = sld [smem:[#allocation16 + $0x4c]]
          %v3653 = vstv %s3652
          %v3654 = vmul.f32 %v3653, %v2371
          %v3655 = vmul.f32 %v3653, %v2372
          %v3656 = vmul.f32 %v3653, %v2373
          %v3660 = vrot.slane %v3654, 1
          %v3661 = vrot.slane %v3655, 1
          %v3662 = vsel %vm2419, %v3660, %v3661
          %v3663 = vrot.slane %v3656, 1
          %v3664 = vsel %vm2419, %v3661, %v3663
          %3665 = vrot.lane.b32.xlu0 %v3662, 127
          %v3666 = vpop.permute.xlu0 %3665
          %3667 = vrot.lane.b32.xlu0 %v3664, 127
          %v3668 = vpop.permute.xlu0 %3667
          %v3671 = vadd.f32 %v3650, %v3666
          %v3672 = vadd.f32 %v3651, %v3668
          %s3673 = sld [smem:[#allocation16 + $0x4d]]
          %v3674 = vstv %s3673
          %v3675 = vmul.f32 %v3674, %v2371
          %v3676 = vmul.f32 %v3674, %v2372
          %v3677 = vmul.f32 %v3674, %v2373
          %v3681 = vrot.slane %v3675, 1
          %v3682 = vrot.slane %v3676, 1
          %v3683 = vsel %vm2419, %v3681, %v3682
          %v3684 = vrot.slane %v3677, 1
          %v3685 = vsel %vm2419, %v3682, %v3684
          %3686 = vrot.lane.b32.xlu0 %v3683, 126
          %v3687 = vpop.permute.xlu0 %3686
          %3688 = vrot.lane.b32.xlu0 %v3685, 126
          %v3689 = vpop.permute.xlu0 %3688
          %v3692 = vadd.f32 %v3671, %v3687
          %v3693 = vadd.f32 %v3672, %v3689
          %s3694 = sld [smem:[#allocation16 + $0x4e]]
          %v3695 = vstv %s3694
          %v3696 = vmul.f32 %v3695, %v2371
          %v3697 = vmul.f32 %v3695, %v2372
          %v3698 = vmul.f32 %v3695, %v2373
          %v3702 = vrot.slane %v3696, 2
          %v3703 = vrot.slane %v3697, 2
          %v3704 = vsel %vm2479, %v3702, %v3703
          %v3705 = vrot.slane %v3698, 2
          %v3706 = vsel %vm2479, %v3703, %v3705
          %v3709 = vadd.f32 %v3692, %v3704
          %v3710 = vadd.f32 %v3693, %v3706
          %s3711 = sld [smem:[#allocation16 + $0x4f]]
          %v3712 = vstv %s3711
          %v3713 = vmul.f32 %v3712, %v2371
          %v3714 = vmul.f32 %v3712, %v2372
          %v3715 = vmul.f32 %v3712, %v2373
          %v3719 = vrot.slane %v3713, 2
          %v3720 = vrot.slane %v3714, 2
          %v3721 = vsel %vm2479, %v3719, %v3720
          %v3722 = vrot.slane %v3715, 2
          %v3723 = vsel %vm2479, %v3720, %v3722
          %3724 = vrot.lane.b32.xlu0 %v3721, 127
          %v3725 = vpop.permute.xlu0 %3724
          %3726 = vrot.lane.b32.xlu0 %v3723, 127
          %v3727 = vpop.permute.xlu0 %3726
          %v3730 = vadd.f32 %v3709, %v3725
          %v3731 = vadd.f32 %v3710, %v3727
          %s3732 = sld [smem:[#allocation16 + $0x50]]
          %v3733 = vstv %s3732
          %v3734 = vmul.f32 %v3733, %v2371
          %v3735 = vmul.f32 %v3733, %v2372
          %v3736 = vmul.f32 %v3733, %v2373
          %v3740 = vrot.slane %v3734, 2
          %v3741 = vrot.slane %v3735, 2
          %v3742 = vsel %vm2479, %v3740, %v3741
          %v3743 = vrot.slane %v3736, 2
          %v3744 = vsel %vm2479, %v3741, %v3743
          %3745 = vrot.lane.b32.xlu0 %v3742, 126
          %v3746 = vpop.permute.xlu0 %3745
          %3747 = vrot.lane.b32.xlu0 %v3744, 126
          %v3748 = vpop.permute.xlu0 %3747
          %v3751 = vadd.f32 %v3730, %v3746
          %v3752 = vadd.f32 %v3731, %v3748
          %s3753 = scalar_lea.vmem [#allocation3], %s2144
          %vm3754 = vcmask 130048
          %3755 = vst.msk [vmem:[%s3753] sm:$0xff] %vm3754, %v2833
          %3756 = vst.msk [vmem:[%s3753 + $0x8] sm:$0xff] %vm3754, %v2834
          %3757 = vst.msk [vmem:[%s3753 + $0x10] sm:$0xff] %vm3754, %v3292
          %3758 = vst.msk [vmem:[%s3753 + $0x18] sm:$0xff] %vm3754, %v3293
          %3759 = vst.msk [vmem:[%s3753 + $0x20] sm:$0xff] %vm3754, %v3751
          %3760 = vst.msk [vmem:[%s3753 + $0x28] sm:$0xff] %vm3754, %v3752
          %s3761 = sld [smem:[#allocation5]]
          %v3762 = vsel %vm3754, %v2833, 0.0
          %v3763 = vsel %vm3754, %v2834, 0.0
          %v3764 = vadd.f32 %v3762, %v3763
          %3765 = vadd.xlane.f32.xlu0 %v3764
          %v3766 = vpop.xlane.xlu0 %3765
          %v3767 = vrot.slane %v3766, 4
          %v3768 = vadd.f32 %v3766, %v3767
          %v3769 = vrot.slane %v3768, 2
          %v3770 = vadd.f32 %v3768, %v3769
          %v3771 = vrot.slane %v3770, 1
          %v3772 = vadd.f32 %v3770, %v3771
          %s3773 = vtos %v3772
          %s3774 = sadd.f32 %s3761, %s3773
          %s3775 = scalar_lea.smem [#allocation5], 0
          %3776 = sst [smem:[%s3775]] %s3774
          %s3777 = sld [smem:[#allocation5 + $0x80]]
          %v3778 = vmul.f32 %v2833, %v2833
          %v3779 = vmul.f32 %v2834, %v2834
          %v3780 = vsel %vm3754, %v3778, 0.0
          %v3781 = vsel %vm3754, %v3779, 0.0
          %v3782 = vadd.f32 %v3780, %v3781
          %3783 = vadd.xlane.f32.xlu0 %v3782
          %v3784 = vpop.xlane.xlu0 %3783
          %v3785 = vrot.slane %v3784, 4
          %v3786 = vadd.f32 %v3784, %v3785
          %v3787 = vrot.slane %v3786, 2
          %v3788 = vadd.f32 %v3786, %v3787
          %v3789 = vrot.slane %v3788, 1
          %v3790 = vadd.f32 %v3788, %v3789
          %s3791 = vtos %v3790
          %s3792 = sadd.f32 %s3777, %s3791
          %s3793 = scalar_lea.smem [#allocation5], 128
          %3794 = sst [smem:[%s3793]] %s3792
          %s3795 = sld [smem:[#allocation5 + $0x1]]
          %v3796 = vsel %vm3754, %v3292, 0.0
          %v3797 = vsel %vm3754, %v3293, 0.0
          %v3798 = vadd.f32 %v3796, %v3797
          %3799 = vadd.xlane.f32.xlu0 %v3798
          %v3800 = vpop.xlane.xlu0 %3799
          %v3801 = vrot.slane %v3800, 4
          %v3802 = vadd.f32 %v3800, %v3801
          %v3803 = vrot.slane %v3802, 2
          %v3804 = vadd.f32 %v3802, %v3803
          %v3805 = vrot.slane %v3804, 1
          %v3806 = vadd.f32 %v3804, %v3805
          %s3807 = vtos %v3806
          %s3808 = sadd.f32 %s3795, %s3807
          %s3809 = scalar_lea.smem [#allocation5], 1
          %3810 = sst [smem:[%s3809]] %s3808
          %s3811 = sld [smem:[#allocation5 + $0x81]]
          %v3812 = vmul.f32 %v3292, %v3292
          %v3813 = vmul.f32 %v3293, %v3293
          %v3814 = vsel %vm3754, %v3812, 0.0
          %v3815 = vsel %vm3754, %v3813, 0.0
          %v3816 = vadd.f32 %v3814, %v3815
          %3817 = vadd.xlane.f32.xlu0 %v3816
          %v3818 = vpop.xlane.xlu0 %3817
          %v3819 = vrot.slane %v3818, 4
          %v3820 = vadd.f32 %v3818, %v3819
          %v3821 = vrot.slane %v3820, 2
          %v3822 = vadd.f32 %v3820, %v3821
          %v3823 = vrot.slane %v3822, 1
          %v3824 = vadd.f32 %v3822, %v3823
          %s3825 = vtos %v3824
          %s3826 = sadd.f32 %s3811, %s3825
          %s3827 = scalar_lea.smem [#allocation5], 129
          %3828 = sst [smem:[%s3827]] %s3826
          %s3829 = sld [smem:[#allocation5 + $0x2]]
          %v3830 = vsel %vm3754, %v3751, 0.0
          %v3831 = vsel %vm3754, %v3752, 0.0
          %v3832 = vadd.f32 %v3830, %v3831
          %3833 = vadd.xlane.f32.xlu0 %v3832
          %v3834 = vpop.xlane.xlu0 %3833
          %v3835 = vrot.slane %v3834, 4
          %v3836 = vadd.f32 %v3834, %v3835
          %v3837 = vrot.slane %v3836, 2
          %v3838 = vadd.f32 %v3836, %v3837
          %v3839 = vrot.slane %v3838, 1
          %v3840 = vadd.f32 %v3838, %v3839
          %s3841 = vtos %v3840
          %s3842 = sadd.f32 %s3829, %s3841
          %s3843 = scalar_lea.smem [#allocation5], 2
          %3844 = sst [smem:[%s3843]] %s3842
          %s3845 = sld [smem:[#allocation5 + $0x82]]
          %v3846 = vmul.f32 %v3751, %v3751
          %v3847 = vmul.f32 %v3752, %v3752
          %v3848 = vsel %vm3754, %v3846, 0.0
          %v3849 = vsel %vm3754, %v3847, 0.0
          %v3850 = vadd.f32 %v3848, %v3849
          %3851 = vadd.xlane.f32.xlu0 %v3850
          %v3852 = vpop.xlane.xlu0 %3851
          %v3853 = vrot.slane %v3852, 4
          %v3854 = vadd.f32 %v3852, %v3853
          %v3855 = vrot.slane %v3854, 2
          %v3856 = vadd.f32 %v3854, %v3855
          %v3857 = vrot.slane %v3856, 1
          %v3858 = vadd.f32 %v3856, %v3857
          %s3859 = vtos %v3858
          %s3860 = sadd.f32 %s3845, %s3859
          %s3861 = scalar_lea.smem [#allocation5], 130
          %3862 = sst [smem:[%s3861]] %s3860
        $region104: #{residual_block_forward.1} parent=55 // pred_fallthru
          _
        %p3863 = scmp.eq.s32.totalorder %s35, 2
        // Predicated region
        $region105: #{residual_block_forward.1} parent=55 // pred_check
          %p3864 = pneg %p3863
        $region106: #{residual_block_forward.1} parent=55 // pred_check_branch
          %3866 = sbr.rel (%p3864) target = $region108
        $region107: #{residual_block_forward.1} parent=55 // pred_region
          %s3867 = smul.u32 %s36, 48
          %s3868 = scalar_lea.vmem [#allocation3], %s3867
          %v3869 = vld [vmem:[%s3868] sm:$0xff]
          %v3870 = vld [vmem:[%s3868 + $0x8] sm:$0xff]
          %v3871 = vld [vmem:[%s3868 + $0x10] sm:$0xff]
          %v3872 = vld [vmem:[%s3868 + $0x18] sm:$0xff]
          %v3873 = vld [vmem:[%s3868 + $0x20] sm:$0xff]
          %v3874 = vld [vmem:[%s3868 + $0x28] sm:$0xff]
          %s3875 = sld [smem:[#allocation5]]
          %s3876 = smul.f32 %s3875, 0.001953125
          %s3877 = sld [smem:[#allocation5 + $0x80]]
          %s3878 = smul.f32 %s3877, 0.001953125
          %s3879 = smul.f32 %s3876, %s3876
          %s3880 = ssub.f32 %s3878, %s3879
          %s3881 = sadd.f32 %s3880, 1e-05
          %v3882 = vstv %s3881
          %v3883 = vadd.f32 %v3882, 0.0
          %v3884 = vrsqrt.pop %v3883
          %v3885 = vstv %s3876
          %v3886 = vsub.f32 %v3869, %v3885
          %v3887 = vsub.f32 %v3870, %v3885
          %v3888 = vmul.f32 %v3886, %v3884
          %v3889 = vmul.f32 %v3887, %v3884
          %s3890 = sld [smem:[#allocation19]]
          %v3891 = vstv %s3890
          %v3892 = vmul.f32 %v3888, %v3891
          %v3893 = vmul.f32 %v3889, %v3891
          %s3894 = sld [smem:[#allocation20]]
          %v3895 = vstv %s3894
          %v3896 = vadd.f32 %v3892, %v3895
          %v3897 = vadd.f32 %v3893, %v3895
          %s3898 = sld [smem:[#allocation5 + $0x1]]
          %s3899 = smul.f32 %s3898, 0.001953125
          %s3900 = sld [smem:[#allocation5 + $0x81]]
          %s3901 = smul.f32 %s3900, 0.001953125
          %s3902 = smul.f32 %s3899, %s3899
          %s3903 = ssub.f32 %s3901, %s3902
          %s3904 = sadd.f32 %s3903, 1e-05
          %v3905 = vstv %s3904
          %v3906 = vadd.f32 %v3905, 0.0
          %v3907 = vrsqrt.pop %v3906
          %v3908 = vstv %s3899
          %v3909 = vsub.f32 %v3871, %v3908
          %v3910 = vsub.f32 %v3872, %v3908
          %v3911 = vmul.f32 %v3909, %v3907
          %v3912 = vmul.f32 %v3910, %v3907
          %s3913 = sld [smem:[#allocation19 + $0x1]]
          %v3914 = vstv %s3913
          %v3915 = vmul.f32 %v3911, %v3914
          %v3916 = vmul.f32 %v3912, %v3914
          %s3917 = sld [smem:[#allocation20 + $0x1]]
          %v3918 = vstv %s3917
          %v3919 = vadd.f32 %v3915, %v3918
          %v3920 = vadd.f32 %v3916, %v3918
          %s3921 = sld [smem:[#allocation5 + $0x2]]
          %s3922 = smul.f32 %s3921, 0.001953125
          %s3923 = sld [smem:[#allocation5 + $0x82]]
          %s3924 = smul.f32 %s3923, 0.001953125
          %s3925 = smul.f32 %s3922, %s3922
          %s3926 = ssub.f32 %s3924, %s3925
          %s3927 = sadd.f32 %s3926, 1e-05
          %v3928 = vstv %s3927
          %v3929 = vadd.f32 %v3928, 0.0
          %v3930 = vrsqrt.pop %v3929
          %v3931 = vstv %s3922
          %v3932 = vsub.f32 %v3873, %v3931
          %v3933 = vsub.f32 %v3874, %v3931
          %v3934 = vmul.f32 %v3932, %v3930
          %v3935 = vmul.f32 %v3933, %v3930
          %s3936 = sld [smem:[#allocation19 + $0x2]]
          %v3937 = vstv %s3936
          %v3938 = vmul.f32 %v3934, %v3937
          %v3939 = vmul.f32 %v3935, %v3937
          %s3940 = sld [smem:[#allocation20 + $0x2]]
          %v3941 = vstv %s3940
          %v3942 = vadd.f32 %v3938, %v3941
          %v3943 = vadd.f32 %v3939, %v3941
          %v3944 = vld [vmem:[%s397] sm:$0xff]
          %v3945 = vld [vmem:[%s397 + $0x8] sm:$0xff]
          %v3946 = vld [vmem:[%s397 + $0x10] sm:$0xff]
          %v3947 = vld [vmem:[%s397 + $0x18] sm:$0xff]
          %v3948 = vld [vmem:[%s397 + $0x20] sm:$0xff]
          %v3949 = vld [vmem:[%s397 + $0x28] sm:$0xff]
          %v3950 = vadd.f32 %v3896, %v3944
          %v3951 = vadd.f32 %v3897, %v3945
          %v3952 = vadd.f32 %v3919, %v3946
          %v3953 = vadd.f32 %v3920, %v3947
          %v3954 = vadd.f32 %v3942, %v3948
          %v3955 = vadd.f32 %v3943, %v3949
          %vm3956 = vcmask 130048
          %3957 = vst.msk [vmem:[%s464] sm:$0xff] %vm3956, %v3950
          %3958 = vst.msk [vmem:[%s464 + $0x8] sm:$0xff] %vm3956, %v3951
          %3959 = vst.msk [vmem:[%s464 + $0x10] sm:$0xff] %vm3956, %v3952
          %3960 = vst.msk [vmem:[%s464 + $0x18] sm:$0xff] %vm3956, %v3953
          %3961 = vst.msk [vmem:[%s464 + $0x20] sm:$0xff] %vm3956, %v3954
          %3962 = vst.msk [vmem:[%s464 + $0x28] sm:$0xff] %vm3956, %v3955
        $region108: #{residual_block_forward.1} parent=55 // pred_fallthru
          _
        %s3963 = sand.u32 %s245, 1
        %s3964 = scalar_lea.sflag [#allocation8], %s3963
        %s3965 = sand.u32 %s245, 1
        %s3966 = smul.addr %s3965, 48
        %s3967 = scalar_lea.vmem [#allocation22], %s3966
        // Predicated region
        $region109: #{residual_block_forward.1} parent=55 // pred_check
          %p3968 = pneg %p255
        $region110: #{residual_block_forward.1} parent=55 // pred_check_branch
          %3970 = sbr.rel (%p3968) target = $region112
        $region111: #{residual_block_forward.1} parent=55 // pred_region
          %s3972 = ssub.s32 768, 768
          %3973 = vsyncadd %s3964, %s3972
          %s3974 = smul.addr %s36, 6
          %s3975 = smul.addr %s3974, 128
          %s3976 = scalar_lea.hbm %s9, %s3975
          %s3977 = sshll.u32 %s3967, 4
          %s3978 = int_to_ptr.vmem [resolvable:$true] %s3977
          %3983 = dma.vmem_to_hbm [thread:$0]  %s3978, 768, %s3976, %s3964, 128, 128, 8
        $region112: #{residual_block_forward.1} parent=55 // pred_fallthru
          _
      $region56: #{residual_block_forward.1} parent=5 // pred_fallthru
        _
      %p3984 = scmp.le.s32.totalorder 2, %s26
      // Predicated region
      $region113: #{residual_block_forward.1} parent=5 // pred_check
        %p3985 = pneg %p3984
      $region114: #{residual_block_forward.1} parent=5 // pred_check_branch
        %3987 = sbr.rel (%p3985) target = $region116
      $region115: #{residual_block_forward.1} parent=5 // pred_region
        %s3988 = ssub.s32 %s26, 2
        // Predicated region
        $region117: #{residual_block_forward.1} parent=115 // pred_check
          %p3989 = pneg %p261
        $region118: #{residual_block_forward.1} parent=115 // pred_check_branch
          %3991 = sbr.rel (%p3989) target = $region120
        $region119: #{residual_block_forward.1} parent=115 // pred_region
          %s3992 = sand.u32 %s246, 1
          %s3993 = scalar_lea.sflag [#allocation8], %s3992
          %s3994 = sand.u32 %s246, 1
          %s3995 = smul.addr %s3994, 48
          %s3996 = scalar_lea.vmem [#allocation22], %s3995
          %3997 = dma.done %s3993, 768
        $region120: #{residual_block_forward.1} parent=115 // pred_fallthru
          _
      $region116: #{residual_block_forward.1} parent=5 // pred_fallthru
        _
    $region6: #{residual_block_forward.1} parent=1 // loop_footer
      %s30 = sadd.s32 1, %s26
    $region7: #{residual_block_forward.1} parent=1 // loop_footer_branch
      %25 = sbr.rel target = $region3
    $region8: #{residual_block_forward.1} parent=1 // loop_exit
      _
    %3998 = vsyncpa [#allocation7], 1
    %s3999 = scalar_lea.sflag [#allocation7], 1
    %4000 = vsyncpa %s3999, 1
    %4001 = vsyncpa [#allocation8], 1
    %s4002 = scalar_lea.sflag [#allocation8], 1
    %4003 = vsyncpa %s4002, 1
    %4004 = vsyncpa [#allocation9], 1
    %s4005 = scalar_lea.sflag [#allocation9], 1
    %4006 = vsyncpa %s4005, 1
    %4007 = vsyncpa [#allocation12], 1
    %4008 = vsyncpa [#allocation15], 1
    %4009 = vsyncpa [#allocation18], 1
    %4010 = vsyncpa [#allocation21], 1

</llo_original>
